<compile_context>
chip_gen: v6e
topology: v6e:2x2x1
jax: 0.10.0
libtpu: 0.0.40
codegen_flags: <defaults>
</compile_context>

<pallas_src>
import jax
import jax.numpy as jnp
from jax.experimental import pallas as pl
from jax.experimental.pallas import tpu as pltpu


_VMEM = pl.BlockSpec(memory_space=pltpu.MemorySpace.VMEM)


def _round_up(x, m):
    return ((x + m - 1) // m) * m


def _vmem_limit(need_bytes):
    # explicit scoped-VMEM limit: actual footprint x2 + headroom, >= 16 MiB.
    return int(max(2 * int(need_bytes) + (4 << 20), 16 << 20))


# ----------------------------------------------------------------------------
# Kernel 1: embedding gather (DMA from HBM) + hoisted input projection.
# grid = (T,). Writes, for each time step t:
#   gin_f[t]       = x_t @ W_ih_f + b_f          (Bp, 4H)
#   gin_b[T-1-t]   = x_t @ W_ih_b + b_b          (backward gates time-reversed)
# ----------------------------------------------------------------------------
def embed_project_kernel(ids_ref,                     # SMEM (T*Bp,) i32 [scalar prefetch]
                         wemb_ref,                    # HBM  (V, 1, E) f32 (memory_space=ANY)
                         wihf_ref, wihb_ref,          # VMEM (E, 4H) bf16
                         bf_ref, bb_ref,              # VMEM (1, 4H) f32
                         ginf_ref, ginb_ref,          # VMEM (Bp, 4H) f32 output blocks
                         xbuf, sems):                 # VMEM (Bp, E) f32, DMA sems (Bp,)
    t = pl.program_id(0)
    Bp, _ = xbuf.shape
    base = t * Bp

    # Row gather of the Bp embeddings needed at this time step.
    copies = []
    for j in range(Bp):
        row = ids_ref[base + j]
        cp = pltpu.make_async_copy(wemb_ref.at[row],
                                   xbuf.at[pl.ds(j, 1), :],
                                   sems.at[j])
        cp.start()
        copies.append(cp)
    for cp in copies:
        cp.wait()

    x = xbuf[...].astype(jnp.bfloat16)                # bf16 MXU operand
    ginf_ref[...] = (jnp.dot(x, wihf_ref[...],
                             preferred_element_type=jnp.float32) + bf_ref[...])
    ginb_ref[...] = (jnp.dot(x, wihb_ref[...],
                             preferred_element_type=jnp.float32) + bb_ref[...])


def embed_project(ids_tm, wemb3, wihf, wihb, b_f, b_b, *, seq_len, batch):
    T, Bp = seq_len, batch
    E, G = wihf.shape                                  # G = 4H
    need = (2 * 2 * Bp * G * 4                         # 2 f32 gin blocks, double-buffered
            + 2 * E * G * 2                            # wih f/b bf16 (resident)
            + 2 * G * 4                                # biases
            + Bp * E * 4)                              # gather scratch
    grid_spec = pltpu.PrefetchScalarGridSpec(
        num_scalar_prefetch=1,
        grid=(T,),
        in_specs=[
            pl.BlockSpec(memory_space=pl.ANY),                      # W_emb stays in HBM
            pl.BlockSpec((E, G), lambda t, ids: (0, 0)),
            pl.BlockSpec((E, G), lambda t, ids: (0, 0)),
            pl.BlockSpec((1, G), lambda t, ids: (0, 0)),
            pl.BlockSpec((1, G), lambda t, ids: (0, 0)),
        ],
        out_specs=[
            pl.BlockSpec((Bp, G), lambda t, ids: (t, 0)),
            # backward gates stored time-reversed -> contiguous read in the loop
            pl.BlockSpec((Bp, G), lambda t, ids: (T - 1 - t, 0)),
        ],
        scratch_shapes=[pltpu.VMEM((Bp, E), jnp.float32),
                        pltpu.SemaphoreType.DMA((Bp,))],
    )
    return pl.pallas_call(
        embed_project_kernel,
        out_shape=(jax.ShapeDtypeStruct((T * Bp, G), jnp.float32),
                   jax.ShapeDtypeStruct((T * Bp, G), jnp.float32)),
        grid_spec=grid_spec,
        compiler_params=pltpu.CompilerParams(
            dimension_semantics=("parallel",),
            vmem_limit_bytes=_vmem_limit(need)),
    )(ids_tm, wemb3, wihf, wihb, b_f, b_b)


# ----------------------------------------------------------------------------
# Kernel 2: bidirectional LSTM recurrence + max-pool over time.
# grid = (NB, T): batch blocks ("parallel", both TCs on v7x) x time ("arbitrary",
# state in VMEM scratch). Per step: two dense (Bb,H)x(H,4H) bf16 recurrent
# matmuls; gin slabs stream from HBM via the BlockSpec pipeline.
# pack/pad semantics: state frozen and output zeroed past each row's length;
# backward direction effectively starts at t = len-1.
# ----------------------------------------------------------------------------
def bilstm_maxpool_kernel(len_ref, ginf_ref, ginb_ref, whhf_ref, whhb_ref,
                          out_ref,
                          hf, cf, mf, hb, cb, mb):
    t = pl.program_id(1)
    T = pl.num_programs(1)
    H = whhf_ref.shape[0]

    @pl.when(t == 0)
    def _():
        for ref in (hf, cf, hb, cb):
            ref[...] = jnp.zeros_like(ref)
        mf[...] = jnp.full_like(mf, -jnp.inf)
        mb[...] = jnp.full_like(mb, -jnp.inf)

    lens = len_ref[...]                                # (Bb, 1) i32

    gf = ginf_ref[...] + jnp.dot(hf[...].astype(jnp.bfloat16), whhf_ref[...],
                                 preferred_element_type=jnp.float32)
    gb = ginb_ref[...] + jnp.dot(hb[...].astype(jnp.bfloat16), whhb_ref[...],
                                 preferred_element_type=jnp.float32)

    def cell(g, c_prev):
        # PyTorch LSTM gate order: i, f, g, o. All gate math in f32.
        i_g = jax.nn.sigmoid(g[:, 0 * H:1 * H])
        f_g = jax.nn.sigmoid(g[:, 1 * H:2 * H])
        g_g = jnp.tanh(g[:, 2 * H:3 * H])
        o_g = jax.nn.sigmoid(g[:, 3 * H:4 * H])
        c_new = f_g * c_prev + i_g * g_g
        return o_g * jnp.tanh(c_new), c_new

    hf_new, cf_new = cell(gf, cf[...])
    hb_new, cb_new = cell(gb, cb[...])

    # forward uses time t; backward uses time T-1-t (gin_b slab t already
    # holds the gates for time T-1-t).
    valid_f = t < lens
    valid_b = (T - 1 - t) < lens
    hf[...] = jnp.where(valid_f, hf_new, hf[...])
    cf[...] = jnp.where(valid_f, cf_new, cf[...])
    mf[...] = jnp.maximum(mf[...], jnp.where(valid_f, hf_new, 0.0))
    hb[...] = jnp.where(valid_b, hb_new, hb[...])
    cb[...] = jnp.where(valid_b, cb_new, cb[...])
    mb[...] = jnp.maximum(mb[...], jnp.where(valid_b, hb_new, 0.0))

    @pl.when(t == T - 1)
    def _():
        out_ref[:, 0:H] = mf[...]
        out_ref[:, H:2 * H] = mb[...]


def bilstm_maxpool(lens, ginf, ginb, whhf, whhb, *, seq_len, batch_block=8):
    T = seq_len
    TBp, G = ginf.shape                                # G = 4H
    Bp = TBp // T
    H = whhf.shape[0]
    Bb = min(batch_block, Bp)
    assert Bp % Bb == 0
    NB = Bp // Bb
    need = (2 * 2 * Bb * G * 4                         # gin slabs (2 dirs) double-buffered
            + 2 * H * G * 2                            # whh f/b bf16 (resident)
            + 2 * Bb * 4                               # length block
            + 2 * Bb * 2 * H * 4                       # output block
            + 6 * Bb * H * 4)                          # h/c/maxpool scratch
    return pl.pallas_call(
        bilstm_maxpool_kernel,
        out_shape=jax.ShapeDtypeStruct((Bp, 2 * H), jnp.float32),
        grid=(NB, T),
        in_specs=[
            pl.BlockSpec((Bb, 1), lambda b, t: (b, 0)),
            pl.BlockSpec((Bb, G), lambda b, t: (t * NB + b, 0)),
            pl.BlockSpec((Bb, G), lambda b, t: (t * NB + b, 0)),
            pl.BlockSpec((H, G), lambda b, t: (0, 0)),
            pl.BlockSpec((H, G), lambda b, t: (0, 0)),
        ],
        out_specs=pl.BlockSpec((Bb, 2 * H), lambda b, t: (b, 0)),
        scratch_shapes=[pltpu.VMEM((Bb, H), jnp.float32)] * 6,
        compiler_params=pltpu.CompilerParams(
            dimension_semantics=("parallel", "arbitrary"),
            vmem_limit_bytes=_vmem_limit(need)),
    )(lens, ginf, ginb, whhf, whhb)


# ----------------------------------------------------------------------------
# Kernel 3: feature construction + 3-layer MLP classifier.
# u/v sliced from the pooled encoder output inside the kernel; W1 split
# row-wise over [u, v, |u-v|, u*v] so the partial products accumulate in the
# MXU (no (B,8H) concat). bf16 matmul operands, f32 accumulation.
# ----------------------------------------------------------------------------
def classifier_kernel(pool_ref,
                      w1a_ref, w1b_ref, w1c_ref, w1d_ref, b1_ref,
                      w2_ref, b2_ref, w3_ref, b3_ref,
                      out_ref):
    Bh = out_ref.shape[0]
    bf = jnp.bfloat16
    u = pool_ref[pl.ds(0, Bh), :]
    v = pool_ref[pl.ds(Bh, Bh), :]
    h1 = jnp.tanh(
        jnp.dot(u.astype(bf), w1a_ref[...], preferred_element_type=jnp.float32)
        + jnp.dot(v.astype(bf), w1b_ref[...], preferred_element_type=jnp.float32)
        + jnp.dot(jnp.abs(u - v).astype(bf), w1c_ref[...],
                  preferred_element_type=jnp.float32)
        + jnp.dot((u * v).astype(bf), w1d_ref[...],
                  preferred_element_type=jnp.float32)
        + b1_ref[...])
    h2 = jnp.tanh(jnp.dot(h1.astype(bf), w2_ref[...],
                          preferred_element_type=jnp.float32) + b2_ref[...])
    out_ref[...] = jnp.dot(h2.astype(bf), w3_ref[...],
                           preferred_element_type=jnp.float32) + b3_ref[...]


def classify(pooled, w1a, w1b, w1c, w1d, b1, w2, b2, w3, b3, *, out_rows):
    n_labels = b3.shape[-1]
    args = (pooled, w1a, w1b, w1c, w1d, b1, w2, b2, w3, b3)
    need = sum(a.size * a.dtype.itemsize for a in args) + out_rows * n_labels * 4
    return pl.pallas_call(
        classifier_kernel,
        out_shape=jax.ShapeDtypeStruct((out_rows, n_labels), jnp.float32),
        in_specs=[_VMEM] * 10,
        out_specs=_VMEM,
        compiler_params=pltpu.CompilerParams(vmem_limit_bytes=_vmem_limit(need)),
    )(*args)


# ----------------------------------------------------------------------------
# End-to-end forward
# ----------------------------------------------------------------------------
@jax.jit
def infersent_forward(premise_ids, hypothesis_ids, params):
    W_emb = params["W_emb"]
    enc = params["encoder"]
    cls = params["classifier"]
    B, T = premise_ids.shape
    V, E = W_emb.shape
    H = enc["whh_f"].shape[0]
    bf16 = jnp.bfloat16

    # Premise + hypothesis share one encoder batch (weights fetched once). Each
    # sentence is padded to a sublane multiple so u/v slices in the classifier
    # stay sublane-aligned; padded rows have length 0.
    Bh = _round_up(B, 8)
    prem = jnp.pad(premise_ids, ((0, Bh - B), (0, 0)))
    hyp = jnp.pad(hypothesis_ids, ((0, Bh - B), (0, 0)))
    ids = jnp.concatenate([prem, hyp], axis=0).astype(jnp.int32)        # (Bp, T)
    Bp = 2 * Bh
    lens = jnp.sum((ids != 0).astype(jnp.int32), axis=1, keepdims=True)  # (Bp, 1)
    ids_tm = jnp.transpose(ids).reshape(T * Bp)                          # time-major ids

    # W_emb stays f32 in HBM (clean (8,128) row DMAs); rows cast to bf16 in-kernel.
    wemb3 = W_emb.reshape(V, 1, E)

    ginf, ginb = embed_project(
        ids_tm, wemb3,
        enc["wih_f"].astype(bf16), enc["wih_b"].astype(bf16),
        enc["b_f"], enc["b_b"],
        seq_len=T, batch=Bp)

    pooled = bilstm_maxpool(
        lens, ginf, ginb,
        enc["whh_f"].astype(bf16), enc["whh_b"].astype(bf16),
        seq_len=T)                                                       # (Bp, 2H)

    # W1 split row-wise over the feature blocks [u, v, |u-v|, u*v].
    F = 2 * H
    w1 = cls["w1"]
    logits = classify(
        pooled,
        w1[0 * F:1 * F].astype(bf16), w1[1 * F:2 * F].astype(bf16),
        w1[2 * F:3 * F].astype(bf16), w1[3 * F:4 * F].astype(bf16),
        cls["b1"],
        cls["w2"].astype(bf16), cls["b2"],
        cls["w3"].astype(bf16), cls["b3"],
        out_rows=Bh)
    return logits[:B]


# ----------------------------------------------------------------------------
# Deterministic synthetic parameters (mirror the torch shapes, pre-transposed
# to (in_dim, out_dim), PyTorch i,f,g,o gate order, b = b_ih + b_hh).
# ----------------------------------------------------------------------------
def make_params(key, vocab_size, emb_dim, rnn_size, hidden_size, n_labels):
    ks = jax.random.split(key, 16)
    s = 0.1
    H = rnn_size
    return {
        "W_emb": s * jax.random.normal(ks[0], (vocab_size, emb_dim), jnp.float32),
        "encoder": {
            "wih_f": s * jax.random.normal(ks[1], (emb_dim, 4 * H), jnp.float32),
            "whh_f": s * jax.random.normal(ks[2], (H, 4 * H), jnp.float32),
            "b_f":   s * jax.random.normal(ks[3], (1, 4 * H), jnp.float32),
            "wih_b": s * jax.random.normal(ks[4], (emb_dim, 4 * H), jnp.float32),
            "whh_b": s * jax.random.normal(ks[5], (H, 4 * H), jnp.float32),
            "b_b":   s * jax.random.normal(ks[6], (1, 4 * H), jnp.float32),
        },
        "classifier": {
            "w1": s * jax.random.normal(ks[7], (2 * H * 4, hidden_size), jnp.float32),
            "b1": s * jax.random.normal(ks[8], (1, hidden_size), jnp.float32),
            "w2": s * jax.random.normal(ks[9], (hidden_size, hidden_size), jnp.float32),
            "b2": s * jax.random.normal(ks[10], (1, hidden_size), jnp.float32),
            "w3": s * jax.random.normal(ks[11], (hidden_size, n_labels), jnp.float32),
            "b3": s * jax.random.normal(ks[12], (1, n_labels), jnp.float32),
        },
    }


if __name__ == "__main__":
    key = jax.random.PRNGKey(0)
    vocab_size, emb_dim, rnn_size, hidden_size, n_labels = 50, 128, 128, 128, 3
    B, T = 2, 8

    kp, kh, kw = jax.random.split(key, 3)
    params = make_params(kw, vocab_size, emb_dim, rnn_size, hidden_size, n_labels)

    # Token ids in [1, vocab); id 0 is PAD. Trailing padding exercises the
    # pack/pad masking and the backward-direction start offsets.
    premise = jax.random.randint(kp, (B, T), 1, vocab_size, dtype=jnp.int32)
    hypothesis = jax.random.randint(kh, (B, T), 1, vocab_size, dtype=jnp.int32)
    premise = premise.at[1, 6:].set(0)
    hypothesis = hypothesis.at[0, 5:].set(0)

    logits = infersent_forward(premise, hypothesis, params)
    jax.block_until_ready(logits)
    assert logits.shape == (B, n_labels) and logits.dtype == jnp.float32
    assert bool(jnp.all(jnp.isfinite(logits)))
    print("KERNEL_OK")
</pallas_src>

<mosaic_0001>
module attributes {stable_mosaic.version = 11 : i64} {
  func.func @embed_project_kernel(%arg0: i32, %arg1: memref<128xi32, #tpu.memory_space<smem>>, %arg2: memref<50x1x128xf32, #tpu.memory_space<any>>, %arg3: memref<128x512xbf16, #tpu.memory_space<vmem>>, %arg4: memref<128x512xbf16, #tpu.memory_space<vmem>>, %arg5: memref<1x512xf32, #tpu.memory_space<vmem>>, %arg6: memref<1x512xf32, #tpu.memory_space<vmem>>, %arg7: memref<16x512xf32, #tpu.memory_space<vmem>>, %arg8: memref<16x512xf32, #tpu.memory_space<vmem>>, %arg9: memref<16x128xf32, #tpu.memory_space<vmem>>, %arg10: memref<16x!tpu.dma_semaphore, #tpu.memory_space<semaphore_mem>>) attributes {dimension_semantics = [#tpu.dimension_semantics<parallel>], iteration_bounds = array<i64: 8>, scalar_prefetch = 1 : i64, scratch_operands = 2 : i64, tpu.core_type = #tpu.core_type<tc>, window_params = [{}, {pipeline_mode = #tpu.pipeline_mode<synchronous>, transform_indices = @transform_1, window_bounds = array<i64: 128, 512>}, {pipeline_mode = #tpu.pipeline_mode<synchronous>, transform_indices = @transform_2, window_bounds = array<i64: 128, 512>}, {pipeline_mode = #tpu.pipeline_mode<synchronous>, transform_indices = @transform_3, window_bounds = array<i64: 1, 512>}, {pipeline_mode = #tpu.pipeline_mode<synchronous>, transform_indices = @transform_4, window_bounds = array<i64: 1, 512>}, {transform_indices = @transform_5, window_bounds = array<i64: 16, 512>}, {transform_indices = @transform_6, window_bounds = array<i64: 16, 512>}]} {
    %c16_i32 = arith.constant 16 : i32
    %0 = arith.muli %arg0, %c16_i32 : i32
    %c0_i32 = arith.constant 0 : i32
    %1 = arith.addi %0, %c0_i32 : i32
    %2 = arith.index_cast %1 : i32 to index
    %3 = memref.load %arg1[%2] : memref<128xi32, #tpu.memory_space<smem>>
    %c0_i32_0 = arith.constant 0 : i32
    %c0_i32_1 = arith.constant 0 : i32
    %c0_i32_2 = arith.constant 0 : i32
    %4 = tpu.memref_slice %arg2[%3, %c0_i32_1, %c0_i32_2] : memref<50x1x128xf32, #tpu.memory_space<any>> -> memref<1x1x128xf32, #tpu.memory_space<any>>
    %5 = tpu.memref_squeeze %4 : memref<1x1x128xf32, #tpu.memory_space<any>> -> memref<1x128xf32, #tpu.memory_space<any>>
    %c0_i32_3 = arith.constant 0 : i32
    %c0_i32_4 = arith.constant 0 : i32
    %6 = tpu.memref_slice %arg9[%c0_i32_3, %c0_i32_4] : memref<16x128xf32, #tpu.memory_space<vmem>> -> memref<1x128xf32, #tpu.memory_space<vmem>>
    %7 = tpu.memref_slice %arg10[%c0_i32_0] : memref<16x!tpu.dma_semaphore, #tpu.memory_space<semaphore_mem>> -> memref<1x!tpu.dma_semaphore, #tpu.memory_space<semaphore_mem>>
    %8 = tpu.memref_squeeze %7 : memref<1x!tpu.dma_semaphore, #tpu.memory_space<semaphore_mem>> -> memref<!tpu.dma_semaphore, #tpu.memory_space<semaphore_mem>>
    tpu.enqueue_dma source(%5 : memref<1x128xf32, #tpu.memory_space<any>>) target(%6 : memref<1x128xf32, #tpu.memory_space<vmem>>) target_semaphore(%8 : memref<!tpu.dma_semaphore, #tpu.memory_space<semaphore_mem>>)
    %c1_i32 = arith.constant 1 : i32
    %9 = arith.addi %0, %c1_i32 : i32
    %10 = arith.index_cast %9 : i32 to index
    %11 = memref.load %arg1[%10] : memref<128xi32, #tpu.memory_space<smem>>
    %c1_i32_5 = arith.constant 1 : i32
    %c0_i32_6 = arith.constant 0 : i32
    %c0_i32_7 = arith.constant 0 : i32
    %12 = tpu.memref_slice %arg2[%11, %c0_i32_6, %c0_i32_7] : memref<50x1x128xf32, #tpu.memory_space<any>> -> memref<1x1x128xf32, #tpu.memory_space<any>>
    %13 = tpu.memref_squeeze %12 : memref<1x1x128xf32, #tpu.memory_space<any>> -> memref<1x128xf32, #tpu.memory_space<any>>
    %c1_i32_8 = arith.constant 1 : i32
    %c0_i32_9 = arith.constant 0 : i32
    %14 = tpu.memref_slice %arg9[%c1_i32_8, %c0_i32_9] : memref<16x128xf32, #tpu.memory_space<vmem>> -> memref<1x128xf32, #tpu.memory_space<vmem>>
    %15 = tpu.memref_slice %arg10[%c1_i32_5] : memref<16x!tpu.dma_semaphore, #tpu.memory_space<semaphore_mem>> -> memref<1x!tpu.dma_semaphore, #tpu.memory_space<semaphore_mem>>
    %16 = tpu.memref_squeeze %15 : memref<1x!tpu.dma_semaphore, #tpu.memory_space<semaphore_mem>> -> memref<!tpu.dma_semaphore, #tpu.memory_space<semaphore_mem>>
    tpu.enqueue_dma source(%13 : memref<1x128xf32, #tpu.memory_space<any>>) target(%14 : memref<1x128xf32, #tpu.memory_space<vmem>>) target_semaphore(%16 : memref<!tpu.dma_semaphore, #tpu.memory_space<semaphore_mem>>)
    %c2_i32 = arith.constant 2 : i32
    %17 = arith.addi %0, %c2_i32 : i32
    %18 = arith.index_cast %17 : i32 to index
    %19 = memref.load %arg1[%18] : memref<128xi32, #tpu.memory_space<smem>>
    %c2_i32_10 = arith.constant 2 : i32
    %c0_i32_11 = arith.constant 0 : i32
    %c0_i32_12 = arith.constant 0 : i32
    %20 = tpu.memref_slice %arg2[%19, %c0_i32_11, %c0_i32_12] : memref<50x1x128xf32, #tpu.memory_space<any>> -> memref<1x1x128xf32, #tpu.memory_space<any>>
    %21 = tpu.memref_squeeze %20 : memref<1x1x128xf32, #tpu.memory_space<any>> -> memref<1x128xf32, #tpu.memory_space<any>>
    %c2_i32_13 = arith.constant 2 : i32
    %c0_i32_14 = arith.constant 0 : i32
    %22 = tpu.memref_slice %arg9[%c2_i32_13, %c0_i32_14] : memref<16x128xf32, #tpu.memory_space<vmem>> -> memref<1x128xf32, #tpu.memory_space<vmem>>
    %23 = tpu.memref_slice %arg10[%c2_i32_10] : memref<16x!tpu.dma_semaphore, #tpu.memory_space<semaphore_mem>> -> memref<1x!tpu.dma_semaphore, #tpu.memory_space<semaphore_mem>>
    %24 = tpu.memref_squeeze %23 : memref<1x!tpu.dma_semaphore, #tpu.memory_space<semaphore_mem>> -> memref<!tpu.dma_semaphore, #tpu.memory_space<semaphore_mem>>
    tpu.enqueue_dma source(%21 : memref<1x128xf32, #tpu.memory_space<any>>) target(%22 : memref<1x128xf32, #tpu.memory_space<vmem>>) target_semaphore(%24 : memref<!tpu.dma_semaphore, #tpu.memory_space<semaphore_mem>>)
    %c3_i32 = arith.constant 3 : i32
    %25 = arith.addi %0, %c3_i32 : i32
    %26 = arith.index_cast %25 : i32 to index
    %27 = memref.load %arg1[%26] : memref<128xi32, #tpu.memory_space<smem>>
    %c3_i32_15 = arith.constant 3 : i32
    %c0_i32_16 = arith.constant 0 : i32
    %c0_i32_17 = arith.constant 0 : i32
    %28 = tpu.memref_slice %arg2[%27, %c0_i32_16, %c0_i32_17] : memref<50x1x128xf32, #tpu.memory_space<any>> -> memref<1x1x128xf32, #tpu.memory_space<any>>
    %29 = tpu.memref_squeeze %28 : memref<1x1x128xf32, #tpu.memory_space<any>> -> memref<1x128xf32, #tpu.memory_space<any>>
    %c3_i32_18 = arith.constant 3 : i32
    %c0_i32_19 = arith.constant 0 : i32
    %30 = tpu.memref_slice %arg9[%c3_i32_18, %c0_i32_19] : memref<16x128xf32, #tpu.memory_space<vmem>> -> memref<1x128xf32, #tpu.memory_space<vmem>>
    %31 = tpu.memref_slice %arg10[%c3_i32_15] : memref<16x!tpu.dma_semaphore, #tpu.memory_space<semaphore_mem>> -> memref<1x!tpu.dma_semaphore, #tpu.memory_space<semaphore_mem>>
    %32 = tpu.memref_squeeze %31 : memref<1x!tpu.dma_semaphore, #tpu.memory_space<semaphore_mem>> -> memref<!tpu.dma_semaphore, #tpu.memory_space<semaphore_mem>>
    tpu.enqueue_dma source(%29 : memref<1x128xf32, #tpu.memory_space<any>>) target(%30 : memref<1x128xf32, #tpu.memory_space<vmem>>) target_semaphore(%32 : memref<!tpu.dma_semaphore, #tpu.memory_space<semaphore_mem>>)
    %c4_i32 = arith.constant 4 : i32
    %33 = arith.addi %0, %c4_i32 : i32
    %34 = arith.index_cast %33 : i32 to index
    %35 = memref.load %arg1[%34] : memref<128xi32, #tpu.memory_space<smem>>
    %c4_i32_20 = arith.constant 4 : i32
    %c0_i32_21 = arith.constant 0 : i32
    %c0_i32_22 = arith.constant 0 : i32
    %36 = tpu.memref_slice %arg2[%35, %c0_i32_21, %c0_i32_22] : memref<50x1x128xf32, #tpu.memory_space<any>> -> memref<1x1x128xf32, #tpu.memory_space<any>>
    %37 = tpu.memref_squeeze %36 : memref<1x1x128xf32, #tpu.memory_space<any>> -> memref<1x128xf32, #tpu.memory_space<any>>
    %c4_i32_23 = arith.constant 4 : i32
    %c0_i32_24 = arith.constant 0 : i32
    %38 = tpu.memref_slice %arg9[%c4_i32_23, %c0_i32_24] : memref<16x128xf32, #tpu.memory_space<vmem>> -> memref<1x128xf32, #tpu.memory_space<vmem>>
    %39 = tpu.memref_slice %arg10[%c4_i32_20] : memref<16x!tpu.dma_semaphore, #tpu.memory_space<semaphore_mem>> -> memref<1x!tpu.dma_semaphore, #tpu.memory_space<semaphore_mem>>
    %40 = tpu.memref_squeeze %39 : memref<1x!tpu.dma_semaphore, #tpu.memory_space<semaphore_mem>> -> memref<!tpu.dma_semaphore, #tpu.memory_space<semaphore_mem>>
    tpu.enqueue_dma source(%37 : memref<1x128xf32, #tpu.memory_space<any>>) target(%38 : memref<1x128xf32, #tpu.memory_space<vmem>>) target_semaphore(%40 : memref<!tpu.dma_semaphore, #tpu.memory_space<semaphore_mem>>)
    %c5_i32 = arith.constant 5 : i32
    %41 = arith.addi %0, %c5_i32 : i32
    %42 = arith.index_cast %41 : i32 to index
    %43 = memref.load %arg1[%42] : memref<128xi32, #tpu.memory_space<smem>>
    %c5_i32_25 = arith.constant 5 : i32
    %c0_i32_26 = arith.constant 0 : i32
    %c0_i32_27 = arith.constant 0 : i32
    %44 = tpu.memref_slice %arg2[%43, %c0_i32_26, %c0_i32_27] : memref<50x1x128xf32, #tpu.memory_space<any>> -> memref<1x1x128xf32, #tpu.memory_space<any>>
    %45 = tpu.memref_squeeze %44 : memref<1x1x128xf32, #tpu.memory_space<any>> -> memref<1x128xf32, #tpu.memory_space<any>>
    %c5_i32_28 = arith.constant 5 : i32
    %c0_i32_29 = arith.constant 0 : i32
    %46 = tpu.memref_slice %arg9[%c5_i32_28, %c0_i32_29] : memref<16x128xf32, #tpu.memory_space<vmem>> -> memref<1x128xf32, #tpu.memory_space<vmem>>
    %47 = tpu.memref_slice %arg10[%c5_i32_25] : memref<16x!tpu.dma_semaphore, #tpu.memory_space<semaphore_mem>> -> memref<1x!tpu.dma_semaphore, #tpu.memory_space<semaphore_mem>>
    %48 = tpu.memref_squeeze %47 : memref<1x!tpu.dma_semaphore, #tpu.memory_space<semaphore_mem>> -> memref<!tpu.dma_semaphore, #tpu.memory_space<semaphore_mem>>
    tpu.enqueue_dma source(%45 : memref<1x128xf32, #tpu.memory_space<any>>) target(%46 : memref<1x128xf32, #tpu.memory_space<vmem>>) target_semaphore(%48 : memref<!tpu.dma_semaphore, #tpu.memory_space<semaphore_mem>>)
    %c6_i32 = arith.constant 6 : i32
    %49 = arith.addi %0, %c6_i32 : i32
    %50 = arith.index_cast %49 : i32 to index
    %51 = memref.load %arg1[%50] : memref<128xi32, #tpu.memory_space<smem>>
    %c6_i32_30 = arith.constant 6 : i32
    %c0_i32_31 = arith.constant 0 : i32
    %c0_i32_32 = arith.constant 0 : i32
    %52 = tpu.memref_slice %arg2[%51, %c0_i32_31, %c0_i32_32] : memref<50x1x128xf32, #tpu.memory_space<any>> -> memref<1x1x128xf32, #tpu.memory_space<any>>
    %53 = tpu.memref_squeeze %52 : memref<1x1x128xf32, #tpu.memory_space<any>> -> memref<1x128xf32, #tpu.memory_space<any>>
    %c6_i32_33 = arith.constant 6 : i32
    %c0_i32_34 = arith.constant 0 : i32
    %54 = tpu.memref_slice %arg9[%c6_i32_33, %c0_i32_34] : memref<16x128xf32, #tpu.memory_space<vmem>> -> memref<1x128xf32, #tpu.memory_space<vmem>>
    %55 = tpu.memref_slice %arg10[%c6_i32_30] : memref<16x!tpu.dma_semaphore, #tpu.memory_space<semaphore_mem>> -> memref<1x!tpu.dma_semaphore, #tpu.memory_space<semaphore_mem>>
    %56 = tpu.memref_squeeze %55 : memref<1x!tpu.dma_semaphore, #tpu.memory_space<semaphore_mem>> -> memref<!tpu.dma_semaphore, #tpu.memory_space<semaphore_mem>>
    tpu.enqueue_dma source(%53 : memref<1x128xf32, #tpu.memory_space<any>>) target(%54 : memref<1x128xf32, #tpu.memory_space<vmem>>) target_semaphore(%56 : memref<!tpu.dma_semaphore, #tpu.memory_space<semaphore_mem>>)
    %c7_i32 = arith.constant 7 : i32
    %57 = arith.addi %0, %c7_i32 : i32
    %58 = arith.index_cast %57 : i32 to index
    %59 = memref.load %arg1[%58] : memref<128xi32, #tpu.memory_space<smem>>
    %c7_i32_35 = arith.constant 7 : i32
    %c0_i32_36 = arith.constant 0 : i32
    %c0_i32_37 = arith.constant 0 : i32
    %60 = tpu.memref_slice %arg2[%59, %c0_i32_36, %c0_i32_37] : memref<50x1x128xf32, #tpu.memory_space<any>> -> memref<1x1x128xf32, #tpu.memory_space<any>>
    %61 = tpu.memref_squeeze %60 : memref<1x1x128xf32, #tpu.memory_space<any>> -> memref<1x128xf32, #tpu.memory_space<any>>
    %c7_i32_38 = arith.constant 7 : i32
    %c0_i32_39 = arith.constant 0 : i32
    %62 = tpu.memref_slice %arg9[%c7_i32_38, %c0_i32_39] : memref<16x128xf32, #tpu.memory_space<vmem>> -> memref<1x128xf32, #tpu.memory_space<vmem>>
    %63 = tpu.memref_slice %arg10[%c7_i32_35] : memref<16x!tpu.dma_semaphore, #tpu.memory_space<semaphore_mem>> -> memref<1x!tpu.dma_semaphore, #tpu.memory_space<semaphore_mem>>
    %64 = tpu.memref_squeeze %63 : memref<1x!tpu.dma_semaphore, #tpu.memory_space<semaphore_mem>> -> memref<!tpu.dma_semaphore, #tpu.memory_space<semaphore_mem>>
    tpu.enqueue_dma source(%61 : memref<1x128xf32, #tpu.memory_space<any>>) target(%62 : memref<1x128xf32, #tpu.memory_space<vmem>>) target_semaphore(%64 : memref<!tpu.dma_semaphore, #tpu.memory_space<semaphore_mem>>)
    %c8_i32 = arith.constant 8 : i32
    %65 = arith.addi %0, %c8_i32 : i32
    %66 = arith.index_cast %65 : i32 to index
    %67 = memref.load %arg1[%66] : memref<128xi32, #tpu.memory_space<smem>>
    %c8_i32_40 = arith.constant 8 : i32
    %c0_i32_41 = arith.constant 0 : i32
    %c0_i32_42 = arith.constant 0 : i32
    %68 = tpu.memref_slice %arg2[%67, %c0_i32_41, %c0_i32_42] : memref<50x1x128xf32, #tpu.memory_space<any>> -> memref<1x1x128xf32, #tpu.memory_space<any>>
    %69 = tpu.memref_squeeze %68 : memref<1x1x128xf32, #tpu.memory_space<any>> -> memref<1x128xf32, #tpu.memory_space<any>>
    %c8_i32_43 = arith.constant 8 : i32
    %c0_i32_44 = arith.constant 0 : i32
    %70 = tpu.memref_slice %arg9[%c8_i32_43, %c0_i32_44] : memref<16x128xf32, #tpu.memory_space<vmem>> -> memref<1x128xf32, #tpu.memory_space<vmem>>
    %71 = tpu.memref_slice %arg10[%c8_i32_40] : memref<16x!tpu.dma_semaphore, #tpu.memory_space<semaphore_mem>> -> memref<1x!tpu.dma_semaphore, #tpu.memory_space<semaphore_mem>>
    %72 = tpu.memref_squeeze %71 : memref<1x!tpu.dma_semaphore, #tpu.memory_space<semaphore_mem>> -> memref<!tpu.dma_semaphore, #tpu.memory_space<semaphore_mem>>
    tpu.enqueue_dma source(%69 : memref<1x128xf32, #tpu.memory_space<any>>) target(%70 : memref<1x128xf32, #tpu.memory_space<vmem>>) target_semaphore(%72 : memref<!tpu.dma_semaphore, #tpu.memory_space<semaphore_mem>>)
    %c9_i32 = arith.constant 9 : i32
    %73 = arith.addi %0, %c9_i32 : i32
    %74 = arith.index_cast %73 : i32 to index
    %75 = memref.load %arg1[%74] : memref<128xi32, #tpu.memory_space<smem>>
    %c9_i32_45 = arith.constant 9 : i32
    %c0_i32_46 = arith.constant 0 : i32
    %c0_i32_47 = arith.constant 0 : i32
    %76 = tpu.memref_slice %arg2[%75, %c0_i32_46, %c0_i32_47] : memref<50x1x128xf32, #tpu.memory_space<any>> -> memref<1x1x128xf32, #tpu.memory_space<any>>
    %77 = tpu.memref_squeeze %76 : memref<1x1x128xf32, #tpu.memory_space<any>> -> memref<1x128xf32, #tpu.memory_space<any>>
    %c9_i32_48 = arith.constant 9 : i32
    %c0_i32_49 = arith.constant 0 : i32
    %78 = tpu.memref_slice %arg9[%c9_i32_48, %c0_i32_49] : memref<16x128xf32, #tpu.memory_space<vmem>> -> memref<1x128xf32, #tpu.memory_space<vmem>>
    %79 = tpu.memref_slice %arg10[%c9_i32_45] : memref<16x!tpu.dma_semaphore, #tpu.memory_space<semaphore_mem>> -> memref<1x!tpu.dma_semaphore, #tpu.memory_space<semaphore_mem>>
    %80 = tpu.memref_squeeze %79 : memref<1x!tpu.dma_semaphore, #tpu.memory_space<semaphore_mem>> -> memref<!tpu.dma_semaphore, #tpu.memory_space<semaphore_mem>>
    tpu.enqueue_dma source(%77 : memref<1x128xf32, #tpu.memory_space<any>>) target(%78 : memref<1x128xf32, #tpu.memory_space<vmem>>) target_semaphore(%80 : memref<!tpu.dma_semaphore, #tpu.memory_space<semaphore_mem>>)
    %c10_i32 = arith.constant 10 : i32
    %81 = arith.addi %0, %c10_i32 : i32
    %82 = arith.index_cast %81 : i32 to index
    %83 = memref.load %arg1[%82] : memref<128xi32, #tpu.memory_space<smem>>
    %c10_i32_50 = arith.constant 10 : i32
    %c0_i32_51 = arith.constant 0 : i32
    %c0_i32_52 = arith.constant 0 : i32
    %84 = tpu.memref_slice %arg2[%83, %c0_i32_51, %c0_i32_52] : memref<50x1x128xf32, #tpu.memory_space<any>> -> memref<1x1x128xf32, #tpu.memory_space<any>>
    %85 = tpu.memref_squeeze %84 : memref<1x1x128xf32, #tpu.memory_space<any>> -> memref<1x128xf32, #tpu.memory_space<any>>
    %c10_i32_53 = arith.constant 10 : i32
    %c0_i32_54 = arith.constant 0 : i32
    %86 = tpu.memref_slice %arg9[%c10_i32_53, %c0_i32_54] : memref<16x128xf32, #tpu.memory_space<vmem>> -> memref<1x128xf32, #tpu.memory_space<vmem>>
    %87 = tpu.memref_slice %arg10[%c10_i32_50] : memref<16x!tpu.dma_semaphore, #tpu.memory_space<semaphore_mem>> -> memref<1x!tpu.dma_semaphore, #tpu.memory_space<semaphore_mem>>
    %88 = tpu.memref_squeeze %87 : memref<1x!tpu.dma_semaphore, #tpu.memory_space<semaphore_mem>> -> memref<!tpu.dma_semaphore, #tpu.memory_space<semaphore_mem>>
    tpu.enqueue_dma source(%85 : memref<1x128xf32, #tpu.memory_space<any>>) target(%86 : memref<1x128xf32, #tpu.memory_space<vmem>>) target_semaphore(%88 : memref<!tpu.dma_semaphore, #tpu.memory_space<semaphore_mem>>)
    %c11_i32 = arith.constant 11 : i32
    %89 = arith.addi %0, %c11_i32 : i32
    %90 = arith.index_cast %89 : i32 to index
    %91 = memref.load %arg1[%90] : memref<128xi32, #tpu.memory_space<smem>>
    %c11_i32_55 = arith.constant 11 : i32
    %c0_i32_56 = arith.constant 0 : i32
    %c0_i32_57 = arith.constant 0 : i32
    %92 = tpu.memref_slice %arg2[%91, %c0_i32_56, %c0_i32_57] : memref<50x1x128xf32, #tpu.memory_space<any>> -> memref<1x1x128xf32, #tpu.memory_space<any>>
    %93 = tpu.memref_squeeze %92 : memref<1x1x128xf32, #tpu.memory_space<any>> -> memref<1x128xf32, #tpu.memory_space<any>>
    %c11_i32_58 = arith.constant 11 : i32
    %c0_i32_59 = arith.constant 0 : i32
    %94 = tpu.memref_slice %arg9[%c11_i32_58, %c0_i32_59] : memref<16x128xf32, #tpu.memory_space<vmem>> -> memref<1x128xf32, #tpu.memory_space<vmem>>
    %95 = tpu.memref_slice %arg10[%c11_i32_55] : memref<16x!tpu.dma_semaphore, #tpu.memory_space<semaphore_mem>> -> memref<1x!tpu.dma_semaphore, #tpu.memory_space<semaphore_mem>>
    %96 = tpu.memref_squeeze %95 : memref<1x!tpu.dma_semaphore, #tpu.memory_space<semaphore_mem>> -> memref<!tpu.dma_semaphore, #tpu.memory_space<semaphore_mem>>
    tpu.enqueue_dma source(%93 : memref<1x128xf32, #tpu.memory_space<any>>) target(%94 : memref<1x128xf32, #tpu.memory_space<vmem>>) target_semaphore(%96 : memref<!tpu.dma_semaphore, #tpu.memory_space<semaphore_mem>>)
    %c12_i32 = arith.constant 12 : i32
    %97 = arith.addi %0, %c12_i32 : i32
    %98 = arith.index_cast %97 : i32 to index
    %99 = memref.load %arg1[%98] : memref<128xi32, #tpu.memory_space<smem>>
    %c12_i32_60 = arith.constant 12 : i32
    %c0_i32_61 = arith.constant 0 : i32
    %c0_i32_62 = arith.constant 0 : i32
    %100 = tpu.memref_slice %arg2[%99, %c0_i32_61, %c0_i32_62] : memref<50x1x128xf32, #tpu.memory_space<any>> -> memref<1x1x128xf32, #tpu.memory_space<any>>
    %101 = tpu.memref_squeeze %100 : memref<1x1x128xf32, #tpu.memory_space<any>> -> memref<1x128xf32, #tpu.memory_space<any>>
    %c12_i32_63 = arith.constant 12 : i32
    %c0_i32_64 = arith.constant 0 : i32
    %102 = tpu.memref_slice %arg9[%c12_i32_63, %c0_i32_64] : memref<16x128xf32, #tpu.memory_space<vmem>> -> memref<1x128xf32, #tpu.memory_space<vmem>>
    %103 = tpu.memref_slice %arg10[%c12_i32_60] : memref<16x!tpu.dma_semaphore, #tpu.memory_space<semaphore_mem>> -> memref<1x!tpu.dma_semaphore, #tpu.memory_space<semaphore_mem>>
    %104 = tpu.memref_squeeze %103 : memref<1x!tpu.dma_semaphore, #tpu.memory_space<semaphore_mem>> -> memref<!tpu.dma_semaphore, #tpu.memory_space<semaphore_mem>>
    tpu.enqueue_dma source(%101 : memref<1x128xf32, #tpu.memory_space<any>>) target(%102 : memref<1x128xf32, #tpu.memory_space<vmem>>) target_semaphore(%104 : memref<!tpu.dma_semaphore, #tpu.memory_space<semaphore_mem>>)
    %c13_i32 = arith.constant 13 : i32
    %105 = arith.addi %0, %c13_i32 : i32
    %106 = arith.index_cast %105 : i32 to index
    %107 = memref.load %arg1[%106] : memref<128xi32, #tpu.memory_space<smem>>
    %c13_i32_65 = arith.constant 13 : i32
    %c0_i32_66 = arith.constant 0 : i32
    %c0_i32_67 = arith.constant 0 : i32
    %108 = tpu.memref_slice %arg2[%107, %c0_i32_66, %c0_i32_67] : memref<50x1x128xf32, #tpu.memory_space<any>> -> memref<1x1x128xf32, #tpu.memory_space<any>>
    %109 = tpu.memref_squeeze %108 : memref<1x1x128xf32, #tpu.memory_space<any>> -> memref<1x128xf32, #tpu.memory_space<any>>
    %c13_i32_68 = arith.constant 13 : i32
    %c0_i32_69 = arith.constant 0 : i32
    %110 = tpu.memref_slice %arg9[%c13_i32_68, %c0_i32_69] : memref<16x128xf32, #tpu.memory_space<vmem>> -> memref<1x128xf32, #tpu.memory_space<vmem>>
    %111 = tpu.memref_slice %arg10[%c13_i32_65] : memref<16x!tpu.dma_semaphore, #tpu.memory_space<semaphore_mem>> -> memref<1x!tpu.dma_semaphore, #tpu.memory_space<semaphore_mem>>
    %112 = tpu.memref_squeeze %111 : memref<1x!tpu.dma_semaphore, #tpu.memory_space<semaphore_mem>> -> memref<!tpu.dma_semaphore, #tpu.memory_space<semaphore_mem>>
    tpu.enqueue_dma source(%109 : memref<1x128xf32, #tpu.memory_space<any>>) target(%110 : memref<1x128xf32, #tpu.memory_space<vmem>>) target_semaphore(%112 : memref<!tpu.dma_semaphore, #tpu.memory_space<semaphore_mem>>)
    %c14_i32 = arith.constant 14 : i32
    %113 = arith.addi %0, %c14_i32 : i32
    %114 = arith.index_cast %113 : i32 to index
    %115 = memref.load %arg1[%114] : memref<128xi32, #tpu.memory_space<smem>>
    %c14_i32_70 = arith.constant 14 : i32
    %c0_i32_71 = arith.constant 0 : i32
    %c0_i32_72 = arith.constant 0 : i32
    %116 = tpu.memref_slice %arg2[%115, %c0_i32_71, %c0_i32_72] : memref<50x1x128xf32, #tpu.memory_space<any>> -> memref<1x1x128xf32, #tpu.memory_space<any>>
    %117 = tpu.memref_squeeze %116 : memref<1x1x128xf32, #tpu.memory_space<any>> -> memref<1x128xf32, #tpu.memory_space<any>>
    %c14_i32_73 = arith.constant 14 : i32
    %c0_i32_74 = arith.constant 0 : i32
    %118 = tpu.memref_slice %arg9[%c14_i32_73, %c0_i32_74] : memref<16x128xf32, #tpu.memory_space<vmem>> -> memref<1x128xf32, #tpu.memory_space<vmem>>
    %119 = tpu.memref_slice %arg10[%c14_i32_70] : memref<16x!tpu.dma_semaphore, #tpu.memory_space<semaphore_mem>> -> memref<1x!tpu.dma_semaphore, #tpu.memory_space<semaphore_mem>>
    %120 = tpu.memref_squeeze %119 : memref<1x!tpu.dma_semaphore, #tpu.memory_space<semaphore_mem>> -> memref<!tpu.dma_semaphore, #tpu.memory_space<semaphore_mem>>
    tpu.enqueue_dma source(%117 : memref<1x128xf32, #tpu.memory_space<any>>) target(%118 : memref<1x128xf32, #tpu.memory_space<vmem>>) target_semaphore(%120 : memref<!tpu.dma_semaphore, #tpu.memory_space<semaphore_mem>>)
    %c15_i32 = arith.constant 15 : i32
    %121 = arith.addi %0, %c15_i32 : i32
    %122 = arith.index_cast %121 : i32 to index
    %123 = memref.load %arg1[%122] : memref<128xi32, #tpu.memory_space<smem>>
    %c15_i32_75 = arith.constant 15 : i32
    %c0_i32_76 = arith.constant 0 : i32
    %c0_i32_77 = arith.constant 0 : i32
    %124 = tpu.memref_slice %arg2[%123, %c0_i32_76, %c0_i32_77] : memref<50x1x128xf32, #tpu.memory_space<any>> -> memref<1x1x128xf32, #tpu.memory_space<any>>
    %125 = tpu.memref_squeeze %124 : memref<1x1x128xf32, #tpu.memory_space<any>> -> memref<1x128xf32, #tpu.memory_space<any>>
    %c15_i32_78 = arith.constant 15 : i32
    %c0_i32_79 = arith.constant 0 : i32
    %126 = tpu.memref_slice %arg9[%c15_i32_78, %c0_i32_79] : memref<16x128xf32, #tpu.memory_space<vmem>> -> memref<1x128xf32, #tpu.memory_space<vmem>>
    %127 = tpu.memref_slice %arg10[%c15_i32_75] : memref<16x!tpu.dma_semaphore, #tpu.memory_space<semaphore_mem>> -> memref<1x!tpu.dma_semaphore, #tpu.memory_space<semaphore_mem>>
    %128 = tpu.memref_squeeze %127 : memref<1x!tpu.dma_semaphore, #tpu.memory_space<semaphore_mem>> -> memref<!tpu.dma_semaphore, #tpu.memory_space<semaphore_mem>>
    tpu.enqueue_dma source(%125 : memref<1x128xf32, #tpu.memory_space<any>>) target(%126 : memref<1x128xf32, #tpu.memory_space<vmem>>) target_semaphore(%128 : memref<!tpu.dma_semaphore, #tpu.memory_space<semaphore_mem>>)
    %c0_i32_80 = arith.constant 0 : i32
    %c0_i32_81 = arith.constant 0 : i32
    %c0_i32_82 = arith.constant 0 : i32
    %129 = tpu.memref_slice %arg2[%3, %c0_i32_81, %c0_i32_82] : memref<50x1x128xf32, #tpu.memory_space<any>> -> memref<1x1x128xf32, #tpu.memory_space<any>>
    %130 = tpu.memref_squeeze %129 : memref<1x1x128xf32, #tpu.memory_space<any>> -> memref<1x128xf32, #tpu.memory_space<any>>
    %c0_i32_83 = arith.constant 0 : i32
    %c0_i32_84 = arith.constant 0 : i32
    %131 = tpu.memref_slice %arg9[%c0_i32_83, %c0_i32_84] : memref<16x128xf32, #tpu.memory_space<vmem>> -> memref<1x128xf32, #tpu.memory_space<vmem>>
    %132 = tpu.memref_slice %arg10[%c0_i32_80] : memref<16x!tpu.dma_semaphore, #tpu.memory_space<semaphore_mem>> -> memref<1x!tpu.dma_semaphore, #tpu.memory_space<semaphore_mem>>
    %133 = tpu.memref_squeeze %132 : memref<1x!tpu.dma_semaphore, #tpu.memory_space<semaphore_mem>> -> memref<!tpu.dma_semaphore, #tpu.memory_space<semaphore_mem>>
    tpu.wait_dma2 semaphore(%133 : memref<!tpu.dma_semaphore, #tpu.memory_space<semaphore_mem>>) src(%130 : memref<1x128xf32, #tpu.memory_space<any>>) dst(%131 : memref<1x128xf32, #tpu.memory_space<vmem>>)
    %c1_i32_85 = arith.constant 1 : i32
    %c0_i32_86 = arith.constant 0 : i32
    %c0_i32_87 = arith.constant 0 : i32
    %134 = tpu.memref_slice %arg2[%11, %c0_i32_86, %c0_i32_87] : memref<50x1x128xf32, #tpu.memory_space<any>> -> memref<1x1x128xf32, #tpu.memory_space<any>>
    %135 = tpu.memref_squeeze %134 : memref<1x1x128xf32, #tpu.memory_space<any>> -> memref<1x128xf32, #tpu.memory_space<any>>
    %c1_i32_88 = arith.constant 1 : i32
    %c0_i32_89 = arith.constant 0 : i32
    %136 = tpu.memref_slice %arg9[%c1_i32_88, %c0_i32_89] : memref<16x128xf32, #tpu.memory_space<vmem>> -> memref<1x128xf32, #tpu.memory_space<vmem>>
    %137 = tpu.memref_slice %arg10[%c1_i32_85] : memref<16x!tpu.dma_semaphore, #tpu.memory_space<semaphore_mem>> -> memref<1x!tpu.dma_semaphore, #tpu.memory_space<semaphore_mem>>
    %138 = tpu.memref_squeeze %137 : memref<1x!tpu.dma_semaphore, #tpu.memory_space<semaphore_mem>> -> memref<!tpu.dma_semaphore, #tpu.memory_space<semaphore_mem>>
    tpu.wait_dma2 semaphore(%138 : memref<!tpu.dma_semaphore, #tpu.memory_space<semaphore_mem>>) src(%135 : memref<1x128xf32, #tpu.memory_space<any>>) dst(%136 : memref<1x128xf32, #tpu.memory_space<vmem>>)
    %c2_i32_90 = arith.constant 2 : i32
    %c0_i32_91 = arith.constant 0 : i32
    %c0_i32_92 = arith.constant 0 : i32
    %139 = tpu.memref_slice %arg2[%19, %c0_i32_91, %c0_i32_92] : memref<50x1x128xf32, #tpu.memory_space<any>> -> memref<1x1x128xf32, #tpu.memory_space<any>>
    %140 = tpu.memref_squeeze %139 : memref<1x1x128xf32, #tpu.memory_space<any>> -> memref<1x128xf32, #tpu.memory_space<any>>
    %c2_i32_93 = arith.constant 2 : i32
    %c0_i32_94 = arith.constant 0 : i32
    %141 = tpu.memref_slice %arg9[%c2_i32_93, %c0_i32_94] : memref<16x128xf32, #tpu.memory_space<vmem>> -> memref<1x128xf32, #tpu.memory_space<vmem>>
    %142 = tpu.memref_slice %arg10[%c2_i32_90] : memref<16x!tpu.dma_semaphore, #tpu.memory_space<semaphore_mem>> -> memref<1x!tpu.dma_semaphore, #tpu.memory_space<semaphore_mem>>
    %143 = tpu.memref_squeeze %142 : memref<1x!tpu.dma_semaphore, #tpu.memory_space<semaphore_mem>> -> memref<!tpu.dma_semaphore, #tpu.memory_space<semaphore_mem>>
    tpu.wait_dma2 semaphore(%143 : memref<!tpu.dma_semaphore, #tpu.memory_space<semaphore_mem>>) src(%140 : memref<1x128xf32, #tpu.memory_space<any>>) dst(%141 : memref<1x128xf32, #tpu.memory_space<vmem>>)
    %c3_i32_95 = arith.constant 3 : i32
    %c0_i32_96 = arith.constant 0 : i32
    %c0_i32_97 = arith.constant 0 : i32
    %144 = tpu.memref_slice %arg2[%27, %c0_i32_96, %c0_i32_97] : memref<50x1x128xf32, #tpu.memory_space<any>> -> memref<1x1x128xf32, #tpu.memory_space<any>>
    %145 = tpu.memref_squeeze %144 : memref<1x1x128xf32, #tpu.memory_space<any>> -> memref<1x128xf32, #tpu.memory_space<any>>
    %c3_i32_98 = arith.constant 3 : i32
    %c0_i32_99 = arith.constant 0 : i32
    %146 = tpu.memref_slice %arg9[%c3_i32_98, %c0_i32_99] : memref<16x128xf32, #tpu.memory_space<vmem>> -> memref<1x128xf32, #tpu.memory_space<vmem>>
    %147 = tpu.memref_slice %arg10[%c3_i32_95] : memref<16x!tpu.dma_semaphore, #tpu.memory_space<semaphore_mem>> -> memref<1x!tpu.dma_semaphore, #tpu.memory_space<semaphore_mem>>
    %148 = tpu.memref_squeeze %147 : memref<1x!tpu.dma_semaphore, #tpu.memory_space<semaphore_mem>> -> memref<!tpu.dma_semaphore, #tpu.memory_space<semaphore_mem>>
    tpu.wait_dma2 semaphore(%148 : memref<!tpu.dma_semaphore, #tpu.memory_space<semaphore_mem>>) src(%145 : memref<1x128xf32, #tpu.memory_space<any>>) dst(%146 : memref<1x128xf32, #tpu.memory_space<vmem>>)
    %c4_i32_100 = arith.constant 4 : i32
    %c0_i32_101 = arith.constant 0 : i32
    %c0_i32_102 = arith.constant 0 : i32
    %149 = tpu.memref_slice %arg2[%35, %c0_i32_101, %c0_i32_102] : memref<50x1x128xf32, #tpu.memory_space<any>> -> memref<1x1x128xf32, #tpu.memory_space<any>>
    %150 = tpu.memref_squeeze %149 : memref<1x1x128xf32, #tpu.memory_space<any>> -> memref<1x128xf32, #tpu.memory_space<any>>
    %c4_i32_103 = arith.constant 4 : i32
    %c0_i32_104 = arith.constant 0 : i32
    %151 = tpu.memref_slice %arg9[%c4_i32_103, %c0_i32_104] : memref<16x128xf32, #tpu.memory_space<vmem>> -> memref<1x128xf32, #tpu.memory_space<vmem>>
    %152 = tpu.memref_slice %arg10[%c4_i32_100] : memref<16x!tpu.dma_semaphore, #tpu.memory_space<semaphore_mem>> -> memref<1x!tpu.dma_semaphore, #tpu.memory_space<semaphore_mem>>
    %153 = tpu.memref_squeeze %152 : memref<1x!tpu.dma_semaphore, #tpu.memory_space<semaphore_mem>> -> memref<!tpu.dma_semaphore, #tpu.memory_space<semaphore_mem>>
    tpu.wait_dma2 semaphore(%153 : memref<!tpu.dma_semaphore, #tpu.memory_space<semaphore_mem>>) src(%150 : memref<1x128xf32, #tpu.memory_space<any>>) dst(%151 : memref<1x128xf32, #tpu.memory_space<vmem>>)
    %c5_i32_105 = arith.constant 5 : i32
    %c0_i32_106 = arith.constant 0 : i32
    %c0_i32_107 = arith.constant 0 : i32
    %154 = tpu.memref_slice %arg2[%43, %c0_i32_106, %c0_i32_107] : memref<50x1x128xf32, #tpu.memory_space<any>> -> memref<1x1x128xf32, #tpu.memory_space<any>>
    %155 = tpu.memref_squeeze %154 : memref<1x1x128xf32, #tpu.memory_space<any>> -> memref<1x128xf32, #tpu.memory_space<any>>
    %c5_i32_108 = arith.constant 5 : i32
    %c0_i32_109 = arith.constant 0 : i32
    %156 = tpu.memref_slice %arg9[%c5_i32_108, %c0_i32_109] : memref<16x128xf32, #tpu.memory_space<vmem>> -> memref<1x128xf32, #tpu.memory_space<vmem>>
    %157 = tpu.memref_slice %arg10[%c5_i32_105] : memref<16x!tpu.dma_semaphore, #tpu.memory_space<semaphore_mem>> -> memref<1x!tpu.dma_semaphore, #tpu.memory_space<semaphore_mem>>
    %158 = tpu.memref_squeeze %157 : memref<1x!tpu.dma_semaphore, #tpu.memory_space<semaphore_mem>> -> memref<!tpu.dma_semaphore, #tpu.memory_space<semaphore_mem>>
    tpu.wait_dma2 semaphore(%158 : memref<!tpu.dma_semaphore, #tpu.memory_space<semaphore_mem>>) src(%155 : memref<1x128xf32, #tpu.memory_space<any>>) dst(%156 : memref<1x128xf32, #tpu.memory_space<vmem>>)
    %c6_i32_110 = arith.constant 6 : i32
    %c0_i32_111 = arith.constant 0 : i32
    %c0_i32_112 = arith.constant 0 : i32
    %159 = tpu.memref_slice %arg2[%51, %c0_i32_111, %c0_i32_112] : memref<50x1x128xf32, #tpu.memory_space<any>> -> memref<1x1x128xf32, #tpu.memory_space<any>>
    %160 = tpu.memref_squeeze %159 : memref<1x1x128xf32, #tpu.memory_space<any>> -> memref<1x128xf32, #tpu.memory_space<any>>
    %c6_i32_113 = arith.constant 6 : i32
    %c0_i32_114 = arith.constant 0 : i32
    %161 = tpu.memref_slice %arg9[%c6_i32_113, %c0_i32_114] : memref<16x128xf32, #tpu.memory_space<vmem>> -> memref<1x128xf32, #tpu.memory_space<vmem>>
    %162 = tpu.memref_slice %arg10[%c6_i32_110] : memref<16x!tpu.dma_semaphore, #tpu.memory_space<semaphore_mem>> -> memref<1x!tpu.dma_semaphore, #tpu.memory_space<semaphore_mem>>
    %163 = tpu.memref_squeeze %162 : memref<1x!tpu.dma_semaphore, #tpu.memory_space<semaphore_mem>> -> memref<!tpu.dma_semaphore, #tpu.memory_space<semaphore_mem>>
    tpu.wait_dma2 semaphore(%163 : memref<!tpu.dma_semaphore, #tpu.memory_space<semaphore_mem>>) src(%160 : memref<1x128xf32, #tpu.memory_space<any>>) dst(%161 : memref<1x128xf32, #tpu.memory_space<vmem>>)
    %c7_i32_115 = arith.constant 7 : i32
    %c0_i32_116 = arith.constant 0 : i32
    %c0_i32_117 = arith.constant 0 : i32
    %164 = tpu.memref_slice %arg2[%59, %c0_i32_116, %c0_i32_117] : memref<50x1x128xf32, #tpu.memory_space<any>> -> memref<1x1x128xf32, #tpu.memory_space<any>>
    %165 = tpu.memref_squeeze %164 : memref<1x1x128xf32, #tpu.memory_space<any>> -> memref<1x128xf32, #tpu.memory_space<any>>
    %c7_i32_118 = arith.constant 7 : i32
    %c0_i32_119 = arith.constant 0 : i32
    %166 = tpu.memref_slice %arg9[%c7_i32_118, %c0_i32_119] : memref<16x128xf32, #tpu.memory_space<vmem>> -> memref<1x128xf32, #tpu.memory_space<vmem>>
    %167 = tpu.memref_slice %arg10[%c7_i32_115] : memref<16x!tpu.dma_semaphore, #tpu.memory_space<semaphore_mem>> -> memref<1x!tpu.dma_semaphore, #tpu.memory_space<semaphore_mem>>
    %168 = tpu.memref_squeeze %167 : memref<1x!tpu.dma_semaphore, #tpu.memory_space<semaphore_mem>> -> memref<!tpu.dma_semaphore, #tpu.memory_space<semaphore_mem>>
    tpu.wait_dma2 semaphore(%168 : memref<!tpu.dma_semaphore, #tpu.memory_space<semaphore_mem>>) src(%165 : memref<1x128xf32, #tpu.memory_space<any>>) dst(%166 : memref<1x128xf32, #tpu.memory_space<vmem>>)
    %c8_i32_120 = arith.constant 8 : i32
    %c0_i32_121 = arith.constant 0 : i32
    %c0_i32_122 = arith.constant 0 : i32
    %169 = tpu.memref_slice %arg2[%67, %c0_i32_121, %c0_i32_122] : memref<50x1x128xf32, #tpu.memory_space<any>> -> memref<1x1x128xf32, #tpu.memory_space<any>>
    %170 = tpu.memref_squeeze %169 : memref<1x1x128xf32, #tpu.memory_space<any>> -> memref<1x128xf32, #tpu.memory_space<any>>
    %c8_i32_123 = arith.constant 8 : i32
    %c0_i32_124 = arith.constant 0 : i32
    %171 = tpu.memref_slice %arg9[%c8_i32_123, %c0_i32_124] : memref<16x128xf32, #tpu.memory_space<vmem>> -> memref<1x128xf32, #tpu.memory_space<vmem>>
    %172 = tpu.memref_slice %arg10[%c8_i32_120] : memref<16x!tpu.dma_semaphore, #tpu.memory_space<semaphore_mem>> -> memref<1x!tpu.dma_semaphore, #tpu.memory_space<semaphore_mem>>
    %173 = tpu.memref_squeeze %172 : memref<1x!tpu.dma_semaphore, #tpu.memory_space<semaphore_mem>> -> memref<!tpu.dma_semaphore, #tpu.memory_space<semaphore_mem>>
    tpu.wait_dma2 semaphore(%173 : memref<!tpu.dma_semaphore, #tpu.memory_space<semaphore_mem>>) src(%170 : memref<1x128xf32, #tpu.memory_space<any>>) dst(%171 : memref<1x128xf32, #tpu.memory_space<vmem>>)
    %c9_i32_125 = arith.constant 9 : i32
    %c0_i32_126 = arith.constant 0 : i32
    %c0_i32_127 = arith.constant 0 : i32
    %174 = tpu.memref_slice %arg2[%75, %c0_i32_126, %c0_i32_127] : memref<50x1x128xf32, #tpu.memory_space<any>> -> memref<1x1x128xf32, #tpu.memory_space<any>>
    %175 = tpu.memref_squeeze %174 : memref<1x1x128xf32, #tpu.memory_space<any>> -> memref<1x128xf32, #tpu.memory_space<any>>
    %c9_i32_128 = arith.constant 9 : i32
    %c0_i32_129 = arith.constant 0 : i32
    %176 = tpu.memref_slice %arg9[%c9_i32_128, %c0_i32_129] : memref<16x128xf32, #tpu.memory_space<vmem>> -> memref<1x128xf32, #tpu.memory_space<vmem>>
    %177 = tpu.memref_slice %arg10[%c9_i32_125] : memref<16x!tpu.dma_semaphore, #tpu.memory_space<semaphore_mem>> -> memref<1x!tpu.dma_semaphore, #tpu.memory_space<semaphore_mem>>
    %178 = tpu.memref_squeeze %177 : memref<1x!tpu.dma_semaphore, #tpu.memory_space<semaphore_mem>> -> memref<!tpu.dma_semaphore, #tpu.memory_space<semaphore_mem>>
    tpu.wait_dma2 semaphore(%178 : memref<!tpu.dma_semaphore, #tpu.memory_space<semaphore_mem>>) src(%175 : memref<1x128xf32, #tpu.memory_space<any>>) dst(%176 : memref<1x128xf32, #tpu.memory_space<vmem>>)
    %c10_i32_130 = arith.constant 10 : i32
    %c0_i32_131 = arith.constant 0 : i32
    %c0_i32_132 = arith.constant 0 : i32
    %179 = tpu.memref_slice %arg2[%83, %c0_i32_131, %c0_i32_132] : memref<50x1x128xf32, #tpu.memory_space<any>> -> memref<1x1x128xf32, #tpu.memory_space<any>>
    %180 = tpu.memref_squeeze %179 : memref<1x1x128xf32, #tpu.memory_space<any>> -> memref<1x128xf32, #tpu.memory_space<any>>
    %c10_i32_133 = arith.constant 10 : i32
    %c0_i32_134 = arith.constant 0 : i32
    %181 = tpu.memref_slice %arg9[%c10_i32_133, %c0_i32_134] : memref<16x128xf32, #tpu.memory_space<vmem>> -> memref<1x128xf32, #tpu.memory_space<vmem>>
    %182 = tpu.memref_slice %arg10[%c10_i32_130] : memref<16x!tpu.dma_semaphore, #tpu.memory_space<semaphore_mem>> -> memref<1x!tpu.dma_semaphore, #tpu.memory_space<semaphore_mem>>
    %183 = tpu.memref_squeeze %182 : memref<1x!tpu.dma_semaphore, #tpu.memory_space<semaphore_mem>> -> memref<!tpu.dma_semaphore, #tpu.memory_space<semaphore_mem>>
    tpu.wait_dma2 semaphore(%183 : memref<!tpu.dma_semaphore, #tpu.memory_space<semaphore_mem>>) src(%180 : memref<1x128xf32, #tpu.memory_space<any>>) dst(%181 : memref<1x128xf32, #tpu.memory_space<vmem>>)
    %c11_i32_135 = arith.constant 11 : i32
    %c0_i32_136 = arith.constant 0 : i32
    %c0_i32_137 = arith.constant 0 : i32
    %184 = tpu.memref_slice %arg2[%91, %c0_i32_136, %c0_i32_137] : memref<50x1x128xf32, #tpu.memory_space<any>> -> memref<1x1x128xf32, #tpu.memory_space<any>>
    %185 = tpu.memref_squeeze %184 : memref<1x1x128xf32, #tpu.memory_space<any>> -> memref<1x128xf32, #tpu.memory_space<any>>
    %c11_i32_138 = arith.constant 11 : i32
    %c0_i32_139 = arith.constant 0 : i32
    %186 = tpu.memref_slice %arg9[%c11_i32_138, %c0_i32_139] : memref<16x128xf32, #tpu.memory_space<vmem>> -> memref<1x128xf32, #tpu.memory_space<vmem>>
    %187 = tpu.memref_slice %arg10[%c11_i32_135] : memref<16x!tpu.dma_semaphore, #tpu.memory_space<semaphore_mem>> -> memref<1x!tpu.dma_semaphore, #tpu.memory_space<semaphore_mem>>
    %188 = tpu.memref_squeeze %187 : memref<1x!tpu.dma_semaphore, #tpu.memory_space<semaphore_mem>> -> memref<!tpu.dma_semaphore, #tpu.memory_space<semaphore_mem>>
    tpu.wait_dma2 semaphore(%188 : memref<!tpu.dma_semaphore, #tpu.memory_space<semaphore_mem>>) src(%185 : memref<1x128xf32, #tpu.memory_space<any>>) dst(%186 : memref<1x128xf32, #tpu.memory_space<vmem>>)
    %c12_i32_140 = arith.constant 12 : i32
    %c0_i32_141 = arith.constant 0 : i32
    %c0_i32_142 = arith.constant 0 : i32
    %189 = tpu.memref_slice %arg2[%99, %c0_i32_141, %c0_i32_142] : memref<50x1x128xf32, #tpu.memory_space<any>> -> memref<1x1x128xf32, #tpu.memory_space<any>>
    %190 = tpu.memref_squeeze %189 : memref<1x1x128xf32, #tpu.memory_space<any>> -> memref<1x128xf32, #tpu.memory_space<any>>
    %c12_i32_143 = arith.constant 12 : i32
    %c0_i32_144 = arith.constant 0 : i32
    %191 = tpu.memref_slice %arg9[%c12_i32_143, %c0_i32_144] : memref<16x128xf32, #tpu.memory_space<vmem>> -> memref<1x128xf32, #tpu.memory_space<vmem>>
    %192 = tpu.memref_slice %arg10[%c12_i32_140] : memref<16x!tpu.dma_semaphore, #tpu.memory_space<semaphore_mem>> -> memref<1x!tpu.dma_semaphore, #tpu.memory_space<semaphore_mem>>
    %193 = tpu.memref_squeeze %192 : memref<1x!tpu.dma_semaphore, #tpu.memory_space<semaphore_mem>> -> memref<!tpu.dma_semaphore, #tpu.memory_space<semaphore_mem>>
    tpu.wait_dma2 semaphore(%193 : memref<!tpu.dma_semaphore, #tpu.memory_space<semaphore_mem>>) src(%190 : memref<1x128xf32, #tpu.memory_space<any>>) dst(%191 : memref<1x128xf32, #tpu.memory_space<vmem>>)
    %c13_i32_145 = arith.constant 13 : i32
    %c0_i32_146 = arith.constant 0 : i32
    %c0_i32_147 = arith.constant 0 : i32
    %194 = tpu.memref_slice %arg2[%107, %c0_i32_146, %c0_i32_147] : memref<50x1x128xf32, #tpu.memory_space<any>> -> memref<1x1x128xf32, #tpu.memory_space<any>>
    %195 = tpu.memref_squeeze %194 : memref<1x1x128xf32, #tpu.memory_space<any>> -> memref<1x128xf32, #tpu.memory_space<any>>
    %c13_i32_148 = arith.constant 13 : i32
    %c0_i32_149 = arith.constant 0 : i32
    %196 = tpu.memref_slice %arg9[%c13_i32_148, %c0_i32_149] : memref<16x128xf32, #tpu.memory_space<vmem>> -> memref<1x128xf32, #tpu.memory_space<vmem>>
    %197 = tpu.memref_slice %arg10[%c13_i32_145] : memref<16x!tpu.dma_semaphore, #tpu.memory_space<semaphore_mem>> -> memref<1x!tpu.dma_semaphore, #tpu.memory_space<semaphore_mem>>
    %198 = tpu.memref_squeeze %197 : memref<1x!tpu.dma_semaphore, #tpu.memory_space<semaphore_mem>> -> memref<!tpu.dma_semaphore, #tpu.memory_space<semaphore_mem>>
    tpu.wait_dma2 semaphore(%198 : memref<!tpu.dma_semaphore, #tpu.memory_space<semaphore_mem>>) src(%195 : memref<1x128xf32, #tpu.memory_space<any>>) dst(%196 : memref<1x128xf32, #tpu.memory_space<vmem>>)
    %c14_i32_150 = arith.constant 14 : i32
    %c0_i32_151 = arith.constant 0 : i32
    %c0_i32_152 = arith.constant 0 : i32
    %199 = tpu.memref_slice %arg2[%115, %c0_i32_151, %c0_i32_152] : memref<50x1x128xf32, #tpu.memory_space<any>> -> memref<1x1x128xf32, #tpu.memory_space<any>>
    %200 = tpu.memref_squeeze %199 : memref<1x1x128xf32, #tpu.memory_space<any>> -> memref<1x128xf32, #tpu.memory_space<any>>
    %c14_i32_153 = arith.constant 14 : i32
    %c0_i32_154 = arith.constant 0 : i32
    %201 = tpu.memref_slice %arg9[%c14_i32_153, %c0_i32_154] : memref<16x128xf32, #tpu.memory_space<vmem>> -> memref<1x128xf32, #tpu.memory_space<vmem>>
    %202 = tpu.memref_slice %arg10[%c14_i32_150] : memref<16x!tpu.dma_semaphore, #tpu.memory_space<semaphore_mem>> -> memref<1x!tpu.dma_semaphore, #tpu.memory_space<semaphore_mem>>
    %203 = tpu.memref_squeeze %202 : memref<1x!tpu.dma_semaphore, #tpu.memory_space<semaphore_mem>> -> memref<!tpu.dma_semaphore, #tpu.memory_space<semaphore_mem>>
    tpu.wait_dma2 semaphore(%203 : memref<!tpu.dma_semaphore, #tpu.memory_space<semaphore_mem>>) src(%200 : memref<1x128xf32, #tpu.memory_space<any>>) dst(%201 : memref<1x128xf32, #tpu.memory_space<vmem>>)
    %c15_i32_155 = arith.constant 15 : i32
    %c0_i32_156 = arith.constant 0 : i32
    %c0_i32_157 = arith.constant 0 : i32
    %204 = tpu.memref_slice %arg2[%123, %c0_i32_156, %c0_i32_157] : memref<50x1x128xf32, #tpu.memory_space<any>> -> memref<1x1x128xf32, #tpu.memory_space<any>>
    %205 = tpu.memref_squeeze %204 : memref<1x1x128xf32, #tpu.memory_space<any>> -> memref<1x128xf32, #tpu.memory_space<any>>
    %c15_i32_158 = arith.constant 15 : i32
    %c0_i32_159 = arith.constant 0 : i32
    %206 = tpu.memref_slice %arg9[%c15_i32_158, %c0_i32_159] : memref<16x128xf32, #tpu.memory_space<vmem>> -> memref<1x128xf32, #tpu.memory_space<vmem>>
    %207 = tpu.memref_slice %arg10[%c15_i32_155] : memref<16x!tpu.dma_semaphore, #tpu.memory_space<semaphore_mem>> -> memref<1x!tpu.dma_semaphore, #tpu.memory_space<semaphore_mem>>
    %208 = tpu.memref_squeeze %207 : memref<1x!tpu.dma_semaphore, #tpu.memory_space<semaphore_mem>> -> memref<!tpu.dma_semaphore, #tpu.memory_space<semaphore_mem>>
    tpu.wait_dma2 semaphore(%208 : memref<!tpu.dma_semaphore, #tpu.memory_space<semaphore_mem>>) src(%205 : memref<1x128xf32, #tpu.memory_space<any>>) dst(%206 : memref<1x128xf32, #tpu.memory_space<vmem>>)
    %c0 = arith.constant 0 : index
    %c0_160 = arith.constant 0 : index
    %209 = vector.load %arg9[%c0, %c0_160] : memref<16x128xf32, #tpu.memory_space<vmem>>, vector<16x128xf32>
    %210 = arith.truncf %209 : vector<16x128xf32> to vector<16x128xbf16>
    %c0_161 = arith.constant 0 : index
    %c0_162 = arith.constant 0 : index
    %211 = vector.load %arg3[%c0_161, %c0_162] : memref<128x512xbf16, #tpu.memory_space<vmem>>, vector<128x512xbf16>
    %cst = arith.constant dense<0.000000e+00> : vector<16x512xf32>
    %212 = tpu.matmul %210, %211, %cst {dimension_numbers = #tpu.dot_dimension_numbers<[1], [0], [0], [1], [0, 0, 1, 1], [], []>} : vector<16x128xbf16>, vector<128x512xbf16>, vector<16x512xf32> -> vector<16x512xf32>
    %c0_163 = arith.constant 0 : index
    %c0_164 = arith.constant 0 : index
    %213 = vector.load %arg5[%c0_163, %c0_164] : memref<1x512xf32, #tpu.memory_space<vmem>>, vector<1x512xf32>
    %214 = vector.broadcast %213 : vector<1x512xf32> to vector<16x512xf32>
    %215 = arith.addf %212, %214 : vector<16x512xf32>
    %c0_165 = arith.constant 0 : index
    %c0_166 = arith.constant 0 : index
    %216 = vector.load %arg7[%c0_165, %c0_166] : memref<16x512xf32, #tpu.memory_space<vmem>>, vector<16x512xf32>
    tpu.vector_store %arg7[%c0_165, %c0_166], %215 {strides = array<i32>} : memref<16x512xf32, #tpu.memory_space<vmem>>, vector<16x512xf32>,
    %c0_167 = arith.constant 0 : index
    %c0_168 = arith.constant 0 : index
    %217 = vector.load %arg4[%c0_167, %c0_168] : memref<128x512xbf16, #tpu.memory_space<vmem>>, vector<128x512xbf16>
    %cst_169 = arith.constant dense<0.000000e+00> : vector<16x512xf32>
    %218 = tpu.matmul %210, %217, %cst_169 {dimension_numbers = #tpu.dot_dimension_numbers<[1], [0], [0], [1], [0, 0, 1, 1], [], []>} : vector<16x128xbf16>, vector<128x512xbf16>, vector<16x512xf32> -> vector<16x512xf32>
    %c0_170 = arith.constant 0 : index
    %c0_171 = arith.constant 0 : index
    %219 = vector.load %arg6[%c0_170, %c0_171] : memref<1x512xf32, #tpu.memory_space<vmem>>, vector<1x512xf32>
    %220 = vector.broadcast %219 : vector<1x512xf32> to vector<16x512xf32>
    %221 = arith.addf %218, %220 : vector<16x512xf32>
    %c0_172 = arith.constant 0 : index
    %c0_173 = arith.constant 0 : index
    %222 = vector.load %arg8[%c0_172, %c0_173] : memref<16x512xf32, #tpu.memory_space<vmem>>, vector<16x512xf32>
    tpu.vector_store %arg8[%c0_172, %c0_173], %221 {strides = array<i32>} : memref<16x512xf32, #tpu.memory_space<vmem>>, vector<16x512xf32>,
    return
  }
  func.func @transform_1(%arg0: i32, %arg1: memref<128xi32, #tpu.memory_space<smem>>) -> (i32, i32) {
    %c0_i32 = arith.constant 0 : i32
    %c0_i32_0 = arith.constant 0 : i32
    %c0_i32_1 = arith.constant 0 : i32
    return %c0_i32, %c0_i32_0 : i32, i32
  }
  func.func @transform_2(%arg0: i32, %arg1: memref<128xi32, #tpu.memory_space<smem>>) -> (i32, i32) {
    %c0_i32 = arith.constant 0 : i32
    %c0_i32_0 = arith.constant 0 : i32
    %c0_i32_1 = arith.constant 0 : i32
    return %c0_i32, %c0_i32_0 : i32, i32
  }
  func.func @transform_3(%arg0: i32, %arg1: memref<128xi32, #tpu.memory_space<smem>>) -> (i32, i32) {
    %c0_i32 = arith.constant 0 : i32
    %c0_i32_0 = arith.constant 0 : i32
    %c0_i32_1 = arith.constant 0 : i32
    return %c0_i32, %c0_i32_0 : i32, i32
  }
  func.func @transform_4(%arg0: i32, %arg1: memref<128xi32, #tpu.memory_space<smem>>) -> (i32, i32) {
    %c0_i32 = arith.constant 0 : i32
    %c0_i32_0 = arith.constant 0 : i32
    %c0_i32_1 = arith.constant 0 : i32
    return %c0_i32, %c0_i32_0 : i32, i32
  }
  func.func @transform_5(%arg0: i32, %arg1: memref<128xi32, #tpu.memory_space<smem>>) -> (i32, i32) {
    %c0_i32 = arith.constant 0 : i32
    %c0_i32_0 = arith.constant 0 : i32
    return %arg0, %c0_i32 : i32, i32
  }
  func.func @transform_6(%arg0: i32, %arg1: memref<128xi32, #tpu.memory_space<smem>>) -> (i32, i32) {
    %c7_i32 = arith.constant 7 : i32
    %0 = arith.subi %c7_i32, %arg0 : i32
    %c0_i32 = arith.constant 0 : i32
    %c0_i32_0 = arith.constant 0 : i32
    return %0, %c0_i32 : i32, i32
  }
}

module attributes {stable_mosaic.version = 11 : i64} {
  func.func @bilstm_maxpool_kernel(%arg0: i32, %arg1: i32, %arg2: memref<8x1xi32, #tpu.memory_space<vmem>>, %arg3: memref<8x512xf32, #tpu.memory_space<vmem>>, %arg4: memref<8x512xf32, #tpu.memory_space<vmem>>, %arg5: memref<128x512xbf16, #tpu.memory_space<vmem>>, %arg6: memref<128x512xbf16, #tpu.memory_space<vmem>>, %arg7: memref<8x256xf32, #tpu.memory_space<vmem>>, %arg8: memref<8x128xf32, #tpu.memory_space<vmem>>, %arg9: memref<8x128xf32, #tpu.memory_space<vmem>>, %arg10: memref<8x128xf32, #tpu.memory_space<vmem>>, %arg11: memref<8x128xf32, #tpu.memory_space<vmem>>, %arg12: memref<8x128xf32, #tpu.memory_space<vmem>>, %arg13: memref<8x128xf32, #tpu.memory_space<vmem>>) attributes {dimension_semantics = [#tpu.dimension_semantics<parallel>, #tpu.dimension_semantics<arbitrary>], iteration_bounds = array<i64: 2, 8>, scalar_prefetch = 0 : i64, scratch_operands = 6 : i64, tpu.core_type = #tpu.core_type<tc>, window_params = [{transform_indices = @transform_0, window_bounds = array<i64: 8, 1>}, {transform_indices = @transform_1, window_bounds = array<i64: 8, 512>}, {transform_indices = @transform_2, window_bounds = array<i64: 8, 512>}, {pipeline_mode = #tpu.pipeline_mode<synchronous>, transform_indices = @transform_3, window_bounds = array<i64: 128, 512>}, {pipeline_mode = #tpu.pipeline_mode<synchronous>, transform_indices = @transform_4, window_bounds = array<i64: 128, 512>}, {transform_indices = @transform_5, window_bounds = array<i64: 8, 256>}]} {
    %c0_i32 = arith.constant 0 : i32
    %0 = arith.cmpi eq, %arg1, %c0_i32 : i32
    %1 = arith.extui %0 : i1 to i32
    %c0_i32_0 = arith.constant 0 : i32
    %2 = arith.cmpi ne, %1, %c0_i32_0 : i32
    scf.if %2 {
      %cst_53 = arith.constant 0.000000e+00 : f32
      %110 = vector.broadcast %cst_53 : f32 to vector<8x128xf32>
      %c0_54 = arith.constant 0 : index
      %c0_55 = arith.constant 0 : index
      %111 = vector.load %arg8[%c0_54, %c0_55] : memref<8x128xf32, #tpu.memory_space<vmem>>, vector<8x128xf32>
      tpu.vector_store %arg8[%c0_54, %c0_55], %110 {strides = array<i32>} : memref<8x128xf32, #tpu.memory_space<vmem>>, vector<8x128xf32>,
      %cst_56 = arith.constant 0.000000e+00 : f32
      %112 = vector.broadcast %cst_56 : f32 to vector<8x128xf32>
      %c0_57 = arith.constant 0 : index
      %c0_58 = arith.constant 0 : index
      %113 = vector.load %arg9[%c0_57, %c0_58] : memref<8x128xf32, #tpu.memory_space<vmem>>, vector<8x128xf32>
      tpu.vector_store %arg9[%c0_57, %c0_58], %112 {strides = array<i32>} : memref<8x128xf32, #tpu.memory_space<vmem>>, vector<8x128xf32>,
      %cst_59 = arith.constant 0.000000e+00 : f32
      %114 = vector.broadcast %cst_59 : f32 to vector<8x128xf32>
      %c0_60 = arith.constant 0 : index
      %c0_61 = arith.constant 0 : index
      %115 = vector.load %arg11[%c0_60, %c0_61] : memref<8x128xf32, #tpu.memory_space<vmem>>, vector<8x128xf32>
      tpu.vector_store %arg11[%c0_60, %c0_61], %114 {strides = array<i32>} : memref<8x128xf32, #tpu.memory_space<vmem>>, vector<8x128xf32>,
      %cst_62 = arith.constant 0.000000e+00 : f32
      %116 = vector.broadcast %cst_62 : f32 to vector<8x128xf32>
      %c0_63 = arith.constant 0 : index
      %c0_64 = arith.constant 0 : index
      %117 = vector.load %arg12[%c0_63, %c0_64] : memref<8x128xf32, #tpu.memory_space<vmem>>, vector<8x128xf32>
      tpu.vector_store %arg12[%c0_63, %c0_64], %116 {strides = array<i32>} : memref<8x128xf32, #tpu.memory_space<vmem>>, vector<8x128xf32>,
      %cst_65 = arith.constant 0xFF800000 : f32
      %118 = vector.broadcast %cst_65 : f32 to vector<8x128xf32>
      %c0_66 = arith.constant 0 : index
      %c0_67 = arith.constant 0 : index
      %119 = vector.load %arg10[%c0_66, %c0_67] : memref<8x128xf32, #tpu.memory_space<vmem>>, vector<8x128xf32>
      tpu.vector_store %arg10[%c0_66, %c0_67], %118 {strides = array<i32>} : memref<8x128xf32, #tpu.memory_space<vmem>>, vector<8x128xf32>,
      %cst_68 = arith.constant 0xFF800000 : f32
      %120 = vector.broadcast %cst_68 : f32 to vector<8x128xf32>
      %c0_69 = arith.constant 0 : index
      %c0_70 = arith.constant 0 : index
      %121 = vector.load %arg13[%c0_69, %c0_70] : memref<8x128xf32, #tpu.memory_space<vmem>>, vector<8x128xf32>
      tpu.vector_store %arg13[%c0_69, %c0_70], %120 {strides = array<i32>} : memref<8x128xf32, #tpu.memory_space<vmem>>, vector<8x128xf32>,
    } else {
    }
    %c0 = arith.constant 0 : index
    %c0_1 = arith.constant 0 : index
    %3 = vector.load %arg2[%c0, %c0_1] : memref<8x1xi32, #tpu.memory_space<vmem>>, vector<8x1xi32>
    %c0_2 = arith.constant 0 : index
    %c0_3 = arith.constant 0 : index
    %4 = vector.load %arg3[%c0_2, %c0_3] : memref<8x512xf32, #tpu.memory_space<vmem>>, vector<8x512xf32>
    %c0_4 = arith.constant 0 : index
    %c0_5 = arith.constant 0 : index
    %5 = vector.load %arg8[%c0_4, %c0_5] : memref<8x128xf32, #tpu.memory_space<vmem>>, vector<8x128xf32>
    %6 = arith.truncf %5 : vector<8x128xf32> to vector<8x128xbf16>
    %c0_6 = arith.constant 0 : index
    %c0_7 = arith.constant 0 : index
    %7 = vector.load %arg5[%c0_6, %c0_7] : memref<128x512xbf16, #tpu.memory_space<vmem>>, vector<128x512xbf16>
    %cst = arith.constant dense<0.000000e+00> : vector<8x512xf32>
    %8 = tpu.matmul %6, %7, %cst {dimension_numbers = #tpu.dot_dimension_numbers<[1], [0], [0], [1], [0, 0, 1, 1], [], []>} : vector<8x128xbf16>, vector<128x512xbf16>, vector<8x512xf32> -> vector<8x512xf32>
    %9 = arith.addf %4, %8 : vector<8x512xf32>
    %c0_8 = arith.constant 0 : index
    %c0_9 = arith.constant 0 : index
    %10 = vector.load %arg4[%c0_8, %c0_9] : memref<8x512xf32, #tpu.memory_space<vmem>>, vector<8x512xf32>
    %c0_10 = arith.constant 0 : index
    %c0_11 = arith.constant 0 : index
    %11 = vector.load %arg11[%c0_10, %c0_11] : memref<8x128xf32, #tpu.memory_space<vmem>>, vector<8x128xf32>
    %12 = arith.truncf %11 : vector<8x128xf32> to vector<8x128xbf16>
    %c0_12 = arith.constant 0 : index
    %c0_13 = arith.constant 0 : index
    %13 = vector.load %arg6[%c0_12, %c0_13] : memref<128x512xbf16, #tpu.memory_space<vmem>>, vector<128x512xbf16>
    %cst_14 = arith.constant dense<0.000000e+00> : vector<8x512xf32>
    %14 = tpu.matmul %12, %13, %cst_14 {dimension_numbers = #tpu.dot_dimension_numbers<[1], [0], [0], [1], [0, 0, 1, 1], [], []>} : vector<8x128xbf16>, vector<128x512xbf16>, vector<8x512xf32> -> vector<8x512xf32>
    %15 = arith.addf %10, %14 : vector<8x512xf32>
    %c0_15 = arith.constant 0 : index
    %c0_16 = arith.constant 0 : index
    %16 = vector.load %arg9[%c0_15, %c0_16] : memref<8x128xf32, #tpu.memory_space<vmem>>, vector<8x128xf32>
    %17 = vector.extract_strided_slice %9 {offsets = [0, 0], sizes = [8, 128], strides = [1, 1]} : vector<8x512xf32> to vector<8x128xf32>
    %18 = arith.negf %17 : vector<8x128xf32>
    %19 = math.exp %18 : vector<8x128xf32>
    %cst_17 = arith.constant 1.000000e+00 : f32
    %20 = vector.broadcast %cst_17 : f32 to vector<8x128xf32>
    %21 = arith.addf %20, %19 : vector<8x128xf32>
    %22 = arith.divf %20, %21 : vector<8x128xf32>
    %23 = vector.extract_strided_slice %9 {offsets = [0, 128], sizes = [8, 128], strides = [1, 1]} : vector<8x512xf32> to vector<8x128xf32>
    %24 = arith.negf %23 : vector<8x128xf32>
    %25 = math.exp %24 : vector<8x128xf32>
    %cst_18 = arith.constant 1.000000e+00 : f32
    %26 = vector.broadcast %cst_18 : f32 to vector<8x128xf32>
    %27 = arith.addf %26, %25 : vector<8x128xf32>
    %28 = arith.divf %26, %27 : vector<8x128xf32>
    %29 = vector.extract_strided_slice %9 {offsets = [0, 256], sizes = [8, 128], strides = [1, 1]} : vector<8x512xf32> to vector<8x128xf32>
    %30 = math.tanh %29 : vector<8x128xf32>
    %31 = vector.extract_strided_slice %9 {offsets = [0, 384], sizes = [8, 128], strides = [1, 1]} : vector<8x512xf32> to vector<8x128xf32>
    %32 = arith.negf %31 : vector<8x128xf32>
    %33 = math.exp %32 : vector<8x128xf32>
    %cst_19 = arith.constant 1.000000e+00 : f32
    %34 = vector.broadcast %cst_19 : f32 to vector<8x128xf32>
    %35 = arith.addf %34, %33 : vector<8x128xf32>
    %36 = arith.divf %34, %35 : vector<8x128xf32>
    %37 = arith.mulf %28, %16 : vector<8x128xf32>
    %38 = arith.mulf %22, %30 : vector<8x128xf32>
    %39 = arith.addf %37, %38 : vector<8x128xf32>
    %40 = math.tanh %39 : vector<8x128xf32>
    %41 = arith.mulf %36, %40 : vector<8x128xf32>
    %c0_20 = arith.constant 0 : index
    %c0_21 = arith.constant 0 : index
    %42 = vector.load %arg12[%c0_20, %c0_21] : memref<8x128xf32, #tpu.memory_space<vmem>>, vector<8x128xf32>
    %43 = vector.extract_strided_slice %15 {offsets = [0, 0], sizes = [8, 128], strides = [1, 1]} : vector<8x512xf32> to vector<8x128xf32>
    %44 = arith.negf %43 : vector<8x128xf32>
    %45 = math.exp %44 : vector<8x128xf32>
    %cst_22 = arith.constant 1.000000e+00 : f32
    %46 = vector.broadcast %cst_22 : f32 to vector<8x128xf32>
    %47 = arith.addf %46, %45 : vector<8x128xf32>
    %48 = arith.divf %46, %47 : vector<8x128xf32>
    %49 = vector.extract_strided_slice %15 {offsets = [0, 128], sizes = [8, 128], strides = [1, 1]} : vector<8x512xf32> to vector<8x128xf32>
    %50 = arith.negf %49 : vector<8x128xf32>
    %51 = math.exp %50 : vector<8x128xf32>
    %cst_23 = arith.constant 1.000000e+00 : f32
    %52 = vector.broadcast %cst_23 : f32 to vector<8x128xf32>
    %53 = arith.addf %52, %51 : vector<8x128xf32>
    %54 = arith.divf %52, %53 : vector<8x128xf32>
    %55 = vector.extract_strided_slice %15 {offsets = [0, 256], sizes = [8, 128], strides = [1, 1]} : vector<8x512xf32> to vector<8x128xf32>
    %56 = math.tanh %55 : vector<8x128xf32>
    %57 = vector.extract_strided_slice %15 {offsets = [0, 384], sizes = [8, 128], strides = [1, 1]} : vector<8x512xf32> to vector<8x128xf32>
    %58 = arith.negf %57 : vector<8x128xf32>
    %59 = math.exp %58 : vector<8x128xf32>
    %cst_24 = arith.constant 1.000000e+00 : f32
    %60 = vector.broadcast %cst_24 : f32 to vector<8x128xf32>
    %61 = arith.addf %60, %59 : vector<8x128xf32>
    %62 = arith.divf %60, %61 : vector<8x128xf32>
    %63 = arith.mulf %54, %42 : vector<8x128xf32>
    %64 = arith.mulf %48, %56 : vector<8x128xf32>
    %65 = arith.addf %63, %64 : vector<8x128xf32>
    %66 = math.tanh %65 : vector<8x128xf32>
    %67 = arith.mulf %62, %66 : vector<8x128xf32>
    %68 = vector.broadcast %arg1 : i32 to vector<8x1xi32>
    %69 = arith.cmpi slt, %68, %3 : vector<8x1xi32>
    %c7_i32 = arith.constant 7 : i32
    %70 = arith.subi %c7_i32, %arg1 : i32
    %71 = vector.broadcast %70 : i32 to vector<8x1xi32>
    %72 = arith.cmpi slt, %71, %3 : vector<8x1xi32>
    %c0_25 = arith.constant 0 : index
    %c0_26 = arith.constant 0 : index
    %73 = vector.load %arg8[%c0_25, %c0_26] : memref<8x128xf32, #tpu.memory_space<vmem>>, vector<8x128xf32>
    %74 = vector.shape_cast %69 : vector<8x1xi1> to vector<8x1xi1>
    %75 = vector.broadcast %74 : vector<8x1xi1> to vector<8x128xi1>
    %76 = arith.select %75, %41, %73 : vector<8x128xi1>, vector<8x128xf32>
    %c0_27 = arith.constant 0 : index
    %c0_28 = arith.constant 0 : index
    %77 = vector.load %arg8[%c0_27, %c0_28] : memref<8x128xf32, #tpu.memory_space<vmem>>, vector<8x128xf32>
    tpu.vector_store %arg8[%c0_27, %c0_28], %76 {strides = array<i32>} : memref<8x128xf32, #tpu.memory_space<vmem>>, vector<8x128xf32>,
    %c0_29 = arith.constant 0 : index
    %c0_30 = arith.constant 0 : index
    %78 = vector.load %arg9[%c0_29, %c0_30] : memref<8x128xf32, #tpu.memory_space<vmem>>, vector<8x128xf32>
    %79 = vector.shape_cast %69 : vector<8x1xi1> to vector<8x1xi1>
    %80 = vector.broadcast %79 : vector<8x1xi1> to vector<8x128xi1>
    %81 = arith.select %80, %39, %78 : vector<8x128xi1>, vector<8x128xf32>
    %c0_31 = arith.constant 0 : index
    %c0_32 = arith.constant 0 : index
    %82 = vector.load %arg9[%c0_31, %c0_32] : memref<8x128xf32, #tpu.memory_space<vmem>>, vector<8x128xf32>
    tpu.vector_store %arg9[%c0_31, %c0_32], %81 {strides = array<i32>} : memref<8x128xf32, #tpu.memory_space<vmem>>, vector<8x128xf32>,
    %c0_33 = arith.constant 0 : index
    %c0_34 = arith.constant 0 : index
    %83 = vector.load %arg10[%c0_33, %c0_34] : memref<8x128xf32, #tpu.memory_space<vmem>>, vector<8x128xf32>
    %cst_35 = arith.constant 0.000000e+00 : f32
    %84 = vector.shape_cast %69 : vector<8x1xi1> to vector<8x1xi1>
    %85 = vector.broadcast %84 : vector<8x1xi1> to vector<8x128xi1>
    %86 = vector.broadcast %cst_35 : f32 to vector<8x128xf32>
    %87 = arith.select %85, %41, %86 : vector<8x128xi1>, vector<8x128xf32>
    %88 = arith.maximumf %83, %87 : vector<8x128xf32>
    %c0_36 = arith.constant 0 : index
    %c0_37 = arith.constant 0 : index
    %89 = vector.load %arg10[%c0_36, %c0_37] : memref<8x128xf32, #tpu.memory_space<vmem>>, vector<8x128xf32>
    tpu.vector_store %arg10[%c0_36, %c0_37], %88 {strides = array<i32>} : memref<8x128xf32, #tpu.memory_space<vmem>>, vector<8x128xf32>,
    %c0_38 = arith.constant 0 : index
    %c0_39 = arith.constant 0 : index
    %90 = vector.load %arg11[%c0_38, %c0_39] : memref<8x128xf32, #tpu.memory_space<vmem>>, vector<8x128xf32>
    %91 = vector.shape_cast %72 : vector<8x1xi1> to vector<8x1xi1>
    %92 = vector.broadcast %91 : vector<8x1xi1> to vector<8x128xi1>
    %93 = arith.select %92, %67, %90 : vector<8x128xi1>, vector<8x128xf32>
    %c0_40 = arith.constant 0 : index
    %c0_41 = arith.constant 0 : index
    %94 = vector.load %arg11[%c0_40, %c0_41] : memref<8x128xf32, #tpu.memory_space<vmem>>, vector<8x128xf32>
    tpu.vector_store %arg11[%c0_40, %c0_41], %93 {strides = array<i32>} : memref<8x128xf32, #tpu.memory_space<vmem>>, vector<8x128xf32>,
    %c0_42 = arith.constant 0 : index
    %c0_43 = arith.constant 0 : index
    %95 = vector.load %arg12[%c0_42, %c0_43] : memref<8x128xf32, #tpu.memory_space<vmem>>, vector<8x128xf32>
    %96 = vector.shape_cast %72 : vector<8x1xi1> to vector<8x1xi1>
    %97 = vector.broadcast %96 : vector<8x1xi1> to vector<8x128xi1>
    %98 = arith.select %97, %65, %95 : vector<8x128xi1>, vector<8x128xf32>
    %c0_44 = arith.constant 0 : index
    %c0_45 = arith.constant 0 : index
    %99 = vector.load %arg12[%c0_44, %c0_45] : memref<8x128xf32, #tpu.memory_space<vmem>>, vector<8x128xf32>
    tpu.vector_store %arg12[%c0_44, %c0_45], %98 {strides = array<i32>} : memref<8x128xf32, #tpu.memory_space<vmem>>, vector<8x128xf32>,
    %c0_46 = arith.constant 0 : index
    %c0_47 = arith.constant 0 : index
    %100 = vector.load %arg13[%c0_46, %c0_47] : memref<8x128xf32, #tpu.memory_space<vmem>>, vector<8x128xf32>
    %cst_48 = arith.constant 0.000000e+00 : f32
    %101 = vector.shape_cast %72 : vector<8x1xi1> to vector<8x1xi1>
    %102 = vector.broadcast %101 : vector<8x1xi1> to vector<8x128xi1>
    %103 = vector.broadcast %cst_48 : f32 to vector<8x128xf32>
    %104 = arith.select %102, %67, %103 : vector<8x128xi1>, vector<8x128xf32>
    %105 = arith.maximumf %100, %104 : vector<8x128xf32>
    %c0_49 = arith.constant 0 : index
    %c0_50 = arith.constant 0 : index
    %106 = vector.load %arg13[%c0_49, %c0_50] : memref<8x128xf32, #tpu.memory_space<vmem>>, vector<8x128xf32>
    tpu.vector_store %arg13[%c0_49, %c0_50], %105 {strides = array<i32>} : memref<8x128xf32, #tpu.memory_space<vmem>>, vector<8x128xf32>,
    %c7_i32_51 = arith.constant 7 : i32
    %107 = arith.cmpi eq, %arg1, %c7_i32_51 : i32
    %108 = arith.extui %107 : i1 to i32
    %c0_i32_52 = arith.constant 0 : i32
    %109 = arith.cmpi ne, %108, %c0_i32_52 : i32
    scf.if %109 {
      %c0_53 = arith.constant 0 : index
      %c0_54 = arith.constant 0 : index
      %110 = vector.load %arg10[%c0_53, %c0_54] : memref<8x128xf32, #tpu.memory_space<vmem>>, vector<8x128xf32>
      %c0_55 = arith.constant 0 : index
      %c0_56 = arith.constant 0 : index
      %111 = vector.load %arg7[%c0_55, %c0_56] : memref<8x256xf32, #tpu.memory_space<vmem>>, vector<8x128xf32>
      tpu.vector_store %arg7[%c0_55, %c0_56], %110 {strides = array<i32>} : memref<8x256xf32, #tpu.memory_space<vmem>>, vector<8x128xf32>,
      %c0_57 = arith.constant 0 : index
      %c0_58 = arith.constant 0 : index
      %112 = vector.load %arg13[%c0_57, %c0_58] : memref<8x128xf32, #tpu.memory_space<vmem>>, vector<8x128xf32>
      %c0_59 = arith.constant 0 : index
      %c128 = arith.constant 128 : index
      %113 = vector.load %arg7[%c0_59, %c128] : memref<8x256xf32, #tpu.memory_space<vmem>>, vector<8x128xf32>
      tpu.vector_store %arg7[%c0_59, %c128], %112 {strides = array<i32>} : memref<8x256xf32, #tpu.memory_space<vmem>>, vector<8x128xf32>,
    } else {
    }
    return
  }
  func.func @transform_0(%arg0: i32, %arg1: i32) -> (i32, i32) {
    %c0_i32 = arith.constant 0 : i32
    %c0_i32_0 = arith.constant 0 : i32
    return %arg0, %c0_i32 : i32, i32
  }
  func.func @transform_1(%arg0: i32, %arg1: i32) -> (i32, i32) {
    %c2_i32 = arith.constant 2 : i32
    %0 = arith.muli %arg1, %c2_i32 : i32
    %1 = arith.addi %0, %arg0 : i32
    %c0_i32 = arith.constant 0 : i32
    %c0_i32_0 = arith.constant 0 : i32
    return %1, %c0_i32 : i32, i32
  }
  func.func @transform_2(%arg0: i32, %arg1: i32) -> (i32, i32) {
    %c2_i32 = arith.constant 2 : i32
    %0 = arith.muli %arg1, %c2_i32 : i32
    %1 = arith.addi %0, %arg0 : i32
    %c0_i32 = arith.constant 0 : i32
    %c0_i32_0 = arith.constant 0 : i32
    return %1, %c0_i32 : i32, i32
  }
  func.func @transform_3(%arg0: i32, %arg1: i32) -> (i32, i32) {
    %c0_i32 = arith.constant 0 : i32
    %c0_i32_0 = arith.constant 0 : i32
    %c0_i32_1 = arith.constant 0 : i32
    return %c0_i32, %c0_i32_0 : i32, i32
  }
  func.func @transform_4(%arg0: i32, %arg1: i32) -> (i32, i32) {
    %c0_i32 = arith.constant 0 : i32
    %c0_i32_0 = arith.constant 0 : i32
    %c0_i32_1 = arith.constant 0 : i32
    return %c0_i32, %c0_i32_0 : i32, i32
  }
  func.func @transform_5(%arg0: i32, %arg1: i32) -> (i32, i32) {
    %c0_i32 = arith.constant 0 : i32
    %c0_i32_0 = arith.constant 0 : i32
    return %arg0, %c0_i32 : i32, i32
  }
}

module attributes {stable_mosaic.version = 11 : i64} {
  func.func @classifier_kernel(%arg0: memref<16x256xf32, #tpu.memory_space<vmem>>, %arg1: memref<256x128xbf16, #tpu.memory_space<vmem>>, %arg2: memref<256x128xbf16, #tpu.memory_space<vmem>>, %arg3: memref<256x128xbf16, #tpu.memory_space<vmem>>, %arg4: memref<256x128xbf16, #tpu.memory_space<vmem>>, %arg5: memref<1x128xf32, #tpu.memory_space<vmem>>, %arg6: memref<128x128xbf16, #tpu.memory_space<vmem>>, %arg7: memref<1x128xf32, #tpu.memory_space<vmem>>, %arg8: memref<128x3xbf16, #tpu.memory_space<vmem>>, %arg9: memref<1x3xf32, #tpu.memory_space<vmem>>, %arg10: memref<8x3xf32, #tpu.memory_space<vmem>>) attributes {dimension_semantics = [], scalar_prefetch = 0 : i64, scratch_operands = 0 : i64, tpu.core_type = #tpu.core_type<tc>} {
    %c0 = arith.constant 0 : index
    %c0_0 = arith.constant 0 : index
    %0 = vector.load %arg0[%c0, %c0_0] : memref<16x256xf32, #tpu.memory_space<vmem>>, vector<8x256xf32>
    %c8 = arith.constant 8 : index
    %c0_1 = arith.constant 0 : index
    %1 = vector.load %arg0[%c8, %c0_1] : memref<16x256xf32, #tpu.memory_space<vmem>>, vector<8x256xf32>
    %2 = arith.truncf %0 : vector<8x256xf32> to vector<8x256xbf16>
    %c0_2 = arith.constant 0 : index
    %c0_3 = arith.constant 0 : index
    %3 = vector.load %arg1[%c0_2, %c0_3] : memref<256x128xbf16, #tpu.memory_space<vmem>>, vector<256x128xbf16>
    %cst = arith.constant dense<0.000000e+00> : vector<8x128xf32>
    %4 = tpu.matmul %2, %3, %cst {dimension_numbers = #tpu.dot_dimension_numbers<[1], [0], [0], [1], [0, 0, 1, 1], [], []>} : vector<8x256xbf16>, vector<256x128xbf16>, vector<8x128xf32> -> vector<8x128xf32>
    %5 = arith.truncf %1 : vector<8x256xf32> to vector<8x256xbf16>
    %c0_4 = arith.constant 0 : index
    %c0_5 = arith.constant 0 : index
    %6 = vector.load %arg2[%c0_4, %c0_5] : memref<256x128xbf16, #tpu.memory_space<vmem>>, vector<256x128xbf16>
    %cst_6 = arith.constant dense<0.000000e+00> : vector<8x128xf32>
    %7 = tpu.matmul %5, %6, %cst_6 {dimension_numbers = #tpu.dot_dimension_numbers<[1], [0], [0], [1], [0, 0, 1, 1], [], []>} : vector<8x256xbf16>, vector<256x128xbf16>, vector<8x128xf32> -> vector<8x128xf32>
    %8 = arith.addf %4, %7 : vector<8x128xf32>
    %9 = arith.subf %0, %1 : vector<8x256xf32>
    %10 = math.absf %9 : vector<8x256xf32>
    %11 = arith.truncf %10 : vector<8x256xf32> to vector<8x256xbf16>
    %c0_7 = arith.constant 0 : index
    %c0_8 = arith.constant 0 : index
    %12 = vector.load %arg3[%c0_7, %c0_8] : memref<256x128xbf16, #tpu.memory_space<vmem>>, vector<256x128xbf16>
    %cst_9 = arith.constant dense<0.000000e+00> : vector<8x128xf32>
    %13 = tpu.matmul %11, %12, %cst_9 {dimension_numbers = #tpu.dot_dimension_numbers<[1], [0], [0], [1], [0, 0, 1, 1], [], []>} : vector<8x256xbf16>, vector<256x128xbf16>, vector<8x128xf32> -> vector<8x128xf32>
    %14 = arith.addf %8, %13 : vector<8x128xf32>
    %15 = arith.mulf %0, %1 : vector<8x256xf32>
    %16 = arith.truncf %15 : vector<8x256xf32> to vector<8x256xbf16>
    %c0_10 = arith.constant 0 : index
    %c0_11 = arith.constant 0 : index
    %17 = vector.load %arg4[%c0_10, %c0_11] : memref<256x128xbf16, #tpu.memory_space<vmem>>, vector<256x128xbf16>
    %cst_12 = arith.constant dense<0.000000e+00> : vector<8x128xf32>
    %18 = tpu.matmul %16, %17, %cst_12 {dimension_numbers = #tpu.dot_dimension_numbers<[1], [0], [0], [1], [0, 0, 1, 1], [], []>} : vector<8x256xbf16>, vector<256x128xbf16>, vector<8x128xf32> -> vector<8x128xf32>
    %19 = arith.addf %14, %18 : vector<8x128xf32>
    %c0_13 = arith.constant 0 : index
    %c0_14 = arith.constant 0 : index
    %20 = vector.load %arg5[%c0_13, %c0_14] : memref<1x128xf32, #tpu.memory_space<vmem>>, vector<1x128xf32>
    %21 = vector.broadcast %20 : vector<1x128xf32> to vector<8x128xf32>
    %22 = arith.addf %19, %21 : vector<8x128xf32>
    %23 = math.tanh %22 : vector<8x128xf32>
    %24 = arith.truncf %23 : vector<8x128xf32> to vector<8x128xbf16>
    %c0_15 = arith.constant 0 : index
    %c0_16 = arith.constant 0 : index
    %25 = vector.load %arg6[%c0_15, %c0_16] : memref<128x128xbf16, #tpu.memory_space<vmem>>, vector<128x128xbf16>
    %cst_17 = arith.constant dense<0.000000e+00> : vector<8x128xf32>
    %26 = tpu.matmul %24, %25, %cst_17 {dimension_numbers = #tpu.dot_dimension_numbers<[1], [0], [0], [1], [0, 0, 1, 1], [], []>} : vector<8x128xbf16>, vector<128x128xbf16>, vector<8x128xf32> -> vector<8x128xf32>
    %c0_18 = arith.constant 0 : index
    %c0_19 = arith.constant 0 : index
    %27 = vector.load %arg7[%c0_18, %c0_19] : memref<1x128xf32, #tpu.memory_space<vmem>>, vector<1x128xf32>
    %28 = vector.broadcast %27 : vector<1x128xf32> to vector<8x128xf32>
    %29 = arith.addf %26, %28 : vector<8x128xf32>
    %30 = math.tanh %29 : vector<8x128xf32>
    %31 = arith.truncf %30 : vector<8x128xf32> to vector<8x128xbf16>
    %c0_20 = arith.constant 0 : index
    %c0_21 = arith.constant 0 : index
    %32 = vector.load %arg8[%c0_20, %c0_21] : memref<128x3xbf16, #tpu.memory_space<vmem>>, vector<128x3xbf16>
    %cst_22 = arith.constant dense<0.000000e+00> : vector<8x3xf32>
    %33 = tpu.matmul %31, %32, %cst_22 {dimension_numbers = #tpu.dot_dimension_numbers<[1], [0], [0], [1], [0, 0, 1, 1], [], []>} : vector<8x128xbf16>, vector<128x3xbf16>, vector<8x3xf32> -> vector<8x3xf32>
    %c0_23 = arith.constant 0 : index
    %c0_24 = arith.constant 0 : index
    %34 = vector.load %arg9[%c0_23, %c0_24] : memref<1x3xf32, #tpu.memory_space<vmem>>, vector<1x3xf32>
    %35 = vector.broadcast %34 : vector<1x3xf32> to vector<8x3xf32>
    %36 = arith.addf %33, %35 : vector<8x3xf32>
    %c0_25 = arith.constant 0 : index
    %c0_26 = arith.constant 0 : index
    %37 = vector.load %arg10[%c0_25, %c0_26] : memref<8x3xf32, #tpu.memory_space<vmem>>, vector<8x3xf32>
    tpu.vector_store %arg10[%c0_25, %c0_26], %36 {strides = array<i32>} : memref<8x3xf32, #tpu.memory_space<vmem>>, vector<8x3xf32>,
    return
  }
}

</mosaic_0001>

<llo_original>
// kernel: infersent_forward.4
$region0: #{infersent_forward.4}
  #allocation0 [shape = 'u32[]', space=smem, size = 0x4, offset = 0x4, fixed_abs, tag = 'smem constant byte address 0x4 - core index']
  #allocation1 [shape = 'u32[144,128]{1,0:T(1,128)}', space=vmem, size = 0x12000, scoped, tag = 'internal scratch']
  #allocation2 [shape = 'f32[8,128]{1,0:T(8,128)}', space=vmem, size = 0x1000, scoped, tag = 'scratch operand']
  #allocation3 [shape = 'f32[8,128]{1,0:T(8,128)}', space=vmem, size = 0x1000, scoped, tag = 'scratch operand']
  #allocation4 [shape = 'f32[8,128]{1,0:T(8,128)}', space=vmem, size = 0x1000, scoped, tag = 'scratch operand']
  #allocation5 [shape = 'f32[8,128]{1,0:T(8,128)}', space=vmem, size = 0x1000, scoped, tag = 'scratch operand']
  #allocation6 [shape = 'f32[8,128]{1,0:T(8,128)}', space=vmem, size = 0x1000, scoped, tag = 'scratch operand']
  #allocation7 [shape = 'f32[8,128]{1,0:T(8,128)}', space=vmem, size = 0x1000, scoped, tag = 'scratch operand']
  %s0 = inlined_call_operand.vmem [shape: s32[16,1], index: 0, kind: input, shape index: {}]
  %s1 = inlined_call_operand.vmem [shape: f32[128,512], index: 1, kind: input, shape index: {}]
  %s2 = inlined_call_operand.vmem [shape: f32[128,512], index: 2, kind: input, shape index: {}]
  %s3 = inlined_call_operand.vmem [shape: bf16[128,512], index: 3, kind: input, shape index: {}]
  %s4 = inlined_call_operand.vmem [shape: bf16[128,512], index: 4, kind: input, shape index: {}]
  %s5 = inlined_call_operand.vmem [shape: f32[16,256], index: 5, kind: output, shape index: {}]
  %s6 = sld [smem:[#allocation0]]
  $region61: #{infersent_forward.4} parent=0
    _
  %s8 = ssub.s32 1, %s6
  %s9 = scalar_select 0, %s8, %s6
  loop: start=0, step=1, limit=18
  $region2: #{infersent_forward.4} parent=0 // loop_pre_header
    _
  $region3: #{infersent_forward.4} parent=0 // loop_header
    %s11 = sphi 0, %s15
    %p12 = scmp.ge.s32.totalorder %s11, 18
    %s18 = sphi 0, %s30
    %s19 = sphi 0, %s26
    %s20 = sphi 0, %s18
    %s21 = sphi 0, %s19
    %s22 = sphi 0, %s20
    %s23 = sphi 0, %s21
    %s33 = sphi 0, %s35
    %s36 = sphi 0, %s33
    %s37 = sphi 0, %s36
    %s53 = sphi 0, %s37
    %s63 = sphi 0, %s65
    %s66 = sphi 0, %s63
    %s67 = sphi 0, %s66
    %s83 = sphi 0, %s67
    %s93 = sphi 0, %s95
    %s96 = sphi 0, %s93
    %s97 = sphi 0, %s96
    %s113 = sphi 0, %s97
    %s117 = sphi 0, %s117
    %s119 = sphi 0, %s117
    %s120 = sphi 0, %s119
    %s134 = sphi 0, %s120
    %s138 = sphi 0, %s138
    %s140 = sphi 0, %s138
    %s141 = sphi 0, %s140
    %s155 = sphi 0, %s141
    %s161 = sphi 0, %s163
    %s164 = sphi 0, %s161
    %s165 = sphi 0, %s164
    %s181 = sphi 0, %s165
  $region4: #{infersent_forward.4} parent=0 // loop_header_branch
    %14 = sbr.rel (%p12) target = $region8
  $region5: #{infersent_forward.4} parent=0 // loop_body
    %s16 = ssub.s32 %s11, 1
    %s17 = ssub.s32 %s11, 2
    %s24 = sadd.s32 1, %s19
    %p25 = scmp.ge.s32.totalorder %s24, 8
    %s26 = scalar_select %p25, 0, %s24
    %s27 = sadd.s32 1, %s18
    %s28 = scalar_select %p25, %s27, %s18
    %p29 = scmp.ge.s32.totalorder %s28, 2
    %s30 = scalar_select %p29, 0, %s28
    %s31 = ssub.s32 %s18, %s30
    %p32 = scmp.eq.s32.totalorder %s31, 0
    %s34 = sadd.s32 %s33, 1
    %s35 = scalar_select %p32, %s33, %s34
    %p38 = pneg %p32
    %p39 = scmp.eq.s32.totalorder %s11, 15
    %p40 = por %p38, %p39
    %p41 = scmp.ne.s32.totalorder %s33, %s36
    %p42 = scmp.eq.s32.totalorder %s11, 0
    %p43 = por %p41, %p42
    %p44 = scmp.ne.s32.totalorder %s33, %s36
    %p45 = scmp.eq.s32.totalorder %s16, 15
    %p46 = por %p44, %p45
    %p47 = scmp.ne.s32.totalorder %s36, %s37
    %p48 = scmp.eq.s32.totalorder %s16, 0
    %p49 = por %p47, %p48
    %p50 = scmp.ne.s32.totalorder %s36, %s37
    %p51 = scmp.eq.s32.totalorder %s17, 15
    %p52 = por %p50, %p51
    %p54 = scmp.ne.s32.totalorder %s37, %s53
    %p55 = scmp.eq.s32.totalorder %s17, 0
    %p56 = por %p54, %p55
    %s57 = smul.u32 %s19, 2
    %s58 = sadd.s32 %s57, %s18
    %s59 = smul.u32 %s26, 2
    %s60 = sadd.s32 %s59, %s30
    %s61 = ssub.s32 %s58, %s60
    %p62 = scmp.eq.s32.totalorder %s61, 0
    %s64 = sadd.s32 %s63, 1
    %s65 = scalar_select %p62, %s63, %s64
    %p68 = pneg %p62
    %p69 = scmp.eq.s32.totalorder %s11, 15
    %p70 = por %p68, %p69
    %p71 = scmp.ne.s32.totalorder %s63, %s66
    %p72 = scmp.eq.s32.totalorder %s11, 0
    %p73 = por %p71, %p72
    %p74 = scmp.ne.s32.totalorder %s63, %s66
    %p75 = scmp.eq.s32.totalorder %s16, 15
    %p76 = por %p74, %p75
    %p77 = scmp.ne.s32.totalorder %s66, %s67
    %p78 = scmp.eq.s32.totalorder %s16, 0
    %p79 = por %p77, %p78
    %p80 = scmp.ne.s32.totalorder %s66, %s67
    %p81 = scmp.eq.s32.totalorder %s17, 15
    %p82 = por %p80, %p81
    %p84 = scmp.ne.s32.totalorder %s67, %s83
    %p85 = scmp.eq.s32.totalorder %s17, 0
    %p86 = por %p84, %p85
    %s87 = smul.u32 %s19, 2
    %s88 = sadd.s32 %s87, %s18
    %s89 = smul.u32 %s26, 2
    %s90 = sadd.s32 %s89, %s30
    %s91 = ssub.s32 %s88, %s90
    %p92 = scmp.eq.s32.totalorder %s91, 0
    %s94 = sadd.s32 %s93, 1
    %s95 = scalar_select %p92, %s93, %s94
    %p98 = pneg %p92
    %p99 = scmp.eq.s32.totalorder %s11, 15
    %p100 = por %p98, %p99
    %p101 = scmp.ne.s32.totalorder %s93, %s96
    %p102 = scmp.eq.s32.totalorder %s11, 0
    %p103 = por %p101, %p102
    %p104 = scmp.ne.s32.totalorder %s93, %s96
    %p105 = scmp.eq.s32.totalorder %s16, 15
    %p106 = por %p104, %p105
    %p107 = scmp.ne.s32.totalorder %s96, %s97
    %p108 = scmp.eq.s32.totalorder %s16, 0
    %p109 = por %p107, %p108
    %p110 = scmp.ne.s32.totalorder %s96, %s97
    %p111 = scmp.eq.s32.totalorder %s17, 15
    %p112 = por %p110, %p111
    %p114 = scmp.ne.s32.totalorder %s97, %s113
    %p115 = scmp.eq.s32.totalorder %s17, 0
    %p116 = por %p114, %p115
    %s118 = sadd.s32 %s117, 1
    %p121 = scmp.eq.s32.totalorder %s11, 15
    %p122 = scmp.ne.s32.totalorder %s117, %s119
    %p123 = scmp.eq.s32.totalorder %s11, 0
    %p124 = por %p122, %p123
    %p125 = scmp.ne.s32.totalorder %s117, %s119
    %p126 = scmp.eq.s32.totalorder %s16, 15
    %p127 = por %p125, %p126
    %p128 = scmp.ne.s32.totalorder %s119, %s120
    %p129 = scmp.eq.s32.totalorder %s16, 0
    %p130 = por %p128, %p129
    %p131 = scmp.ne.s32.totalorder %s119, %s120
    %p132 = scmp.eq.s32.totalorder %s17, 15
    %p133 = por %p131, %p132
    %p135 = scmp.ne.s32.totalorder %s120, %s134
    %p136 = scmp.eq.s32.totalorder %s17, 0
    %p137 = por %p135, %p136
    %s139 = sadd.s32 %s138, 1
    %p142 = scmp.eq.s32.totalorder %s11, 15
    %p143 = scmp.ne.s32.totalorder %s138, %s140
    %p144 = scmp.eq.s32.totalorder %s11, 0
    %p145 = por %p143, %p144
    %p146 = scmp.ne.s32.totalorder %s138, %s140
    %p147 = scmp.eq.s32.totalorder %s16, 15
    %p148 = por %p146, %p147
    %p149 = scmp.ne.s32.totalorder %s140, %s141
    %p150 = scmp.eq.s32.totalorder %s16, 0
    %p151 = por %p149, %p150
    %p152 = scmp.ne.s32.totalorder %s140, %s141
    %p153 = scmp.eq.s32.totalorder %s17, 15
    %p154 = por %p152, %p153
    %p156 = scmp.ne.s32.totalorder %s141, %s155
    %p157 = scmp.eq.s32.totalorder %s17, 0
    %p158 = por %p156, %p157
    %s159 = ssub.s32 %s18, %s30
    %p160 = scmp.eq.s32.totalorder %s159, 0
    %s162 = sadd.s32 %s161, 1
    %s163 = scalar_select %p160, %s161, %s162
    %p166 = pneg %p160
    %p167 = scmp.eq.s32.totalorder %s11, 15
    %p168 = por %p166, %p167
    %p169 = scmp.ne.s32.totalorder %s161, %s164
    %p170 = scmp.eq.s32.totalorder %s11, 0
    %p171 = por %p169, %p170
    %p172 = scmp.ne.s32.totalorder %s161, %s164
    %p173 = scmp.eq.s32.totalorder %s16, 15
    %p174 = por %p172, %p173
    %p175 = scmp.ne.s32.totalorder %s164, %s165
    %p176 = scmp.eq.s32.totalorder %s16, 0
    %p177 = por %p175, %p176
    %p178 = scmp.ne.s32.totalorder %s164, %s165
    %p179 = scmp.eq.s32.totalorder %s17, 15
    %p180 = por %p178, %p179
    %p182 = scmp.ne.s32.totalorder %s165, %s181
    %p183 = scmp.eq.s32.totalorder %s17, 0
    %p184 = por %p182, %p183
    %p185 = scmp.le.s32.totalorder 1, %s11
    %p186 = scmp.lt.s32.totalorder %s11, 17
    %p187 = pnand %p185, %p186
    %p188 = pneg %p187
    // Predicated region
    $region9: #{infersent_forward.4} parent=5 // pred_check
      _
    $region10: #{infersent_forward.4} parent=5 // pred_check_branch
      %190 = sbr.rel (%p187) target = $region12
    $region11: #{infersent_forward.4} parent=5 // pred_region
      %s191 = ssub.s32 %s11, 1
      // Predicated region
      $region13: #{infersent_forward.4} parent=11 // pred_check
        %p192 = pneg %p130
      $region14: #{infersent_forward.4} parent=11 // pred_check_branch
        %194 = sbr.rel (%p192) target = $region16
      $region15: #{infersent_forward.4} parent=11 // pred_region
        _
      $region16: #{infersent_forward.4} parent=11 // pred_fallthru
        _
      // Predicated region
      $region17: #{infersent_forward.4} parent=11 // pred_check
        %p195 = pneg %p151
      $region18: #{infersent_forward.4} parent=11 // pred_check_branch
        %197 = sbr.rel (%p195) target = $region20
      $region19: #{infersent_forward.4} parent=11 // pred_region
        _
      $region20: #{infersent_forward.4} parent=11 // pred_fallthru
        _
    $region12: #{infersent_forward.4} parent=5 // pred_fallthru
      _
    %p198 = scmp.lt.s32.totalorder %s11, 16
    // Predicated region
    $region21: #{infersent_forward.4} parent=5 // pred_check
      %p199 = pneg %p198
    $region22: #{infersent_forward.4} parent=5 // pred_check_branch
      %201 = sbr.rel (%p199) target = $region24
    $region23: #{infersent_forward.4} parent=5 // pred_region
      // Predicated region
      $region25: #{infersent_forward.4} parent=23 // pred_check
        %p202 = pneg %p43
      $region26: #{infersent_forward.4} parent=23 // pred_check_branch
        %204 = sbr.rel (%p202) target = $region28
      $region27: #{infersent_forward.4} parent=23 // pred_region
        %p205 = scmp.lt.s32.totalorder %s18, 1
        %s206 = scalar_select %p205, %s18, 1
        %s207 = smul.addr %s206, 8
        %s208 = scalar_lea.vmem %s0, %s207
      $region28: #{infersent_forward.4} parent=23 // pred_fallthru
        _
      // Predicated region
      $region29: #{infersent_forward.4} parent=23 // pred_check
        %p209 = pneg %p73
      $region30: #{infersent_forward.4} parent=23 // pred_check_branch
        %211 = sbr.rel (%p209) target = $region32
      $region31: #{infersent_forward.4} parent=23 // pred_region
        %s212 = smul.u32 %s19, 2
        %s213 = sadd.s32 %s212, %s18
        %p214 = scmp.lt.s32.totalorder %s213, 15
        %s215 = scalar_select %p214, %s213, 15
        %s216 = smul.addr %s215, 4
        %s217 = smul.addr %s216, 8
        %s218 = scalar_lea.vmem %s1, %s217
        %s219 = smul.u32 %s19, 2
        %s220 = sadd.s32 %s219, %s18
      $region32: #{infersent_forward.4} parent=23 // pred_fallthru
        _
      // Predicated region
      $region33: #{infersent_forward.4} parent=23 // pred_check
        %p221 = pneg %p103
      $region34: #{infersent_forward.4} parent=23 // pred_check_branch
        %223 = sbr.rel (%p221) target = $region36
      $region35: #{infersent_forward.4} parent=23 // pred_region
        %s224 = smul.u32 %s19, 2
        %s225 = sadd.s32 %s224, %s18
        %p226 = scmp.lt.s32.totalorder %s225, 15
        %s227 = scalar_select %p226, %s225, 15
        %s228 = smul.addr %s227, 4
        %s229 = smul.addr %s228, 8
        %s230 = scalar_lea.vmem %s2, %s229
        %s231 = smul.u32 %s19, 2
        %s232 = sadd.s32 %s231, %s18
      $region36: #{infersent_forward.4} parent=23 // pred_fallthru
        _
    $region24: #{infersent_forward.4} parent=5 // pred_fallthru
      _
    %p233 = scmp.le.s32.totalorder 1, %s11
    %p234 = scmp.lt.s32.totalorder %s11, 17
    %p235 = pnand %p233, %p234
    %p236 = pneg %p235
    // Predicated region
    $region37: #{infersent_forward.4} parent=5 // pred_check
      _
    $region38: #{infersent_forward.4} parent=5 // pred_check_branch
      %238 = sbr.rel (%p235) target = $region40
    $region39: #{infersent_forward.4} parent=5 // pred_region
      %s239 = ssub.s32 %s11, 1
      %p240 = scmp.lt.s32.totalorder %s20, 1
      %s241 = scalar_select %p240, %s20, 1
      %s242 = smul.addr %s241, 8
      %s243 = scalar_lea.vmem %s0, %s242
      %p244 = pneg %p49
      %p245 = pneg %p46
      %s246 = smul.u32 %s21, 2
      %s247 = sadd.s32 %s246, %s20
      %p248 = scmp.lt.s32.totalorder %s247, 15
      %s249 = scalar_select %p248, %s247, 15
      %s250 = smul.addr %s249, 4
      %s251 = smul.addr %s250, 8
      %s252 = scalar_lea.vmem %s1, %s251
      %p253 = pneg %p79
      %p254 = pneg %p76
      %s255 = smul.u32 %s21, 2
      %s256 = sadd.s32 %s255, %s20
      %p257 = scmp.lt.s32.totalorder %s256, 15
      %s258 = scalar_select %p257, %s256, 15
      %s259 = smul.addr %s258, 4
      %s260 = smul.addr %s259, 8
      %s261 = scalar_lea.vmem %s2, %s260
      %p262 = pneg %p109
      %p263 = pneg %p106
      %p264 = pneg %p130
      %p265 = pneg %p127
      %p266 = pneg %p151
      %p267 = pneg %p148
      %p268 = pneg %p177
      %p269 = pneg %p174
      %p270 = scmp.lt.s32.totalorder %s20, 1
      %s271 = scalar_select %p270, %s20, 1
      %s272 = smul.addr %s271, 2
      %s273 = smul.addr %s272, 8
      %s274 = scalar_lea.vmem %s5, %s273
      %p275 = scmp.lt.s32.totalorder %s20, 1
      %s276 = scalar_select %p275, %s20, 1
      %s277 = smul.addr %s276, 8
      %s278 = scalar_lea.vmem %s0, %s277
      %s279 = smul.u32 %s21, 2
      %s280 = sadd.s32 %s279, %s20
      %p281 = scmp.lt.s32.totalorder %s280, 15
      %s282 = scalar_select %p281, %s280, 15
      %s283 = smul.addr %s282, 4
      %s284 = smul.addr %s283, 8
      %s285 = scalar_lea.vmem %s1, %s284
      %s286 = smul.u32 %s21, 2
      %s287 = sadd.s32 %s286, %s20
      %s288 = smul.u32 %s21, 2
      %s289 = sadd.s32 %s288, %s20
      %p290 = scmp.lt.s32.totalorder %s289, 15
      %s291 = scalar_select %p290, %s289, 15
      %s292 = smul.addr %s291, 4
      %s293 = smul.addr %s292, 8
      %s294 = scalar_lea.vmem %s2, %s293
      %s295 = smul.u32 %s21, 2
      %s296 = sadd.s32 %s295, %s20
      %p297 = scmp.lt.s32.totalorder %s20, 1
      %s298 = scalar_select %p297, %s20, 1
      %s299 = smul.addr %s298, 2
      %s300 = smul.addr %s299, 8
      %s301 = scalar_lea.vmem %s5, %s300
      %p303 = scmp.eq.s32.totalorder %s21, 0
      // Predicated region
      $region41: #{infersent_forward.4} parent=39 // pred_check
        %p304 = pneg %p303
      $region42: #{infersent_forward.4} parent=39 // pred_check_branch
        %306 = sbr.rel (%p304) target = $region44
      $region43: #{infersent_forward.4} parent=39 // pred_region
        %307 = vst [vmem:[#allocation2] sm:$0xff] 0.0
        %308 = vst [vmem:[#allocation3] sm:$0xff] 0.0
        %309 = vst [vmem:[#allocation5] sm:$0xff] 0.0
        %310 = vst [vmem:[#allocation6] sm:$0xff] 0.0
        %311 = vst [vmem:[#allocation4] sm:$0xff] -inf
        %312 = vst [vmem:[#allocation7] sm:$0xff] -inf
      $region44: #{infersent_forward.4} parent=39 // pred_fallthru
        _
      %v313 = vld [vmem:[%s278] sm:$0xff]
      %v314 = vld [vmem:[%s285] sm:$0xff]
      %v315 = vld [vmem:[%s285 + $0x8] sm:$0xff]
      %v316 = vld [vmem:[%s285 + $0x10] sm:$0xff]
      %v317 = vld [vmem:[%s285 + $0x18] sm:$0xff]
      %v318 = vld [vmem:[#allocation2] sm:$0xff]
      %v319 = vpack.c.bf16 %v318, %v318
      %v320 = vld [vmem:[%s3] sm:$0xff]
      %v321 = vld [vmem:[%s3 + $0x8] sm:$0xff]
      %v322 = vld [vmem:[%s3 + $0x10] sm:$0xff]
      %v323 = vld [vmem:[%s3 + $0x18] sm:$0xff]
      %v324 = vld [vmem:[%s3 + $0x20] sm:$0xff]
      %v325 = vld [vmem:[%s3 + $0x28] sm:$0xff]
      %v326 = vld [vmem:[%s3 + $0x30] sm:$0xff]
      %v327 = vld [vmem:[%s3 + $0x38] sm:$0xff]
      %v328 = vld [vmem:[%s3 + $0x40] sm:$0xff]
      %v329 = vld [vmem:[%s3 + $0x48] sm:$0xff]
      %v330 = vld [vmem:[%s3 + $0x50] sm:$0xff]
      %v331 = vld [vmem:[%s3 + $0x58] sm:$0xff]
      %v332 = vld [vmem:[%s3 + $0x60] sm:$0xff]
      %v333 = vld [vmem:[%s3 + $0x68] sm:$0xff]
      %v334 = vld [vmem:[%s3 + $0x70] sm:$0xff]
      %v335 = vld [vmem:[%s3 + $0x78] sm:$0xff]
      %v336 = vld [vmem:[%s3 + $0x80] sm:$0xff]
      %v337 = vld [vmem:[%s3 + $0x88] sm:$0xff]
      %v338 = vld [vmem:[%s3 + $0x90] sm:$0xff]
      %v339 = vld [vmem:[%s3 + $0x98] sm:$0xff]
      %v340 = vld [vmem:[%s3 + $0xa0] sm:$0xff]
      %v341 = vld [vmem:[%s3 + $0xa8] sm:$0xff]
      %v342 = vld [vmem:[%s3 + $0xb0] sm:$0xff]
      %v343 = vld [vmem:[%s3 + $0xb8] sm:$0xff]
      %v344 = vld [vmem:[%s3 + $0xc0] sm:$0xff]
      %v345 = vld [vmem:[%s3 + $0xc8] sm:$0xff]
      %v346 = vld [vmem:[%s3 + $0xd0] sm:$0xff]
      %v347 = vld [vmem:[%s3 + $0xd8] sm:$0xff]
      %v348 = vld [vmem:[%s3 + $0xe0] sm:$0xff]
      %v349 = vld [vmem:[%s3 + $0xe8] sm:$0xff]
      %v350 = vld [vmem:[%s3 + $0xf0] sm:$0xff]
      %v351 = vld [vmem:[%s3 + $0xf8] sm:$0xff]
      %v384 = vunpack.c.l.b16 %v320
      %v385 = vunpack.c.h.b16 %v320
      %v386 = vunpack.c.l.b16 %v321
      %v387 = vunpack.c.h.b16 %v321
      %v388 = vunpack.c.l.b16 %v322
      %v389 = vunpack.c.h.b16 %v322
      %v390 = vunpack.c.l.b16 %v323
      %v391 = vunpack.c.h.b16 %v323
      %v392 = vunpack.c.l.b16 %v324
      %v393 = vunpack.c.h.b16 %v324
      %v394 = vunpack.c.l.b16 %v325
      %v395 = vunpack.c.h.b16 %v325
      %v396 = vunpack.c.l.b16 %v326
      %v397 = vunpack.c.h.b16 %v326
      %v398 = vunpack.c.l.b16 %v327
      %v399 = vunpack.c.h.b16 %v327
      %v400 = vunpack.c.l.b16 %v328
      %v401 = vunpack.c.h.b16 %v328
      %v402 = vunpack.c.l.b16 %v329
      %v403 = vunpack.c.h.b16 %v329
      %v404 = vunpack.c.l.b16 %v330
      %v405 = vunpack.c.h.b16 %v330
      %v406 = vunpack.c.l.b16 %v331
      %v407 = vunpack.c.h.b16 %v331
      %v408 = vunpack.c.l.b16 %v332
      %v409 = vunpack.c.h.b16 %v332
      %v410 = vunpack.c.l.b16 %v333
      %v411 = vunpack.c.h.b16 %v333
      %v412 = vunpack.c.l.b16 %v334
      %v413 = vunpack.c.h.b16 %v334
      %v414 = vunpack.c.l.b16 %v335
      %v415 = vunpack.c.h.b16 %v335
      %v416 = vunpack.c.l.b16 %v336
      %v417 = vunpack.c.h.b16 %v336
      %v418 = vunpack.c.l.b16 %v337
      %v419 = vunpack.c.h.b16 %v337
      %v420 = vunpack.c.l.b16 %v338
      %v421 = vunpack.c.h.b16 %v338
      %v422 = vunpack.c.l.b16 %v339
      %v423 = vunpack.c.h.b16 %v339
      %v424 = vunpack.c.l.b16 %v340
      %v425 = vunpack.c.h.b16 %v340
      %v426 = vunpack.c.l.b16 %v341
      %v427 = vunpack.c.h.b16 %v341
      %v428 = vunpack.c.l.b16 %v342
      %v429 = vunpack.c.h.b16 %v342
      %v430 = vunpack.c.l.b16 %v343
      %v431 = vunpack.c.h.b16 %v343
      %v432 = vunpack.c.l.b16 %v344
      %v433 = vunpack.c.h.b16 %v344
      %v434 = vunpack.c.l.b16 %v345
      %v435 = vunpack.c.h.b16 %v345
      %v436 = vunpack.c.l.b16 %v346
      %v437 = vunpack.c.h.b16 %v346
      %v438 = vunpack.c.l.b16 %v347
      %v439 = vunpack.c.h.b16 %v347
      %v440 = vunpack.c.l.b16 %v348
      %v441 = vunpack.c.h.b16 %v348
      %v442 = vunpack.c.l.b16 %v349
      %v443 = vunpack.c.h.b16 %v349
      %v444 = vunpack.c.l.b16 %v350
      %v445 = vunpack.c.h.b16 %v350
      %v446 = vunpack.c.l.b16 %v351
      %v447 = vunpack.c.h.b16 %v351
      %v448 = vpack.c.b16 %v388, %v384
      %v449 = vpack.c.b16 %v389, %v385
      %v450 = vpack.c.b16 %v390, %v386
      %v451 = vpack.c.b16 %v391, %v387
      %v452 = vpack.c.b16 %v396, %v392
      %v453 = vpack.c.b16 %v397, %v393
      %v454 = vpack.c.b16 %v398, %v394
      %v455 = vpack.c.b16 %v399, %v395
      %v456 = vpack.c.b16 %v404, %v400
      %v457 = vpack.c.b16 %v405, %v401
      %v458 = vpack.c.b16 %v406, %v402
      %v459 = vpack.c.b16 %v407, %v403
      %v460 = vpack.c.b16 %v412, %v408
      %v461 = vpack.c.b16 %v413, %v409
      %v462 = vpack.c.b16 %v414, %v410
      %v463 = vpack.c.b16 %v415, %v411
      %v464 = vpack.c.b16 %v420, %v416
      %v465 = vpack.c.b16 %v421, %v417
      %v466 = vpack.c.b16 %v422, %v418
      %v467 = vpack.c.b16 %v423, %v419
      %v468 = vpack.c.b16 %v428, %v424
      %v469 = vpack.c.b16 %v429, %v425
      %v470 = vpack.c.b16 %v430, %v426
      %v471 = vpack.c.b16 %v431, %v427
      %v472 = vpack.c.b16 %v436, %v432
      %v473 = vpack.c.b16 %v437, %v433
      %v474 = vpack.c.b16 %v438, %v434
      %v475 = vpack.c.b16 %v439, %v435
      %v476 = vpack.c.b16 %v444, %v440
      %v477 = vpack.c.b16 %v445, %v441
      %v478 = vpack.c.b16 %v446, %v442
      %v479 = vpack.c.b16 %v447, %v443
      %512 = vmatprep.subr.bf16.mxu0 %v477
      %513 = vmatpush1.bf16.msra.mxu0 %v476
      %514 = vmatprep.subr.bf16.mxu0 %v473
      %515 = vmatpush1.bf16.msra.mxu0 %v472
      %516 = vmatprep.subr.bf16.mxu0 %v469
      %517 = vmatpush1.bf16.msra.mxu0 %v468
      %518 = vmatprep.subr.bf16.mxu0 %v465
      %519 = vmatpush1.bf16.msra.mxu0 %v464
      %520 = vmatprep.subr.bf16.mxu0 %v461
      %521 = vmatpush1.bf16.msra.mxu0 %v460
      %522 = vmatprep.subr.bf16.mxu0 %v457
      %523 = vmatpush1.bf16.msra.mxu0 %v456
      %524 = vmatprep.subr.bf16.mxu0 %v453
      %525 = vmatpush1.bf16.msra.mxu0 %v452
      %526 = vmatprep.subr.bf16.mxu0 %v449
      %527 = vmatpush1.bf16.msra.mxu0 %v448
      %528 = vmatprep.subr.bf16.mxu0 0
      %529 = vmatpush2.bf16.msra.mxu0 0
      %530 = vmatprep.subr.bf16.mxu0 0
      %531 = vmatpush2.bf16.msra.mxu0 0
      %532 = vmatprep.subr.bf16.mxu0 0
      %533 = vmatpush2.bf16.msra.mxu0 0
      %534 = vmatprep.subr.bf16.mxu0 0
      %535 = vmatpush2.bf16.msra.mxu0 0
      %536 = vmatprep.subr.bf16.mxu0 0
      %537 = vmatpush2.bf16.msra.mxu0 0
      %538 = vmatprep.subr.bf16.mxu0 0
      %539 = vmatpush2.bf16.msra.mxu0 0
      %540 = vmatprep.subr.bf16.mxu0 0
      %541 = vmatpush2.bf16.msra.mxu0 0
      %542 = vmatprep.subr.bf16.mxu0 0
      %543 = vmatpush2.bf16.msra.mxu0 0
      %544 = vmatprep.mubr.bf16.mxu0 0
      %545 = vmatmul.mubr.bf16.gmra.mxu0 %v319
      %v546 = vpop.f32.mrf.mxu0
      %v547 = vadd.f32 0.0, %v546
      %v548 = vpop.f32.mrf.mxu0
      %v549 = vadd.f32 0.0, %v548
      %v550 = vpop.f32.mrf.mxu0
      %v551 = vpop.f32.mrf.mxu0
      %552 = vdwg.mxu0
      %553 = vmatprep.subr.bf16.mxu0 %v479
      %554 = vmatpush1.bf16.msra.mxu0 %v478
      %555 = vmatprep.subr.bf16.mxu0 %v475
      %556 = vmatpush1.bf16.msra.mxu0 %v474
      %557 = vmatprep.subr.bf16.mxu0 %v471
      %558 = vmatpush1.bf16.msra.mxu0 %v470
      %559 = vmatprep.subr.bf16.mxu0 %v467
      %560 = vmatpush1.bf16.msra.mxu0 %v466
      %561 = vmatprep.subr.bf16.mxu0 %v463
      %562 = vmatpush1.bf16.msra.mxu0 %v462
      %563 = vmatprep.subr.bf16.mxu0 %v459
      %564 = vmatpush1.bf16.msra.mxu0 %v458
      %565 = vmatprep.subr.bf16.mxu0 %v455
      %566 = vmatpush1.bf16.msra.mxu0 %v454
      %567 = vmatprep.subr.bf16.mxu0 %v451
      %568 = vmatpush1.bf16.msra.mxu0 %v450
      %569 = vmatprep.subr.bf16.mxu0 0
      %570 = vmatpush2.bf16.msra.mxu0 0
      %571 = vmatprep.subr.bf16.mxu0 0
      %572 = vmatpush2.bf16.msra.mxu0 0
      %573 = vmatprep.subr.bf16.mxu0 0
      %574 = vmatpush2.bf16.msra.mxu0 0
      %575 = vmatprep.subr.bf16.mxu0 0
      %576 = vmatpush2.bf16.msra.mxu0 0
      %577 = vmatprep.subr.bf16.mxu0 0
      %578 = vmatpush2.bf16.msra.mxu0 0
      %579 = vmatprep.subr.bf16.mxu0 0
      %580 = vmatpush2.bf16.msra.mxu0 0
      %581 = vmatprep.subr.bf16.mxu0 0
      %582 = vmatpush2.bf16.msra.mxu0 0
      %583 = vmatprep.subr.bf16.mxu0 0
      %584 = vmatpush2.bf16.msra.mxu0 0
      %585 = vmatprep.mubr.bf16.mxu0 0
      %586 = vmatmul.mubr.bf16.gmra.mxu0 %v319
      %v587 = vpop.f32.mrf.mxu0
      %v588 = vadd.f32 0.0, %v587
      %v589 = vpop.f32.mrf.mxu0
      %v590 = vadd.f32 0.0, %v589
      %v591 = vpop.f32.mrf.mxu0
      %v592 = vpop.f32.mrf.mxu0
      %593 = vdwg.mxu0
      %v594 = vadd.f32 %v314, %v547
      %v595 = vadd.f32 %v315, %v549
      %v596 = vadd.f32 %v316, %v588
      %v597 = vadd.f32 %v317, %v590
      %v598 = vld [vmem:[%s294] sm:$0xff]
      %v599 = vld [vmem:[%s294 + $0x8] sm:$0xff]
      %v600 = vld [vmem:[%s294 + $0x10] sm:$0xff]
      %v601 = vld [vmem:[%s294 + $0x18] sm:$0xff]
      %v602 = vld [vmem:[#allocation5] sm:$0xff]
      %v603 = vpack.c.bf16 %v602, %v602
      %v604 = vld [vmem:[%s4] sm:$0xff]
      %v605 = vld [vmem:[%s4 + $0x8] sm:$0xff]
      %v606 = vld [vmem:[%s4 + $0x10] sm:$0xff]
      %v607 = vld [vmem:[%s4 + $0x18] sm:$0xff]
      %v608 = vld [vmem:[%s4 + $0x20] sm:$0xff]
      %v609 = vld [vmem:[%s4 + $0x28] sm:$0xff]
      %v610 = vld [vmem:[%s4 + $0x30] sm:$0xff]
      %v611 = vld [vmem:[%s4 + $0x38] sm:$0xff]
      %v612 = vld [vmem:[%s4 + $0x40] sm:$0xff]
      %v613 = vld [vmem:[%s4 + $0x48] sm:$0xff]
      %v614 = vld [vmem:[%s4 + $0x50] sm:$0xff]
      %v615 = vld [vmem:[%s4 + $0x58] sm:$0xff]
      %v616 = vld [vmem:[%s4 + $0x60] sm:$0xff]
      %v617 = vld [vmem:[%s4 + $0x68] sm:$0xff]
      %v618 = vld [vmem:[%s4 + $0x70] sm:$0xff]
      %v619 = vld [vmem:[%s4 + $0x78] sm:$0xff]
      %v620 = vld [vmem:[%s4 + $0x80] sm:$0xff]
      %v621 = vld [vmem:[%s4 + $0x88] sm:$0xff]
      %v622 = vld [vmem:[%s4 + $0x90] sm:$0xff]
      %v623 = vld [vmem:[%s4 + $0x98] sm:$0xff]
      %v624 = vld [vmem:[%s4 + $0xa0] sm:$0xff]
      %v625 = vld [vmem:[%s4 + $0xa8] sm:$0xff]
      %v626 = vld [vmem:[%s4 + $0xb0] sm:$0xff]
      %v627 = vld [vmem:[%s4 + $0xb8] sm:$0xff]
      %v628 = vld [vmem:[%s4 + $0xc0] sm:$0xff]
      %v629 = vld [vmem:[%s4 + $0xc8] sm:$0xff]
      %v630 = vld [vmem:[%s4 + $0xd0] sm:$0xff]
      %v631 = vld [vmem:[%s4 + $0xd8] sm:$0xff]
      %v632 = vld [vmem:[%s4 + $0xe0] sm:$0xff]
      %v633 = vld [vmem:[%s4 + $0xe8] sm:$0xff]
      %v634 = vld [vmem:[%s4 + $0xf0] sm:$0xff]
      %v635 = vld [vmem:[%s4 + $0xf8] sm:$0xff]
      %v668 = vunpack.c.l.b16 %v604
      %v669 = vunpack.c.h.b16 %v604
      %v670 = vunpack.c.l.b16 %v605
      %v671 = vunpack.c.h.b16 %v605
      %v672 = vunpack.c.l.b16 %v606
      %v673 = vunpack.c.h.b16 %v606
      %v674 = vunpack.c.l.b16 %v607
      %v675 = vunpack.c.h.b16 %v607
      %v676 = vunpack.c.l.b16 %v608
      %v677 = vunpack.c.h.b16 %v608
      %v678 = vunpack.c.l.b16 %v609
      %v679 = vunpack.c.h.b16 %v609
      %v680 = vunpack.c.l.b16 %v610
      %v681 = vunpack.c.h.b16 %v610
      %v682 = vunpack.c.l.b16 %v611
      %v683 = vunpack.c.h.b16 %v611
      %v684 = vunpack.c.l.b16 %v612
      %v685 = vunpack.c.h.b16 %v612
      %v686 = vunpack.c.l.b16 %v613
      %v687 = vunpack.c.h.b16 %v613
      %v688 = vunpack.c.l.b16 %v614
      %v689 = vunpack.c.h.b16 %v614
      %v690 = vunpack.c.l.b16 %v615
      %v691 = vunpack.c.h.b16 %v615
      %v692 = vunpack.c.l.b16 %v616
      %v693 = vunpack.c.h.b16 %v616
      %v694 = vunpack.c.l.b16 %v617
      %v695 = vunpack.c.h.b16 %v617
      %v696 = vunpack.c.l.b16 %v618
      %v697 = vunpack.c.h.b16 %v618
      %v698 = vunpack.c.l.b16 %v619
      %v699 = vunpack.c.h.b16 %v619
      %v700 = vunpack.c.l.b16 %v620
      %v701 = vunpack.c.h.b16 %v620
      %v702 = vunpack.c.l.b16 %v621
      %v703 = vunpack.c.h.b16 %v621
      %v704 = vunpack.c.l.b16 %v622
      %v705 = vunpack.c.h.b16 %v622
      %v706 = vunpack.c.l.b16 %v623
      %v707 = vunpack.c.h.b16 %v623
      %v708 = vunpack.c.l.b16 %v624
      %v709 = vunpack.c.h.b16 %v624
      %v710 = vunpack.c.l.b16 %v625
      %v711 = vunpack.c.h.b16 %v625
      %v712 = vunpack.c.l.b16 %v626
      %v713 = vunpack.c.h.b16 %v626
      %v714 = vunpack.c.l.b16 %v627
      %v715 = vunpack.c.h.b16 %v627
      %v716 = vunpack.c.l.b16 %v628
      %v717 = vunpack.c.h.b16 %v628
      %v718 = vunpack.c.l.b16 %v629
      %v719 = vunpack.c.h.b16 %v629
      %v720 = vunpack.c.l.b16 %v630
      %v721 = vunpack.c.h.b16 %v630
      %v722 = vunpack.c.l.b16 %v631
      %v723 = vunpack.c.h.b16 %v631
      %v724 = vunpack.c.l.b16 %v632
      %v725 = vunpack.c.h.b16 %v632
      %v726 = vunpack.c.l.b16 %v633
      %v727 = vunpack.c.h.b16 %v633
      %v728 = vunpack.c.l.b16 %v634
      %v729 = vunpack.c.h.b16 %v634
      %v730 = vunpack.c.l.b16 %v635
      %v731 = vunpack.c.h.b16 %v635
      %v732 = vpack.c.b16 %v672, %v668
      %v733 = vpack.c.b16 %v673, %v669
      %v734 = vpack.c.b16 %v674, %v670
      %v735 = vpack.c.b16 %v675, %v671
      %v736 = vpack.c.b16 %v680, %v676
      %v737 = vpack.c.b16 %v681, %v677
      %v738 = vpack.c.b16 %v682, %v678
      %v739 = vpack.c.b16 %v683, %v679
      %v740 = vpack.c.b16 %v688, %v684
      %v741 = vpack.c.b16 %v689, %v685
      %v742 = vpack.c.b16 %v690, %v686
      %v743 = vpack.c.b16 %v691, %v687
      %v744 = vpack.c.b16 %v696, %v692
      %v745 = vpack.c.b16 %v697, %v693
      %v746 = vpack.c.b16 %v698, %v694
      %v747 = vpack.c.b16 %v699, %v695
      %v748 = vpack.c.b16 %v704, %v700
      %v749 = vpack.c.b16 %v705, %v701
      %v750 = vpack.c.b16 %v706, %v702
      %v751 = vpack.c.b16 %v707, %v703
      %v752 = vpack.c.b16 %v712, %v708
      %v753 = vpack.c.b16 %v713, %v709
      %v754 = vpack.c.b16 %v714, %v710
      %v755 = vpack.c.b16 %v715, %v711
      %v756 = vpack.c.b16 %v720, %v716
      %v757 = vpack.c.b16 %v721, %v717
      %v758 = vpack.c.b16 %v722, %v718
      %v759 = vpack.c.b16 %v723, %v719
      %v760 = vpack.c.b16 %v728, %v724
      %v761 = vpack.c.b16 %v729, %v725
      %v762 = vpack.c.b16 %v730, %v726
      %v763 = vpack.c.b16 %v731, %v727
      %796 = vmatprep.subr.bf16.mxu0 %v761
      %797 = vmatpush1.bf16.msra.mxu0 %v760
      %798 = vmatprep.subr.bf16.mxu0 %v757
      %799 = vmatpush1.bf16.msra.mxu0 %v756
      %800 = vmatprep.subr.bf16.mxu0 %v753
      %801 = vmatpush1.bf16.msra.mxu0 %v752
      %802 = vmatprep.subr.bf16.mxu0 %v749
      %803 = vmatpush1.bf16.msra.mxu0 %v748
      %804 = vmatprep.subr.bf16.mxu0 %v745
      %805 = vmatpush1.bf16.msra.mxu0 %v744
      %806 = vmatprep.subr.bf16.mxu0 %v741
      %807 = vmatpush1.bf16.msra.mxu0 %v740
      %808 = vmatprep.subr.bf16.mxu0 %v737
      %809 = vmatpush1.bf16.msra.mxu0 %v736
      %810 = vmatprep.subr.bf16.mxu0 %v733
      %811 = vmatpush1.bf16.msra.mxu0 %v732
      %812 = vmatprep.subr.bf16.mxu0 0
      %813 = vmatpush2.bf16.msra.mxu0 0
      %814 = vmatprep.subr.bf16.mxu0 0
      %815 = vmatpush2.bf16.msra.mxu0 0
      %816 = vmatprep.subr.bf16.mxu0 0
      %817 = vmatpush2.bf16.msra.mxu0 0
      %818 = vmatprep.subr.bf16.mxu0 0
      %819 = vmatpush2.bf16.msra.mxu0 0
      %820 = vmatprep.subr.bf16.mxu0 0
      %821 = vmatpush2.bf16.msra.mxu0 0
      %822 = vmatprep.subr.bf16.mxu0 0
      %823 = vmatpush2.bf16.msra.mxu0 0
      %824 = vmatprep.subr.bf16.mxu0 0
      %825 = vmatpush2.bf16.msra.mxu0 0
      %826 = vmatprep.subr.bf16.mxu0 0
      %827 = vmatpush2.bf16.msra.mxu0 0
      %828 = vmatprep.mubr.bf16.mxu0 0
      %829 = vmatmul.mubr.bf16.gmra.mxu0 %v603
      %v830 = vpop.f32.mrf.mxu0
      %v831 = vadd.f32 0.0, %v830
      %v832 = vpop.f32.mrf.mxu0
      %v833 = vadd.f32 0.0, %v832
      %v834 = vpop.f32.mrf.mxu0
      %v835 = vpop.f32.mrf.mxu0
      %836 = vdwg.mxu0
      %837 = vmatprep.subr.bf16.mxu0 %v763
      %838 = vmatpush1.bf16.msra.mxu0 %v762
      %839 = vmatprep.subr.bf16.mxu0 %v759
      %840 = vmatpush1.bf16.msra.mxu0 %v758
      %841 = vmatprep.subr.bf16.mxu0 %v755
      %842 = vmatpush1.bf16.msra.mxu0 %v754
      %843 = vmatprep.subr.bf16.mxu0 %v751
      %844 = vmatpush1.bf16.msra.mxu0 %v750
      %845 = vmatprep.subr.bf16.mxu0 %v747
      %846 = vmatpush1.bf16.msra.mxu0 %v746
      %847 = vmatprep.subr.bf16.mxu0 %v743
      %848 = vmatpush1.bf16.msra.mxu0 %v742
      %849 = vmatprep.subr.bf16.mxu0 %v739
      %850 = vmatpush1.bf16.msra.mxu0 %v738
      %851 = vmatprep.subr.bf16.mxu0 %v735
      %852 = vmatpush1.bf16.msra.mxu0 %v734
      %853 = vmatprep.subr.bf16.mxu0 0
      %854 = vmatpush2.bf16.msra.mxu0 0
      %855 = vmatprep.subr.bf16.mxu0 0
      %856 = vmatpush2.bf16.msra.mxu0 0
      %857 = vmatprep.subr.bf16.mxu0 0
      %858 = vmatpush2.bf16.msra.mxu0 0
      %859 = vmatprep.subr.bf16.mxu0 0
      %860 = vmatpush2.bf16.msra.mxu0 0
      %861 = vmatprep.subr.bf16.mxu0 0
      %862 = vmatpush2.bf16.msra.mxu0 0
      %863 = vmatprep.subr.bf16.mxu0 0
      %864 = vmatpush2.bf16.msra.mxu0 0
      %865 = vmatprep.subr.bf16.mxu0 0
      %866 = vmatpush2.bf16.msra.mxu0 0
      %867 = vmatprep.subr.bf16.mxu0 0
      %868 = vmatpush2.bf16.msra.mxu0 0
      %869 = vmatprep.mubr.bf16.mxu0 0
      %870 = vmatmul.mubr.bf16.gmra.mxu0 %v603
      %v871 = vpop.f32.mrf.mxu0
      %v872 = vadd.f32 0.0, %v871
      %v873 = vpop.f32.mrf.mxu0
      %v874 = vadd.f32 0.0, %v873
      %v875 = vpop.f32.mrf.mxu0
      %v876 = vpop.f32.mrf.mxu0
      %877 = vdwg.mxu0
      %v878 = vadd.f32 %v598, %v831
      %v879 = vadd.f32 %v599, %v833
      %v880 = vadd.f32 %v600, %v872
      %v881 = vadd.f32 %v601, %v874
      %v882 = vld [vmem:[#allocation3] sm:$0xff]
      %v883 = vxor.u32 %v594, 2147483648
      %v884 = vmul.f32 %v883, 1.442695
      %v885 = vpow.pop %v884
      %v886 = vadd.f32 %v885, 1.0
      %v887 = vrcp.pop %v886
      %v888 = vmul.f32 1.0, %v887
      %v889 = vxor.u32 %v595, 2147483648
      %v890 = vmul.f32 %v889, 1.442695
      %v891 = vpow.pop %v890
      %v892 = vadd.f32 %v891, 1.0
      %v893 = vrcp.pop %v892
      %v894 = vmul.f32 1.0, %v893
      %v895 = vtanh.pop %v596
      %v896 = vxor.u32 %v597, 2147483648
      %v897 = vmul.f32 %v896, 1.442695
      %v898 = vpow.pop %v897
      %v899 = vadd.f32 %v898, 1.0
      %v900 = vrcp.pop %v899
      %v901 = vmul.f32 1.0, %v900
      %v902 = vmul.f32 %v894, %v882
      %v903 = vmul.f32 %v888, %v895
      %v904 = vadd.f32 %v902, %v903
      %v905 = vtanh.pop %v904
      %v906 = vmul.f32 %v901, %v905
      %v907 = vld [vmem:[#allocation6] sm:$0xff]
      %v908 = vxor.u32 %v878, 2147483648
      %v909 = vmul.f32 %v908, 1.442695
      %v910 = vpow.pop %v909
      %v911 = vadd.f32 %v910, 1.0
      %v912 = vrcp.pop %v911
      %v913 = vmul.f32 1.0, %v912
      %v914 = vxor.u32 %v879, 2147483648
      %v915 = vmul.f32 %v914, 1.442695
      %v916 = vpow.pop %v915
      %v917 = vadd.f32 %v916, 1.0
      %v918 = vrcp.pop %v917
      %v919 = vmul.f32 1.0, %v918
      %v920 = vtanh.pop %v880
      %v921 = vxor.u32 %v881, 2147483648
      %v922 = vmul.f32 %v921, 1.442695
      %v923 = vpow.pop %v922
      %v924 = vadd.f32 %v923, 1.0
      %v925 = vrcp.pop %v924
      %v926 = vmul.f32 1.0, %v925
      %v927 = vmul.f32 %v919, %v907
      %v928 = vmul.f32 %v913, %v920
      %v929 = vadd.f32 %v927, %v928
      %v930 = vtanh.pop %v929
      %v931 = vmul.f32 %v926, %v930
      %v932 = vstv %s21
      %vm933 = vcmp.lt.s32.totalorder %v932, %v313
      %s934 = ssub.s32 7, %s21
      %v935 = vstv %s934
      %vm936 = vcmp.lt.s32.totalorder %v935, %v313
      %v937 = vsel %vm933, 1, 0
      %938 = vset.pattern.permute.xlu0 0
      %939 = vperm.xlu0 %938, %v937
      %v940 = vpop.permute.xlu0 %939
      %vm941 = vcmp.eq.s32.totalorder %v940, 1
      %v942 = vsel %vm941, %v906, %v318
      %943 = vst [vmem:[#allocation2] sm:$0xff] %v942
      %v944 = vld [vmem:[#allocation3] sm:$0xff]
      %v945 = vsel %vm941, %v904, %v944
      %946 = vst [vmem:[#allocation3] sm:$0xff] %v945
      %v947 = vld [vmem:[#allocation4] sm:$0xff]
      %v948 = vsel %vm941, %v906, 0.0
      %v949 = vmax.f32 %v947, %v948
      %950 = vst [vmem:[#allocation4] sm:$0xff] %v949
      %v951 = vld [vmem:[#allocation5] sm:$0xff]
      %v952 = vsel %vm936, 1, 0
      %953 = vset.pattern.permute.xlu0 0
      %954 = vperm.xlu0 %953, %v952
      %v955 = vpop.permute.xlu0 %954
      %vm956 = vcmp.eq.s32.totalorder %v955, 1
      %v957 = vsel %vm956, %v931, %v951
      %958 = vst [vmem:[#allocation5] sm:$0xff] %v957
      %v959 = vld [vmem:[#allocation6] sm:$0xff]
      %v960 = vsel %vm956, %v929, %v959
      %961 = vst [vmem:[#allocation6] sm:$0xff] %v960
      %v962 = vld [vmem:[#allocation7] sm:$0xff]
      %v963 = vsel %vm956, %v931, 0.0
      %v964 = vmax.f32 %v962, %v963
      %965 = vst [vmem:[#allocation7] sm:$0xff] %v964
      %p966 = scmp.eq.s32.totalorder %s21, 7
      // Predicated region
      $region45: #{infersent_forward.4} parent=39 // pred_check
        %p967 = pneg %p966
      $region46: #{infersent_forward.4} parent=39 // pred_check_branch
        %969 = sbr.rel (%p967) target = $region48
      $region47: #{infersent_forward.4} parent=39 // pred_region
        %v970 = vld [vmem:[#allocation4] sm:$0xff]
        %971 = vst [vmem:[%s301] sm:$0xff] %v970
        %v972 = vld [vmem:[#allocation7] sm:$0xff]
        %973 = vst [vmem:[%s301 + $0x8] sm:$0xff] %v972
      $region48: #{infersent_forward.4} parent=39 // pred_fallthru
        _
      %p974 = scmp.lt.s32.totalorder %s20, 1
      %s975 = scalar_select %p974, %s20, 1
      %s976 = smul.addr %s975, 2
      %s977 = smul.addr %s976, 8
      %s978 = scalar_lea.vmem %s5, %s977
      // Predicated region
      $region49: #{infersent_forward.4} parent=39 // pred_check
        %p979 = pneg %p174
      $region50: #{infersent_forward.4} parent=39 // pred_check_branch
        %981 = sbr.rel (%p979) target = $region52
      $region51: #{infersent_forward.4} parent=39 // pred_region
        _
      $region52: #{infersent_forward.4} parent=39 // pred_fallthru
        _
    $region40: #{infersent_forward.4} parent=5 // pred_fallthru
      _
    %p982 = scmp.le.s32.totalorder 2, %s11
    // Predicated region
    $region53: #{infersent_forward.4} parent=5 // pred_check
      %p983 = pneg %p982
    $region54: #{infersent_forward.4} parent=5 // pred_check_branch
      %985 = sbr.rel (%p983) target = $region56
    $region55: #{infersent_forward.4} parent=5 // pred_region
      %s986 = ssub.s32 %s11, 2
      // Predicated region
      $region57: #{infersent_forward.4} parent=55 // pred_check
        %p987 = pneg %p180
      $region58: #{infersent_forward.4} parent=55 // pred_check_branch
        %989 = sbr.rel (%p987) target = $region60
      $region59: #{infersent_forward.4} parent=55 // pred_region
        %p990 = scmp.lt.s32.totalorder %s22, 1
        %s991 = scalar_select %p990, %s22, 1
        %s992 = smul.addr %s991, 2
        %s993 = smul.addr %s992, 8
        %s994 = scalar_lea.vmem %s5, %s993
      $region60: #{infersent_forward.4} parent=55 // pred_fallthru
        _
    $region56: #{infersent_forward.4} parent=5 // pred_fallthru
      _
  $region6: #{infersent_forward.4} parent=0 // loop_footer
    %s15 = sadd.s32 1, %s11
  $region7: #{infersent_forward.4} parent=0 // loop_footer_branch
    %10 = sbr.rel target = $region3
  $region8: #{infersent_forward.4} parent=0 // loop_exit
    _

// kernel: infersent_forward.3
$region0: #{infersent_forward.3}
  #allocation0 [shape = 'u32[]', space=smem, size = 0x4, offset = 0x4, fixed_abs, tag = 'smem constant byte address 0x4 - core index']
  #allocation1 [shape = 'u32[144,128]{1,0:T(1,128)}', space=vmem, size = 0x12000, scoped, tag = 'internal scratch']
  #allocation2 [shape = 'f32[16,128]{1,0:T(8,128)}', space=vmem, size = 0x2000, scoped, tag = 'scratch operand']
  #allocation3 [shape = 's32[16]{0}', space=sflag, size = 0x40, scoped, tag = 'scratch operand']
  #allocation4 [shape = 's32[1]{0}', space=sflag, size = 0x4, scoped, tag = 'scoped memory for infersent_forward.3']
  #allocation5 [shape = 'u8[512]{0}', space=smem, size = 0x200, scoped, tag = 'prefetched SMEM operand 0']
  #allocation6 [shape = 's32[]', space=sflag, size = 0x4, offset = 0, fixed_abs, tag = 'sflag constant byte address 0x0 - dummy sync flag']
  #allocation7 [shape = 's32[]', space=sflag, size = 0x4, offset = 0, fixed_abs, tag = 'sflag constant byte address 0x0 - dummy sync flag']
  #allocation8 [shape = 's32[]', space=sflag, size = 0x4, offset = 0, fixed_abs, tag = 'sflag constant byte address 0x0 - dummy sync flag']
  #allocation9 [shape = 's32[]', space=sflag, size = 0x4, offset = 0, fixed_abs, tag = 'sflag constant byte address 0x0 - dummy sync flag']
  #allocation10 [shape = 's32[]', space=sflag, size = 0x4, offset = 0, fixed_abs, tag = 'sflag constant byte address 0x0 - dummy sync flag']
  #allocation11 [shape = 's32[]', space=sflag, size = 0x4, offset = 0, fixed_abs, tag = 'sflag constant byte address 0x0 - dummy sync flag']
  #allocation12 [shape = 's32[]', space=sflag, size = 0x4, offset = 0, fixed_abs, tag = 'sflag constant byte address 0x0 - dummy sync flag']
  #allocation13 [shape = 's32[]', space=sflag, size = 0x4, offset = 0, fixed_abs, tag = 'sflag constant byte address 0x0 - dummy sync flag']
  #allocation14 [shape = 's32[]', space=sflag, size = 0x4, offset = 0, fixed_abs, tag = 'sflag constant byte address 0x0 - dummy sync flag']
  #allocation15 [shape = 's32[]', space=sflag, size = 0x4, offset = 0, fixed_abs, tag = 'sflag constant byte address 0x0 - dummy sync flag']
  #allocation16 [shape = 's32[]', space=sflag, size = 0x4, offset = 0, fixed_abs, tag = 'sflag constant byte address 0x0 - dummy sync flag']
  #allocation17 [shape = 's32[]', space=sflag, size = 0x4, offset = 0, fixed_abs, tag = 'sflag constant byte address 0x0 - dummy sync flag']
  #allocation18 [shape = 's32[]', space=sflag, size = 0x4, offset = 0, fixed_abs, tag = 'sflag constant byte address 0x0 - dummy sync flag']
  #allocation19 [shape = 's32[]', space=sflag, size = 0x4, offset = 0, fixed_abs, tag = 'sflag constant byte address 0x0 - dummy sync flag']
  #allocation20 [shape = 's32[]', space=sflag, size = 0x4, offset = 0, fixed_abs, tag = 'sflag constant byte address 0x0 - dummy sync flag']
  #allocation21 [shape = 's32[]', space=sflag, size = 0x4, offset = 0, fixed_abs, tag = 'sflag constant byte address 0x0 - dummy sync flag']
  %s0 = inlined_call_operand.vmem [shape: s32[128], index: 0, kind: input, shape index: {}]
  %s1 = inlined_call_operand.vmem [shape: f32[50,1,128], index: 1, kind: input, shape index: {}]
  %s2 = inlined_call_operand.vmem [shape: bf16[128,512], index: 2, kind: input, shape index: {}]
  %s3 = inlined_call_operand.vmem [shape: bf16[128,512], index: 3, kind: input, shape index: {}]
  %s4 = inlined_call_operand.vmem [shape: f32[1,512], index: 4, kind: input, shape index: {}]
  %s5 = inlined_call_operand.vmem [shape: f32[1,512], index: 5, kind: input, shape index: {}]
  %s6 = inlined_call_operand.vmem [shape: f32[128,512], index: 6, kind: output, shape index: {0}]
  %s7 = inlined_call_operand.vmem [shape: f32[128,512], index: 7, kind: output, shape index: {1}]
  %8 = xla_tuple %s6, %s7
  %s9 = sld [smem:[#allocation0]]
  $region537: #{infersent_forward.3} parent=0
    _
  %s11 = ssub.s32 1, %s9
  %s12 = scalar_select 0, %s11, %s9
  %s13 = sshll.u32 %s0, 4
  %s14 = int_to_ptr.vmem [resolvable:$true] %s13
  %16 = dma.vmem_to_smem %s14, 16, [#allocation5], [#allocation4]
  %17 = dma.done [#allocation4], 16
  %18 = sfence
  loop: start=0, step=1, limit=10
  $region2: #{infersent_forward.3} parent=0 // loop_pre_header
    _
  $region3: #{infersent_forward.3} parent=0 // loop_header
    %s20 = sphi 0, %s24
    %p21 = scmp.ge.s32.totalorder %s20, 10
    %s28 = sphi 0, %s28
    %s30 = sphi 0, %s28
    %s31 = sphi 0, %s30
    %s45 = sphi 0, %s31
    %s49 = sphi 0, %s49
    %s51 = sphi 0, %s49
    %s52 = sphi 0, %s51
    %s66 = sphi 0, %s52
    %s70 = sphi 0, %s70
    %s72 = sphi 0, %s70
    %s73 = sphi 0, %s72
    %s87 = sphi 0, %s73
    %s91 = sphi 0, %s91
    %s93 = sphi 0, %s91
    %s94 = sphi 0, %s93
    %s108 = sphi 0, %s94
    %s114 = sphi 0, %s116
    %s117 = sphi 0, %s114
    %s118 = sphi 0, %s117
    %s134 = sphi 0, %s118
    %s142 = sphi 0, %s144
    %s145 = sphi 0, %s142
    %s146 = sphi 0, %s145
    %s162 = sphi 0, %s146
  $region4: #{infersent_forward.3} parent=0 // loop_header_branch
    %23 = sbr.rel (%p21) target = $region8
  $region5: #{infersent_forward.3} parent=0 // loop_body
    %s25 = ssub.s32 %s20, 1
    %s26 = ssub.s32 %s20, 2
    %s27 = sadd.s32 %s20, 1
    %s29 = sadd.s32 %s28, 1
    %p32 = scmp.eq.s32.totalorder %s20, 7
    %p33 = scmp.ne.s32.totalorder %s28, %s30
    %p34 = scmp.eq.s32.totalorder %s20, 0
    %p35 = por %p33, %p34
    %p36 = scmp.ne.s32.totalorder %s28, %s30
    %p37 = scmp.eq.s32.totalorder %s25, 7
    %p38 = por %p36, %p37
    %p39 = scmp.ne.s32.totalorder %s30, %s31
    %p40 = scmp.eq.s32.totalorder %s25, 0
    %p41 = por %p39, %p40
    %p42 = scmp.ne.s32.totalorder %s30, %s31
    %p43 = scmp.eq.s32.totalorder %s26, 7
    %p44 = por %p42, %p43
    %p46 = scmp.ne.s32.totalorder %s31, %s45
    %p47 = scmp.eq.s32.totalorder %s26, 0
    %p48 = por %p46, %p47
    %s50 = sadd.s32 %s49, 1
    %p53 = scmp.eq.s32.totalorder %s20, 7
    %p54 = scmp.ne.s32.totalorder %s49, %s51
    %p55 = scmp.eq.s32.totalorder %s20, 0
    %p56 = por %p54, %p55
    %p57 = scmp.ne.s32.totalorder %s49, %s51
    %p58 = scmp.eq.s32.totalorder %s25, 7
    %p59 = por %p57, %p58
    %p60 = scmp.ne.s32.totalorder %s51, %s52
    %p61 = scmp.eq.s32.totalorder %s25, 0
    %p62 = por %p60, %p61
    %p63 = scmp.ne.s32.totalorder %s51, %s52
    %p64 = scmp.eq.s32.totalorder %s26, 7
    %p65 = por %p63, %p64
    %p67 = scmp.ne.s32.totalorder %s52, %s66
    %p68 = scmp.eq.s32.totalorder %s26, 0
    %p69 = por %p67, %p68
    %s71 = sadd.s32 %s70, 1
    %p74 = scmp.eq.s32.totalorder %s20, 7
    %p75 = scmp.ne.s32.totalorder %s70, %s72
    %p76 = scmp.eq.s32.totalorder %s20, 0
    %p77 = por %p75, %p76
    %p78 = scmp.ne.s32.totalorder %s70, %s72
    %p79 = scmp.eq.s32.totalorder %s25, 7
    %p80 = por %p78, %p79
    %p81 = scmp.ne.s32.totalorder %s72, %s73
    %p82 = scmp.eq.s32.totalorder %s25, 0
    %p83 = por %p81, %p82
    %p84 = scmp.ne.s32.totalorder %s72, %s73
    %p85 = scmp.eq.s32.totalorder %s26, 7
    %p86 = por %p84, %p85
    %p88 = scmp.ne.s32.totalorder %s73, %s87
    %p89 = scmp.eq.s32.totalorder %s26, 0
    %p90 = por %p88, %p89
    %s92 = sadd.s32 %s91, 1
    %p95 = scmp.eq.s32.totalorder %s20, 7
    %p96 = scmp.ne.s32.totalorder %s91, %s93
    %p97 = scmp.eq.s32.totalorder %s20, 0
    %p98 = por %p96, %p97
    %p99 = scmp.ne.s32.totalorder %s91, %s93
    %p100 = scmp.eq.s32.totalorder %s25, 7
    %p101 = por %p99, %p100
    %p102 = scmp.ne.s32.totalorder %s93, %s94
    %p103 = scmp.eq.s32.totalorder %s25, 0
    %p104 = por %p102, %p103
    %p105 = scmp.ne.s32.totalorder %s93, %s94
    %p106 = scmp.eq.s32.totalorder %s26, 7
    %p107 = por %p105, %p106
    %p109 = scmp.ne.s32.totalorder %s94, %s108
    %p110 = scmp.eq.s32.totalorder %s26, 0
    %p111 = por %p109, %p110
    %s112 = ssub.s32 %s20, %s27
    %p113 = scmp.eq.s32.totalorder %s112, 0
    %s115 = sadd.s32 %s114, 1
    %s116 = scalar_select %p113, %s114, %s115
    %p119 = pneg %p113
    %p120 = scmp.eq.s32.totalorder %s20, 7
    %p121 = por %p119, %p120
    %p122 = scmp.ne.s32.totalorder %s114, %s117
    %p123 = scmp.eq.s32.totalorder %s20, 0
    %p124 = por %p122, %p123
    %p125 = scmp.ne.s32.totalorder %s114, %s117
    %p126 = scmp.eq.s32.totalorder %s25, 7
    %p127 = por %p125, %p126
    %p128 = scmp.ne.s32.totalorder %s117, %s118
    %p129 = scmp.eq.s32.totalorder %s25, 0
    %p130 = por %p128, %p129
    %p131 = scmp.ne.s32.totalorder %s117, %s118
    %p132 = scmp.eq.s32.totalorder %s26, 7
    %p133 = por %p131, %p132
    %p135 = scmp.ne.s32.totalorder %s118, %s134
    %p136 = scmp.eq.s32.totalorder %s26, 0
    %p137 = por %p135, %p136
    %s138 = ssub.s32 7, %s20
    %s139 = ssub.s32 7, %s27
    %s140 = ssub.s32 %s138, %s139
    %p141 = scmp.eq.s32.totalorder %s140, 0
    %s143 = sadd.s32 %s142, 1
    %s144 = scalar_select %p141, %s142, %s143
    %p147 = pneg %p141
    %p148 = scmp.eq.s32.totalorder %s20, 7
    %p149 = por %p147, %p148
    %p150 = scmp.ne.s32.totalorder %s142, %s145
    %p151 = scmp.eq.s32.totalorder %s20, 0
    %p152 = por %p150, %p151
    %p153 = scmp.ne.s32.totalorder %s142, %s145
    %p154 = scmp.eq.s32.totalorder %s25, 7
    %p155 = por %p153, %p154
    %p156 = scmp.ne.s32.totalorder %s145, %s146
    %p157 = scmp.eq.s32.totalorder %s25, 0
    %p158 = por %p156, %p157
    %p159 = scmp.ne.s32.totalorder %s145, %s146
    %p160 = scmp.eq.s32.totalorder %s26, 7
    %p161 = por %p159, %p160
    %p163 = scmp.ne.s32.totalorder %s146, %s162
    %p164 = scmp.eq.s32.totalorder %s26, 0
    %p165 = por %p163, %p164
    %p166 = scmp.le.s32.totalorder 1, %s20
    %p167 = scmp.lt.s32.totalorder %s20, 9
    %p168 = pnand %p166, %p167
    %p169 = pneg %p168
    // Predicated region
    $region9: #{infersent_forward.3} parent=5 // pred_check
      _
    $region10: #{infersent_forward.3} parent=5 // pred_check_branch
      %171 = sbr.rel (%p168) target = $region12
    $region11: #{infersent_forward.3} parent=5 // pred_region
      %s172 = ssub.s32 %s20, 1
      // Predicated region
      $region13: #{infersent_forward.3} parent=11 // pred_check
        %p173 = pneg %p41
      $region14: #{infersent_forward.3} parent=11 // pred_check_branch
        %175 = sbr.rel (%p173) target = $region16
      $region15: #{infersent_forward.3} parent=11 // pred_region
        _
      $region16: #{infersent_forward.3} parent=11 // pred_fallthru
        _
      // Predicated region
      $region17: #{infersent_forward.3} parent=11 // pred_check
        %p176 = pneg %p62
      $region18: #{infersent_forward.3} parent=11 // pred_check_branch
        %178 = sbr.rel (%p176) target = $region20
      $region19: #{infersent_forward.3} parent=11 // pred_region
        _
      $region20: #{infersent_forward.3} parent=11 // pred_fallthru
        _
      // Predicated region
      $region21: #{infersent_forward.3} parent=11 // pred_check
        %p179 = pneg %p83
      $region22: #{infersent_forward.3} parent=11 // pred_check_branch
        %181 = sbr.rel (%p179) target = $region24
      $region23: #{infersent_forward.3} parent=11 // pred_region
        _
      $region24: #{infersent_forward.3} parent=11 // pred_fallthru
        _
      // Predicated region
      $region25: #{infersent_forward.3} parent=11 // pred_check
        %p182 = pneg %p104
      $region26: #{infersent_forward.3} parent=11 // pred_check_branch
        %184 = sbr.rel (%p182) target = $region28
      $region27: #{infersent_forward.3} parent=11 // pred_region
        _
      $region28: #{infersent_forward.3} parent=11 // pred_fallthru
        _
    $region12: #{infersent_forward.3} parent=5 // pred_fallthru
      _
    %p185 = scmp.lt.s32.totalorder %s20, 8
    // Predicated region
    $region29: #{infersent_forward.3} parent=5 // pred_check
      %p186 = pneg %p185
    $region30: #{infersent_forward.3} parent=5 // pred_check_branch
      %188 = sbr.rel (%p186) target = $region32
    $region31: #{infersent_forward.3} parent=5 // pred_region
      _
    $region32: #{infersent_forward.3} parent=5 // pred_fallthru
      _
    %p189 = scmp.le.s32.totalorder 1, %s20
    %p190 = scmp.lt.s32.totalorder %s20, 9
    %p191 = pnand %p189, %p190
    %p192 = pneg %p191
    // Predicated region
    $region33: #{infersent_forward.3} parent=5 // pred_check
      _
    $region34: #{infersent_forward.3} parent=5 // pred_check_branch
      %194 = sbr.rel (%p191) target = $region36
    $region35: #{infersent_forward.3} parent=5 // pred_region
      %s195 = ssub.s32 %s20, 1
      %p196 = pneg %p41
      %p197 = pneg %p38
      %p198 = pneg %p62
      %p199 = pneg %p59
      %p200 = pneg %p83
      %p201 = pneg %p80
      %p202 = pneg %p104
      %p203 = pneg %p101
      %p204 = pneg %p130
      %p205 = pneg %p127
      %s206 = smul.u32 2, %s25
      %p207 = scmp.lt.s32.totalorder %s206, 15
      %s208 = scalar_select %p207, %s206, 15
      %s209 = smul.addr %s208, 4
      %s210 = smul.addr %s209, 8
      %s211 = scalar_lea.vmem %s6, %s210
      %p212 = pneg %p158
      %p213 = pneg %p155
      %s214 = ssub.s32 7, %s25
      %s215 = smul.u32 2, %s214
      %p216 = scmp.lt.s32.totalorder %s215, 15
      %s217 = scalar_select %p216, %s215, 15
      %s218 = smul.addr %s217, 4
      %s219 = smul.addr %s218, 8
      %s220 = scalar_lea.vmem %s7, %s219
      %s221 = smul.u32 2, %s25
      %p222 = scmp.lt.s32.totalorder %s221, 15
      %s223 = scalar_select %p222, %s221, 15
      %s224 = smul.addr %s223, 4
      %s225 = smul.addr %s224, 8
      %s226 = scalar_lea.vmem %s6, %s225
      %s227 = smul.u32 2, %s25
      %s228 = ssub.s32 7, %s25
      %s229 = smul.u32 2, %s228
      %p230 = scmp.lt.s32.totalorder %s229, 15
      %s231 = scalar_select %p230, %s229, 15
      %s232 = smul.addr %s231, 4
      %s233 = smul.addr %s232, 8
      %s234 = scalar_lea.vmem %s7, %s233
      %s235 = ssub.s32 7, %s25
      %s236 = smul.u32 2, %s235
      %s238 = smul.u32 %s25, 16
      %s239 = sld [smem:[#allocation5 + %s238]]
      %s240 = scalar_lea.vmem %s1, %s239
      %p242 = scmp.lt.u32.totalorder 1, 8
      %p243 = pneg %p242
      // Predicated region
      $region37: #{infersent_forward.3} parent=35 // pred_check
        _
      $region38: #{infersent_forward.3} parent=35 // pred_check_branch
        %245 = sbr.rel (%p242) target = $region40
      $region39: #{infersent_forward.3} parent=35 // pred_region
        %s261 = sand.u32 1, 7
        %p262 = scmp.eq.s32.totalorder %s261, 0
        %p263 = pneg %p262
        // Predicated region
        $region52: #{infersent_forward.3} parent=39 // pred_check
          _
        $region53: #{infersent_forward.3} parent=39 // pred_check_branch
          %265 = sbr.rel (%p262) target = $region55
        $region54: #{infersent_forward.3} parent=39 // pred_region
          %s266 = sand.u32 1, 7
          %s267 = ssub.s32 1, %s266
          %s268 = scalar_lea.vmem %s240, %s267
          %s269 = ssub.s32 1, %s266
          %s270 = scalar_lea.vmem [#allocation2], %s269
          %s271 = sshll.u32 1, %s266
          %s272 = ssub.s32 %s271, 1
          loop: start=0, step=1, limit=1
          $region56: #{infersent_forward.3} parent=54 // loop_pre_header
            _
          $region57: #{infersent_forward.3} parent=54 // loop_header
            %s274 = sphi 0, %s278
            %p275 = scmp.ge.s32.totalorder %s274, 1
            %s279 = sphi %s268, %s268
            %s280 = sphi %s270, %s270
          $region58: #{infersent_forward.3} parent=54 // loop_header_branch
            %277 = sbr.rel (%p275) target = $region62
          $region59: #{infersent_forward.3} parent=54 // loop_body
            %v281 = vld [vmem:[%s279] sm:%s272]
            %282 = vst [vmem:[%s280] sm:%s272] %v281
          $region60: #{infersent_forward.3} parent=54 // loop_footer
            %s278 = sadd.s32 1, %s274
          $region61: #{infersent_forward.3} parent=54 // loop_footer_branch
            %273 = sbr.rel target = $region57
          $region62: #{infersent_forward.3} parent=54 // loop_exit
            _
        $region55: #{infersent_forward.3} parent=39 // pred_fallthru
          _
      $region40: #{infersent_forward.3} parent=35 // pred_fallthru
        _
      // Predicated region
      $region41: #{infersent_forward.3} parent=35 // pred_check
        %p246 = pneg %p242
      $region42: #{infersent_forward.3} parent=35 // pred_check_branch
        %248 = sbr.rel (%p246) target = $region44
      $region43: #{infersent_forward.3} parent=35 // pred_region
        %s249 = sshll.u32 1, 1
        %s250 = ssub.s32 %s249, 1
        loop: start=0, step=1, limit=1
        $region45: #{infersent_forward.3} parent=43 // loop_pre_header
          _
        $region46: #{infersent_forward.3} parent=43 // loop_header
          %s252 = sphi 0, %s256
          %p253 = scmp.ge.s32.totalorder %s252, 1
          %s257 = sphi %s240, %s240
          %s258 = sphi [#allocation2], [#allocation2]
        $region47: #{infersent_forward.3} parent=43 // loop_header_branch
          %255 = sbr.rel (%p253) target = $region51
        $region48: #{infersent_forward.3} parent=43 // loop_body
          %v259 = vld [vmem:[%s257] sm:%s250]
          %260 = vst [vmem:[%s258] sm:%s250] %v259
        $region49: #{infersent_forward.3} parent=43 // loop_footer
          %s256 = sadd.s32 1, %s252
        $region50: #{infersent_forward.3} parent=43 // loop_footer_branch
          %251 = sbr.rel target = $region46
        $region51: #{infersent_forward.3} parent=43 // loop_exit
          _
      $region44: #{infersent_forward.3} parent=35 // pred_fallthru
        _
      // Predicated region
      $region63: #{infersent_forward.3} parent=35 // pred_check
        _
      $region64: #{infersent_forward.3} parent=35 // pred_check_branch
        %285 = sbr.rel (0) target = $region66
      $region65: #{infersent_forward.3} parent=35 // pred_region
        %286 = vsyncadd [#allocation3], 16
      $region66: #{infersent_forward.3} parent=35 // pred_fallthru
        _
      %s287 = sadd.s32 %s238, 1
      %s288 = sld [smem:[#allocation5 + %s287]]
      %s289 = scalar_lea.vmem %s1, %s288
      %s290 = scalar_lea.vmem [#allocation2], 1
      %s291 = scalar_lea.sflag [#allocation3], 1
      %p293 = scmp.lt.u32.totalorder 1, 8
      %p294 = pneg %p293
      // Predicated region
      $region67: #{infersent_forward.3} parent=35 // pred_check
        _
      $region68: #{infersent_forward.3} parent=35 // pred_check_branch
        %296 = sbr.rel (%p293) target = $region70
      $region69: #{infersent_forward.3} parent=35 // pred_region
        %s312 = sand.u32 1, 7
        %p313 = scmp.eq.s32.totalorder %s312, 0
        %p314 = pneg %p313
        // Predicated region
        $region82: #{infersent_forward.3} parent=69 // pred_check
          _
        $region83: #{infersent_forward.3} parent=69 // pred_check_branch
          %316 = sbr.rel (%p313) target = $region85
        $region84: #{infersent_forward.3} parent=69 // pred_region
          %s317 = sand.u32 1, 7
          %s318 = ssub.s32 1, %s317
          %s319 = scalar_lea.vmem %s289, %s318
          %s320 = ssub.s32 1, %s317
          %s321 = scalar_lea.vmem %s290, %s320 [#allocation2]
          %s322 = sshll.u32 1, %s317
          %s323 = ssub.s32 %s322, 1
          loop: start=0, step=1, limit=1
          $region86: #{infersent_forward.3} parent=84 // loop_pre_header
            _
          $region87: #{infersent_forward.3} parent=84 // loop_header
            %s325 = sphi 0, %s329
            %p326 = scmp.ge.s32.totalorder %s325, 1
            %s330 = sphi %s319, %s319
            %s331 = sphi %s321, %s321
          $region88: #{infersent_forward.3} parent=84 // loop_header_branch
            %328 = sbr.rel (%p326) target = $region92
          $region89: #{infersent_forward.3} parent=84 // loop_body
            %v332 = vld [vmem:[%s330] sm:%s323]
            %333 = vst [vmem:[%s331] sm:%s323] %v332
          $region90: #{infersent_forward.3} parent=84 // loop_footer
            %s329 = sadd.s32 1, %s325
          $region91: #{infersent_forward.3} parent=84 // loop_footer_branch
            %324 = sbr.rel target = $region87
          $region92: #{infersent_forward.3} parent=84 // loop_exit
            _
        $region85: #{infersent_forward.3} parent=69 // pred_fallthru
          _
      $region70: #{infersent_forward.3} parent=35 // pred_fallthru
        _
      // Predicated region
      $region71: #{infersent_forward.3} parent=35 // pred_check
        %p297 = pneg %p293
      $region72: #{infersent_forward.3} parent=35 // pred_check_branch
        %299 = sbr.rel (%p297) target = $region74
      $region73: #{infersent_forward.3} parent=35 // pred_region
        %s300 = sshll.u32 1, 1
        %s301 = ssub.s32 %s300, 1
        loop: start=0, step=1, limit=1
        $region75: #{infersent_forward.3} parent=73 // loop_pre_header
          _
        $region76: #{infersent_forward.3} parent=73 // loop_header
          %s303 = sphi 0, %s307
          %p304 = scmp.ge.s32.totalorder %s303, 1
          %s308 = sphi %s289, %s289
          %s309 = sphi %s290, %s290
        $region77: #{infersent_forward.3} parent=73 // loop_header_branch
          %306 = sbr.rel (%p304) target = $region81
        $region78: #{infersent_forward.3} parent=73 // loop_body
          %v310 = vld [vmem:[%s308] sm:%s301]
          %311 = vst [vmem:[%s309] sm:%s301] %v310
        $region79: #{infersent_forward.3} parent=73 // loop_footer
          %s307 = sadd.s32 1, %s303
        $region80: #{infersent_forward.3} parent=73 // loop_footer_branch
          %302 = sbr.rel target = $region76
        $region81: #{infersent_forward.3} parent=73 // loop_exit
          _
      $region74: #{infersent_forward.3} parent=35 // pred_fallthru
        _
      // Predicated region
      $region93: #{infersent_forward.3} parent=35 // pred_check
        _
      $region94: #{infersent_forward.3} parent=35 // pred_check_branch
        %336 = sbr.rel (0) target = $region96
      $region95: #{infersent_forward.3} parent=35 // pred_region
        %337 = vsyncadd %s291, 16
      $region96: #{infersent_forward.3} parent=35 // pred_fallthru
        _
      %s338 = sadd.s32 %s238, 2
      %s339 = sld [smem:[#allocation5 + %s338]]
      %s340 = scalar_lea.vmem %s1, %s339
      %s341 = scalar_lea.vmem [#allocation2], 2
      %s342 = scalar_lea.sflag [#allocation3], 2
      %p344 = scmp.lt.u32.totalorder 1, 8
      %p345 = pneg %p344
      // Predicated region
      $region97: #{infersent_forward.3} parent=35 // pred_check
        _
      $region98: #{infersent_forward.3} parent=35 // pred_check_branch
        %347 = sbr.rel (%p344) target = $region100
      $region99: #{infersent_forward.3} parent=35 // pred_region
        %s363 = sand.u32 1, 7
        %p364 = scmp.eq.s32.totalorder %s363, 0
        %p365 = pneg %p364
        // Predicated region
        $region112: #{infersent_forward.3} parent=99 // pred_check
          _
        $region113: #{infersent_forward.3} parent=99 // pred_check_branch
          %367 = sbr.rel (%p364) target = $region115
        $region114: #{infersent_forward.3} parent=99 // pred_region
          %s368 = sand.u32 1, 7
          %s369 = ssub.s32 1, %s368
          %s370 = scalar_lea.vmem %s340, %s369
          %s371 = ssub.s32 1, %s368
          %s372 = scalar_lea.vmem %s341, %s371 [#allocation2]
          %s373 = sshll.u32 1, %s368
          %s374 = ssub.s32 %s373, 1
          loop: start=0, step=1, limit=1
          $region116: #{infersent_forward.3} parent=114 // loop_pre_header
            _
          $region117: #{infersent_forward.3} parent=114 // loop_header
            %s376 = sphi 0, %s380
            %p377 = scmp.ge.s32.totalorder %s376, 1
            %s381 = sphi %s370, %s370
            %s382 = sphi %s372, %s372
          $region118: #{infersent_forward.3} parent=114 // loop_header_branch
            %379 = sbr.rel (%p377) target = $region122
          $region119: #{infersent_forward.3} parent=114 // loop_body
            %v383 = vld [vmem:[%s381] sm:%s374]
            %384 = vst [vmem:[%s382] sm:%s374] %v383
          $region120: #{infersent_forward.3} parent=114 // loop_footer
            %s380 = sadd.s32 1, %s376
          $region121: #{infersent_forward.3} parent=114 // loop_footer_branch
            %375 = sbr.rel target = $region117
          $region122: #{infersent_forward.3} parent=114 // loop_exit
            _
        $region115: #{infersent_forward.3} parent=99 // pred_fallthru
          _
      $region100: #{infersent_forward.3} parent=35 // pred_fallthru
        _
      // Predicated region
      $region101: #{infersent_forward.3} parent=35 // pred_check
        %p348 = pneg %p344
      $region102: #{infersent_forward.3} parent=35 // pred_check_branch
        %350 = sbr.rel (%p348) target = $region104
      $region103: #{infersent_forward.3} parent=35 // pred_region
        %s351 = sshll.u32 1, 1
        %s352 = ssub.s32 %s351, 1
        loop: start=0, step=1, limit=1
        $region105: #{infersent_forward.3} parent=103 // loop_pre_header
          _
        $region106: #{infersent_forward.3} parent=103 // loop_header
          %s354 = sphi 0, %s358
          %p355 = scmp.ge.s32.totalorder %s354, 1
          %s359 = sphi %s340, %s340
          %s360 = sphi %s341, %s341
        $region107: #{infersent_forward.3} parent=103 // loop_header_branch
          %357 = sbr.rel (%p355) target = $region111
        $region108: #{infersent_forward.3} parent=103 // loop_body
          %v361 = vld [vmem:[%s359] sm:%s352]
          %362 = vst [vmem:[%s360] sm:%s352] %v361
        $region109: #{infersent_forward.3} parent=103 // loop_footer
          %s358 = sadd.s32 1, %s354
        $region110: #{infersent_forward.3} parent=103 // loop_footer_branch
          %353 = sbr.rel target = $region106
        $region111: #{infersent_forward.3} parent=103 // loop_exit
          _
      $region104: #{infersent_forward.3} parent=35 // pred_fallthru
        _
      // Predicated region
      $region123: #{infersent_forward.3} parent=35 // pred_check
        _
      $region124: #{infersent_forward.3} parent=35 // pred_check_branch
        %387 = sbr.rel (0) target = $region126
      $region125: #{infersent_forward.3} parent=35 // pred_region
        %388 = vsyncadd %s342, 16
      $region126: #{infersent_forward.3} parent=35 // pred_fallthru
        _
      %s389 = sadd.s32 %s238, 3
      %s390 = sld [smem:[#allocation5 + %s389]]
      %s391 = scalar_lea.vmem %s1, %s390
      %s392 = scalar_lea.vmem [#allocation2], 3
      %s393 = scalar_lea.sflag [#allocation3], 3
      %p395 = scmp.lt.u32.totalorder 1, 8
      %p396 = pneg %p395
      // Predicated region
      $region127: #{infersent_forward.3} parent=35 // pred_check
        _
      $region128: #{infersent_forward.3} parent=35 // pred_check_branch
        %398 = sbr.rel (%p395) target = $region130
      $region129: #{infersent_forward.3} parent=35 // pred_region
        %s414 = sand.u32 1, 7
        %p415 = scmp.eq.s32.totalorder %s414, 0
        %p416 = pneg %p415
        // Predicated region
        $region142: #{infersent_forward.3} parent=129 // pred_check
          _
        $region143: #{infersent_forward.3} parent=129 // pred_check_branch
          %418 = sbr.rel (%p415) target = $region145
        $region144: #{infersent_forward.3} parent=129 // pred_region
          %s419 = sand.u32 1, 7
          %s420 = ssub.s32 1, %s419
          %s421 = scalar_lea.vmem %s391, %s420
          %s422 = ssub.s32 1, %s419
          %s423 = scalar_lea.vmem %s392, %s422 [#allocation2]
          %s424 = sshll.u32 1, %s419
          %s425 = ssub.s32 %s424, 1
          loop: start=0, step=1, limit=1
          $region146: #{infersent_forward.3} parent=144 // loop_pre_header
            _
          $region147: #{infersent_forward.3} parent=144 // loop_header
            %s427 = sphi 0, %s431
            %p428 = scmp.ge.s32.totalorder %s427, 1
            %s432 = sphi %s421, %s421
            %s433 = sphi %s423, %s423
          $region148: #{infersent_forward.3} parent=144 // loop_header_branch
            %430 = sbr.rel (%p428) target = $region152
          $region149: #{infersent_forward.3} parent=144 // loop_body
            %v434 = vld [vmem:[%s432] sm:%s425]
            %435 = vst [vmem:[%s433] sm:%s425] %v434
          $region150: #{infersent_forward.3} parent=144 // loop_footer
            %s431 = sadd.s32 1, %s427
          $region151: #{infersent_forward.3} parent=144 // loop_footer_branch
            %426 = sbr.rel target = $region147
          $region152: #{infersent_forward.3} parent=144 // loop_exit
            _
        $region145: #{infersent_forward.3} parent=129 // pred_fallthru
          _
      $region130: #{infersent_forward.3} parent=35 // pred_fallthru
        _
      // Predicated region
      $region131: #{infersent_forward.3} parent=35 // pred_check
        %p399 = pneg %p395
      $region132: #{infersent_forward.3} parent=35 // pred_check_branch
        %401 = sbr.rel (%p399) target = $region134
      $region133: #{infersent_forward.3} parent=35 // pred_region
        %s402 = sshll.u32 1, 1
        %s403 = ssub.s32 %s402, 1
        loop: start=0, step=1, limit=1
        $region135: #{infersent_forward.3} parent=133 // loop_pre_header
          _
        $region136: #{infersent_forward.3} parent=133 // loop_header
          %s405 = sphi 0, %s409
          %p406 = scmp.ge.s32.totalorder %s405, 1
          %s410 = sphi %s391, %s391
          %s411 = sphi %s392, %s392
        $region137: #{infersent_forward.3} parent=133 // loop_header_branch
          %408 = sbr.rel (%p406) target = $region141
        $region138: #{infersent_forward.3} parent=133 // loop_body
          %v412 = vld [vmem:[%s410] sm:%s403]
          %413 = vst [vmem:[%s411] sm:%s403] %v412
        $region139: #{infersent_forward.3} parent=133 // loop_footer
          %s409 = sadd.s32 1, %s405
        $region140: #{infersent_forward.3} parent=133 // loop_footer_branch
          %404 = sbr.rel target = $region136
        $region141: #{infersent_forward.3} parent=133 // loop_exit
          _
      $region134: #{infersent_forward.3} parent=35 // pred_fallthru
        _
      // Predicated region
      $region153: #{infersent_forward.3} parent=35 // pred_check
        _
      $region154: #{infersent_forward.3} parent=35 // pred_check_branch
        %438 = sbr.rel (0) target = $region156
      $region155: #{infersent_forward.3} parent=35 // pred_region
        %439 = vsyncadd %s393, 16
      $region156: #{infersent_forward.3} parent=35 // pred_fallthru
        _
      %s440 = sadd.s32 %s238, 4
      %s441 = sld [smem:[#allocation5 + %s440]]
      %s442 = scalar_lea.vmem %s1, %s441
      %s443 = scalar_lea.vmem [#allocation2], 4
      %s444 = scalar_lea.sflag [#allocation3], 4
      %p446 = scmp.lt.u32.totalorder 1, 8
      %p447 = pneg %p446
      // Predicated region
      $region157: #{infersent_forward.3} parent=35 // pred_check
        _
      $region158: #{infersent_forward.3} parent=35 // pred_check_branch
        %449 = sbr.rel (%p446) target = $region160
      $region159: #{infersent_forward.3} parent=35 // pred_region
        %s465 = sand.u32 1, 7
        %p466 = scmp.eq.s32.totalorder %s465, 0
        %p467 = pneg %p466
        // Predicated region
        $region172: #{infersent_forward.3} parent=159 // pred_check
          _
        $region173: #{infersent_forward.3} parent=159 // pred_check_branch
          %469 = sbr.rel (%p466) target = $region175
        $region174: #{infersent_forward.3} parent=159 // pred_region
          %s470 = sand.u32 1, 7
          %s471 = ssub.s32 1, %s470
          %s472 = scalar_lea.vmem %s442, %s471
          %s473 = ssub.s32 1, %s470
          %s474 = scalar_lea.vmem %s443, %s473 [#allocation2]
          %s475 = sshll.u32 1, %s470
          %s476 = ssub.s32 %s475, 1
          loop: start=0, step=1, limit=1
          $region176: #{infersent_forward.3} parent=174 // loop_pre_header
            _
          $region177: #{infersent_forward.3} parent=174 // loop_header
            %s478 = sphi 0, %s482
            %p479 = scmp.ge.s32.totalorder %s478, 1
            %s483 = sphi %s472, %s472
            %s484 = sphi %s474, %s474
          $region178: #{infersent_forward.3} parent=174 // loop_header_branch
            %481 = sbr.rel (%p479) target = $region182
          $region179: #{infersent_forward.3} parent=174 // loop_body
            %v485 = vld [vmem:[%s483] sm:%s476]
            %486 = vst [vmem:[%s484] sm:%s476] %v485
          $region180: #{infersent_forward.3} parent=174 // loop_footer
            %s482 = sadd.s32 1, %s478
          $region181: #{infersent_forward.3} parent=174 // loop_footer_branch
            %477 = sbr.rel target = $region177
          $region182: #{infersent_forward.3} parent=174 // loop_exit
            _
        $region175: #{infersent_forward.3} parent=159 // pred_fallthru
          _
      $region160: #{infersent_forward.3} parent=35 // pred_fallthru
        _
      // Predicated region
      $region161: #{infersent_forward.3} parent=35 // pred_check
        %p450 = pneg %p446
      $region162: #{infersent_forward.3} parent=35 // pred_check_branch
        %452 = sbr.rel (%p450) target = $region164
      $region163: #{infersent_forward.3} parent=35 // pred_region
        %s453 = sshll.u32 1, 1
        %s454 = ssub.s32 %s453, 1
        loop: start=0, step=1, limit=1
        $region165: #{infersent_forward.3} parent=163 // loop_pre_header
          _
        $region166: #{infersent_forward.3} parent=163 // loop_header
          %s456 = sphi 0, %s460
          %p457 = scmp.ge.s32.totalorder %s456, 1
          %s461 = sphi %s442, %s442
          %s462 = sphi %s443, %s443
        $region167: #{infersent_forward.3} parent=163 // loop_header_branch
          %459 = sbr.rel (%p457) target = $region171
        $region168: #{infersent_forward.3} parent=163 // loop_body
          %v463 = vld [vmem:[%s461] sm:%s454]
          %464 = vst [vmem:[%s462] sm:%s454] %v463
        $region169: #{infersent_forward.3} parent=163 // loop_footer
          %s460 = sadd.s32 1, %s456
        $region170: #{infersent_forward.3} parent=163 // loop_footer_branch
          %455 = sbr.rel target = $region166
        $region171: #{infersent_forward.3} parent=163 // loop_exit
          _
      $region164: #{infersent_forward.3} parent=35 // pred_fallthru
        _
      // Predicated region
      $region183: #{infersent_forward.3} parent=35 // pred_check
        _
      $region184: #{infersent_forward.3} parent=35 // pred_check_branch
        %489 = sbr.rel (0) target = $region186
      $region185: #{infersent_forward.3} parent=35 // pred_region
        %490 = vsyncadd %s444, 16
      $region186: #{infersent_forward.3} parent=35 // pred_fallthru
        _
      %s491 = sadd.s32 %s238, 5
      %s492 = sld [smem:[#allocation5 + %s491]]
      %s493 = scalar_lea.vmem %s1, %s492
      %s494 = scalar_lea.vmem [#allocation2], 5
      %s495 = scalar_lea.sflag [#allocation3], 5
      %p497 = scmp.lt.u32.totalorder 1, 8
      %p498 = pneg %p497
      // Predicated region
      $region187: #{infersent_forward.3} parent=35 // pred_check
        _
      $region188: #{infersent_forward.3} parent=35 // pred_check_branch
        %500 = sbr.rel (%p497) target = $region190
      $region189: #{infersent_forward.3} parent=35 // pred_region
        %s516 = sand.u32 1, 7
        %p517 = scmp.eq.s32.totalorder %s516, 0
        %p518 = pneg %p517
        // Predicated region
        $region202: #{infersent_forward.3} parent=189 // pred_check
          _
        $region203: #{infersent_forward.3} parent=189 // pred_check_branch
          %520 = sbr.rel (%p517) target = $region205
        $region204: #{infersent_forward.3} parent=189 // pred_region
          %s521 = sand.u32 1, 7
          %s522 = ssub.s32 1, %s521
          %s523 = scalar_lea.vmem %s493, %s522
          %s524 = ssub.s32 1, %s521
          %s525 = scalar_lea.vmem %s494, %s524 [#allocation2]
          %s526 = sshll.u32 1, %s521
          %s527 = ssub.s32 %s526, 1
          loop: start=0, step=1, limit=1
          $region206: #{infersent_forward.3} parent=204 // loop_pre_header
            _
          $region207: #{infersent_forward.3} parent=204 // loop_header
            %s529 = sphi 0, %s533
            %p530 = scmp.ge.s32.totalorder %s529, 1
            %s534 = sphi %s523, %s523
            %s535 = sphi %s525, %s525
          $region208: #{infersent_forward.3} parent=204 // loop_header_branch
            %532 = sbr.rel (%p530) target = $region212
          $region209: #{infersent_forward.3} parent=204 // loop_body
            %v536 = vld [vmem:[%s534] sm:%s527]
            %537 = vst [vmem:[%s535] sm:%s527] %v536
          $region210: #{infersent_forward.3} parent=204 // loop_footer
            %s533 = sadd.s32 1, %s529
          $region211: #{infersent_forward.3} parent=204 // loop_footer_branch
            %528 = sbr.rel target = $region207
          $region212: #{infersent_forward.3} parent=204 // loop_exit
            _
        $region205: #{infersent_forward.3} parent=189 // pred_fallthru
          _
      $region190: #{infersent_forward.3} parent=35 // pred_fallthru
        _
      // Predicated region
      $region191: #{infersent_forward.3} parent=35 // pred_check
        %p501 = pneg %p497
      $region192: #{infersent_forward.3} parent=35 // pred_check_branch
        %503 = sbr.rel (%p501) target = $region194
      $region193: #{infersent_forward.3} parent=35 // pred_region
        %s504 = sshll.u32 1, 1
        %s505 = ssub.s32 %s504, 1
        loop: start=0, step=1, limit=1
        $region195: #{infersent_forward.3} parent=193 // loop_pre_header
          _
        $region196: #{infersent_forward.3} parent=193 // loop_header
          %s507 = sphi 0, %s511
          %p508 = scmp.ge.s32.totalorder %s507, 1
          %s512 = sphi %s493, %s493
          %s513 = sphi %s494, %s494
        $region197: #{infersent_forward.3} parent=193 // loop_header_branch
          %510 = sbr.rel (%p508) target = $region201
        $region198: #{infersent_forward.3} parent=193 // loop_body
          %v514 = vld [vmem:[%s512] sm:%s505]
          %515 = vst [vmem:[%s513] sm:%s505] %v514
        $region199: #{infersent_forward.3} parent=193 // loop_footer
          %s511 = sadd.s32 1, %s507
        $region200: #{infersent_forward.3} parent=193 // loop_footer_branch
          %506 = sbr.rel target = $region196
        $region201: #{infersent_forward.3} parent=193 // loop_exit
          _
      $region194: #{infersent_forward.3} parent=35 // pred_fallthru
        _
      // Predicated region
      $region213: #{infersent_forward.3} parent=35 // pred_check
        _
      $region214: #{infersent_forward.3} parent=35 // pred_check_branch
        %540 = sbr.rel (0) target = $region216
      $region215: #{infersent_forward.3} parent=35 // pred_region
        %541 = vsyncadd %s495, 16
      $region216: #{infersent_forward.3} parent=35 // pred_fallthru
        _
      %s542 = sadd.s32 %s238, 6
      %s543 = sld [smem:[#allocation5 + %s542]]
      %s544 = scalar_lea.vmem %s1, %s543
      %s545 = scalar_lea.vmem [#allocation2], 6
      %s546 = scalar_lea.sflag [#allocation3], 6
      %p548 = scmp.lt.u32.totalorder 1, 8
      %p549 = pneg %p548
      // Predicated region
      $region217: #{infersent_forward.3} parent=35 // pred_check
        _
      $region218: #{infersent_forward.3} parent=35 // pred_check_branch
        %551 = sbr.rel (%p548) target = $region220
      $region219: #{infersent_forward.3} parent=35 // pred_region
        %s567 = sand.u32 1, 7
        %p568 = scmp.eq.s32.totalorder %s567, 0
        %p569 = pneg %p568
        // Predicated region
        $region232: #{infersent_forward.3} parent=219 // pred_check
          _
        $region233: #{infersent_forward.3} parent=219 // pred_check_branch
          %571 = sbr.rel (%p568) target = $region235
        $region234: #{infersent_forward.3} parent=219 // pred_region
          %s572 = sand.u32 1, 7
          %s573 = ssub.s32 1, %s572
          %s574 = scalar_lea.vmem %s544, %s573
          %s575 = ssub.s32 1, %s572
          %s576 = scalar_lea.vmem %s545, %s575 [#allocation2]
          %s577 = sshll.u32 1, %s572
          %s578 = ssub.s32 %s577, 1
          loop: start=0, step=1, limit=1
          $region236: #{infersent_forward.3} parent=234 // loop_pre_header
            _
          $region237: #{infersent_forward.3} parent=234 // loop_header
            %s580 = sphi 0, %s584
            %p581 = scmp.ge.s32.totalorder %s580, 1
            %s585 = sphi %s574, %s574
            %s586 = sphi %s576, %s576
          $region238: #{infersent_forward.3} parent=234 // loop_header_branch
            %583 = sbr.rel (%p581) target = $region242
          $region239: #{infersent_forward.3} parent=234 // loop_body
            %v587 = vld [vmem:[%s585] sm:%s578]
            %588 = vst [vmem:[%s586] sm:%s578] %v587
          $region240: #{infersent_forward.3} parent=234 // loop_footer
            %s584 = sadd.s32 1, %s580
          $region241: #{infersent_forward.3} parent=234 // loop_footer_branch
            %579 = sbr.rel target = $region237
          $region242: #{infersent_forward.3} parent=234 // loop_exit
            _
        $region235: #{infersent_forward.3} parent=219 // pred_fallthru
          _
      $region220: #{infersent_forward.3} parent=35 // pred_fallthru
        _
      // Predicated region
      $region221: #{infersent_forward.3} parent=35 // pred_check
        %p552 = pneg %p548
      $region222: #{infersent_forward.3} parent=35 // pred_check_branch
        %554 = sbr.rel (%p552) target = $region224
      $region223: #{infersent_forward.3} parent=35 // pred_region
        %s555 = sshll.u32 1, 1
        %s556 = ssub.s32 %s555, 1
        loop: start=0, step=1, limit=1
        $region225: #{infersent_forward.3} parent=223 // loop_pre_header
          _
        $region226: #{infersent_forward.3} parent=223 // loop_header
          %s558 = sphi 0, %s562
          %p559 = scmp.ge.s32.totalorder %s558, 1
          %s563 = sphi %s544, %s544
          %s564 = sphi %s545, %s545
        $region227: #{infersent_forward.3} parent=223 // loop_header_branch
          %561 = sbr.rel (%p559) target = $region231
        $region228: #{infersent_forward.3} parent=223 // loop_body
          %v565 = vld [vmem:[%s563] sm:%s556]
          %566 = vst [vmem:[%s564] sm:%s556] %v565
        $region229: #{infersent_forward.3} parent=223 // loop_footer
          %s562 = sadd.s32 1, %s558
        $region230: #{infersent_forward.3} parent=223 // loop_footer_branch
          %557 = sbr.rel target = $region226
        $region231: #{infersent_forward.3} parent=223 // loop_exit
          _
      $region224: #{infersent_forward.3} parent=35 // pred_fallthru
        _
      // Predicated region
      $region243: #{infersent_forward.3} parent=35 // pred_check
        _
      $region244: #{infersent_forward.3} parent=35 // pred_check_branch
        %591 = sbr.rel (0) target = $region246
      $region245: #{infersent_forward.3} parent=35 // pred_region
        %592 = vsyncadd %s546, 16
      $region246: #{infersent_forward.3} parent=35 // pred_fallthru
        _
      %s593 = sadd.s32 %s238, 7
      %s594 = sld [smem:[#allocation5 + %s593]]
      %s595 = scalar_lea.vmem %s1, %s594
      %s596 = scalar_lea.vmem [#allocation2], 7
      %s597 = scalar_lea.sflag [#allocation3], 7
      %p599 = scmp.lt.u32.totalorder 1, 8
      %p600 = pneg %p599
      // Predicated region
      $region247: #{infersent_forward.3} parent=35 // pred_check
        _
      $region248: #{infersent_forward.3} parent=35 // pred_check_branch
        %602 = sbr.rel (%p599) target = $region250
      $region249: #{infersent_forward.3} parent=35 // pred_region
        %s618 = sand.u32 1, 7
        %p619 = scmp.eq.s32.totalorder %s618, 0
        %p620 = pneg %p619
        // Predicated region
        $region262: #{infersent_forward.3} parent=249 // pred_check
          _
        $region263: #{infersent_forward.3} parent=249 // pred_check_branch
          %622 = sbr.rel (%p619) target = $region265
        $region264: #{infersent_forward.3} parent=249 // pred_region
          %s623 = sand.u32 1, 7
          %s624 = ssub.s32 1, %s623
          %s625 = scalar_lea.vmem %s595, %s624
          %s626 = ssub.s32 1, %s623
          %s627 = scalar_lea.vmem %s596, %s626 [#allocation2]
          %s628 = sshll.u32 1, %s623
          %s629 = ssub.s32 %s628, 1
          loop: start=0, step=1, limit=1
          $region266: #{infersent_forward.3} parent=264 // loop_pre_header
            _
          $region267: #{infersent_forward.3} parent=264 // loop_header
            %s631 = sphi 0, %s635
            %p632 = scmp.ge.s32.totalorder %s631, 1
            %s636 = sphi %s625, %s625
            %s637 = sphi %s627, %s627
          $region268: #{infersent_forward.3} parent=264 // loop_header_branch
            %634 = sbr.rel (%p632) target = $region272
          $region269: #{infersent_forward.3} parent=264 // loop_body
            %v638 = vld [vmem:[%s636] sm:%s629]
            %639 = vst [vmem:[%s637] sm:%s629] %v638
          $region270: #{infersent_forward.3} parent=264 // loop_footer
            %s635 = sadd.s32 1, %s631
          $region271: #{infersent_forward.3} parent=264 // loop_footer_branch
            %630 = sbr.rel target = $region267
          $region272: #{infersent_forward.3} parent=264 // loop_exit
            _
        $region265: #{infersent_forward.3} parent=249 // pred_fallthru
          _
      $region250: #{infersent_forward.3} parent=35 // pred_fallthru
        _
      // Predicated region
      $region251: #{infersent_forward.3} parent=35 // pred_check
        %p603 = pneg %p599
      $region252: #{infersent_forward.3} parent=35 // pred_check_branch
        %605 = sbr.rel (%p603) target = $region254
      $region253: #{infersent_forward.3} parent=35 // pred_region
        %s606 = sshll.u32 1, 1
        %s607 = ssub.s32 %s606, 1
        loop: start=0, step=1, limit=1
        $region255: #{infersent_forward.3} parent=253 // loop_pre_header
          _
        $region256: #{infersent_forward.3} parent=253 // loop_header
          %s609 = sphi 0, %s613
          %p610 = scmp.ge.s32.totalorder %s609, 1
          %s614 = sphi %s595, %s595
          %s615 = sphi %s596, %s596
        $region257: #{infersent_forward.3} parent=253 // loop_header_branch
          %612 = sbr.rel (%p610) target = $region261
        $region258: #{infersent_forward.3} parent=253 // loop_body
          %v616 = vld [vmem:[%s614] sm:%s607]
          %617 = vst [vmem:[%s615] sm:%s607] %v616
        $region259: #{infersent_forward.3} parent=253 // loop_footer
          %s613 = sadd.s32 1, %s609
        $region260: #{infersent_forward.3} parent=253 // loop_footer_branch
          %608 = sbr.rel target = $region256
        $region261: #{infersent_forward.3} parent=253 // loop_exit
          _
      $region254: #{infersent_forward.3} parent=35 // pred_fallthru
        _
      // Predicated region
      $region273: #{infersent_forward.3} parent=35 // pred_check
        _
      $region274: #{infersent_forward.3} parent=35 // pred_check_branch
        %642 = sbr.rel (0) target = $region276
      $region275: #{infersent_forward.3} parent=35 // pred_region
        %643 = vsyncadd %s597, 16
      $region276: #{infersent_forward.3} parent=35 // pred_fallthru
        _
      %s644 = sadd.s32 %s238, 8
      %s645 = sld [smem:[#allocation5 + %s644]]
      %s646 = scalar_lea.vmem %s1, %s645
      %s647 = scalar_lea.vmem [#allocation2], 8
      %s648 = scalar_lea.sflag [#allocation3], 8
      %p650 = scmp.lt.u32.totalorder 1, 8
      %p651 = pneg %p650
      // Predicated region
      $region277: #{infersent_forward.3} parent=35 // pred_check
        _
      $region278: #{infersent_forward.3} parent=35 // pred_check_branch
        %653 = sbr.rel (%p650) target = $region280
      $region279: #{infersent_forward.3} parent=35 // pred_region
        %s669 = sand.u32 1, 7
        %p670 = scmp.eq.s32.totalorder %s669, 0
        %p671 = pneg %p670
        // Predicated region
        $region292: #{infersent_forward.3} parent=279 // pred_check
          _
        $region293: #{infersent_forward.3} parent=279 // pred_check_branch
          %673 = sbr.rel (%p670) target = $region295
        $region294: #{infersent_forward.3} parent=279 // pred_region
          %s674 = sand.u32 1, 7
          %s675 = ssub.s32 1, %s674
          %s676 = scalar_lea.vmem %s646, %s675
          %s677 = ssub.s32 1, %s674
          %s678 = scalar_lea.vmem %s647, %s677 [#allocation2]
          %s679 = sshll.u32 1, %s674
          %s680 = ssub.s32 %s679, 1
          loop: start=0, step=1, limit=1
          $region296: #{infersent_forward.3} parent=294 // loop_pre_header
            _
          $region297: #{infersent_forward.3} parent=294 // loop_header
            %s682 = sphi 0, %s686
            %p683 = scmp.ge.s32.totalorder %s682, 1
            %s687 = sphi %s676, %s676
            %s688 = sphi %s678, %s678
          $region298: #{infersent_forward.3} parent=294 // loop_header_branch
            %685 = sbr.rel (%p683) target = $region302
          $region299: #{infersent_forward.3} parent=294 // loop_body
            %v689 = vld [vmem:[%s687] sm:%s680]
            %690 = vst [vmem:[%s688] sm:%s680] %v689
          $region300: #{infersent_forward.3} parent=294 // loop_footer
            %s686 = sadd.s32 1, %s682
          $region301: #{infersent_forward.3} parent=294 // loop_footer_branch
            %681 = sbr.rel target = $region297
          $region302: #{infersent_forward.3} parent=294 // loop_exit
            _
        $region295: #{infersent_forward.3} parent=279 // pred_fallthru
          _
      $region280: #{infersent_forward.3} parent=35 // pred_fallthru
        _
      // Predicated region
      $region281: #{infersent_forward.3} parent=35 // pred_check
        %p654 = pneg %p650
      $region282: #{infersent_forward.3} parent=35 // pred_check_branch
        %656 = sbr.rel (%p654) target = $region284
      $region283: #{infersent_forward.3} parent=35 // pred_region
        %s657 = sshll.u32 1, 1
        %s658 = ssub.s32 %s657, 1
        loop: start=0, step=1, limit=1
        $region285: #{infersent_forward.3} parent=283 // loop_pre_header
          _
        $region286: #{infersent_forward.3} parent=283 // loop_header
          %s660 = sphi 0, %s664
          %p661 = scmp.ge.s32.totalorder %s660, 1
          %s665 = sphi %s646, %s646
          %s666 = sphi %s647, %s647
        $region287: #{infersent_forward.3} parent=283 // loop_header_branch
          %663 = sbr.rel (%p661) target = $region291
        $region288: #{infersent_forward.3} parent=283 // loop_body
          %v667 = vld [vmem:[%s665] sm:%s658]
          %668 = vst [vmem:[%s666] sm:%s658] %v667
        $region289: #{infersent_forward.3} parent=283 // loop_footer
          %s664 = sadd.s32 1, %s660
        $region290: #{infersent_forward.3} parent=283 // loop_footer_branch
          %659 = sbr.rel target = $region286
        $region291: #{infersent_forward.3} parent=283 // loop_exit
          _
      $region284: #{infersent_forward.3} parent=35 // pred_fallthru
        _
      // Predicated region
      $region303: #{infersent_forward.3} parent=35 // pred_check
        _
      $region304: #{infersent_forward.3} parent=35 // pred_check_branch
        %693 = sbr.rel (0) target = $region306
      $region305: #{infersent_forward.3} parent=35 // pred_region
        %694 = vsyncadd %s648, 16
      $region306: #{infersent_forward.3} parent=35 // pred_fallthru
        _
      %s695 = sadd.s32 %s238, 9
      %s696 = sld [smem:[#allocation5 + %s695]]
      %s697 = scalar_lea.vmem %s1, %s696
      %s698 = scalar_lea.vmem [#allocation2], 9
      %s699 = scalar_lea.sflag [#allocation3], 9
      %p701 = scmp.lt.u32.totalorder 1, 8
      %p702 = pneg %p701
      // Predicated region
      $region307: #{infersent_forward.3} parent=35 // pred_check
        _
      $region308: #{infersent_forward.3} parent=35 // pred_check_branch
        %704 = sbr.rel (%p701) target = $region310
      $region309: #{infersent_forward.3} parent=35 // pred_region
        %s720 = sand.u32 1, 7
        %p721 = scmp.eq.s32.totalorder %s720, 0
        %p722 = pneg %p721
        // Predicated region
        $region322: #{infersent_forward.3} parent=309 // pred_check
          _
        $region323: #{infersent_forward.3} parent=309 // pred_check_branch
          %724 = sbr.rel (%p721) target = $region325
        $region324: #{infersent_forward.3} parent=309 // pred_region
          %s725 = sand.u32 1, 7
          %s726 = ssub.s32 1, %s725
          %s727 = scalar_lea.vmem %s697, %s726
          %s728 = ssub.s32 1, %s725
          %s729 = scalar_lea.vmem %s698, %s728 [#allocation2]
          %s730 = sshll.u32 1, %s725
          %s731 = ssub.s32 %s730, 1
          loop: start=0, step=1, limit=1
          $region326: #{infersent_forward.3} parent=324 // loop_pre_header
            _
          $region327: #{infersent_forward.3} parent=324 // loop_header
            %s733 = sphi 0, %s737
            %p734 = scmp.ge.s32.totalorder %s733, 1
            %s738 = sphi %s727, %s727
            %s739 = sphi %s729, %s729
          $region328: #{infersent_forward.3} parent=324 // loop_header_branch
            %736 = sbr.rel (%p734) target = $region332
          $region329: #{infersent_forward.3} parent=324 // loop_body
            %v740 = vld [vmem:[%s738] sm:%s731]
            %741 = vst [vmem:[%s739] sm:%s731] %v740
          $region330: #{infersent_forward.3} parent=324 // loop_footer
            %s737 = sadd.s32 1, %s733
          $region331: #{infersent_forward.3} parent=324 // loop_footer_branch
            %732 = sbr.rel target = $region327
          $region332: #{infersent_forward.3} parent=324 // loop_exit
            _
        $region325: #{infersent_forward.3} parent=309 // pred_fallthru
          _
      $region310: #{infersent_forward.3} parent=35 // pred_fallthru
        _
      // Predicated region
      $region311: #{infersent_forward.3} parent=35 // pred_check
        %p705 = pneg %p701
      $region312: #{infersent_forward.3} parent=35 // pred_check_branch
        %707 = sbr.rel (%p705) target = $region314
      $region313: #{infersent_forward.3} parent=35 // pred_region
        %s708 = sshll.u32 1, 1
        %s709 = ssub.s32 %s708, 1
        loop: start=0, step=1, limit=1
        $region315: #{infersent_forward.3} parent=313 // loop_pre_header
          _
        $region316: #{infersent_forward.3} parent=313 // loop_header
          %s711 = sphi 0, %s715
          %p712 = scmp.ge.s32.totalorder %s711, 1
          %s716 = sphi %s697, %s697
          %s717 = sphi %s698, %s698
        $region317: #{infersent_forward.3} parent=313 // loop_header_branch
          %714 = sbr.rel (%p712) target = $region321
        $region318: #{infersent_forward.3} parent=313 // loop_body
          %v718 = vld [vmem:[%s716] sm:%s709]
          %719 = vst [vmem:[%s717] sm:%s709] %v718
        $region319: #{infersent_forward.3} parent=313 // loop_footer
          %s715 = sadd.s32 1, %s711
        $region320: #{infersent_forward.3} parent=313 // loop_footer_branch
          %710 = sbr.rel target = $region316
        $region321: #{infersent_forward.3} parent=313 // loop_exit
          _
      $region314: #{infersent_forward.3} parent=35 // pred_fallthru
        _
      // Predicated region
      $region333: #{infersent_forward.3} parent=35 // pred_check
        _
      $region334: #{infersent_forward.3} parent=35 // pred_check_branch
        %744 = sbr.rel (0) target = $region336
      $region335: #{infersent_forward.3} parent=35 // pred_region
        %745 = vsyncadd %s699, 16
      $region336: #{infersent_forward.3} parent=35 // pred_fallthru
        _
      %s746 = sadd.s32 %s238, 10
      %s747 = sld [smem:[#allocation5 + %s746]]
      %s748 = scalar_lea.vmem %s1, %s747
      %s749 = scalar_lea.vmem [#allocation2], 10
      %s750 = scalar_lea.sflag [#allocation3], 10
      %p752 = scmp.lt.u32.totalorder 1, 8
      %p753 = pneg %p752
      // Predicated region
      $region337: #{infersent_forward.3} parent=35 // pred_check
        _
      $region338: #{infersent_forward.3} parent=35 // pred_check_branch
        %755 = sbr.rel (%p752) target = $region340
      $region339: #{infersent_forward.3} parent=35 // pred_region
        %s771 = sand.u32 1, 7
        %p772 = scmp.eq.s32.totalorder %s771, 0
        %p773 = pneg %p772
        // Predicated region
        $region352: #{infersent_forward.3} parent=339 // pred_check
          _
        $region353: #{infersent_forward.3} parent=339 // pred_check_branch
          %775 = sbr.rel (%p772) target = $region355
        $region354: #{infersent_forward.3} parent=339 // pred_region
          %s776 = sand.u32 1, 7
          %s777 = ssub.s32 1, %s776
          %s778 = scalar_lea.vmem %s748, %s777
          %s779 = ssub.s32 1, %s776
          %s780 = scalar_lea.vmem %s749, %s779 [#allocation2]
          %s781 = sshll.u32 1, %s776
          %s782 = ssub.s32 %s781, 1
          loop: start=0, step=1, limit=1
          $region356: #{infersent_forward.3} parent=354 // loop_pre_header
            _
          $region357: #{infersent_forward.3} parent=354 // loop_header
            %s784 = sphi 0, %s788
            %p785 = scmp.ge.s32.totalorder %s784, 1
            %s789 = sphi %s778, %s778
            %s790 = sphi %s780, %s780
          $region358: #{infersent_forward.3} parent=354 // loop_header_branch
            %787 = sbr.rel (%p785) target = $region362
          $region359: #{infersent_forward.3} parent=354 // loop_body
            %v791 = vld [vmem:[%s789] sm:%s782]
            %792 = vst [vmem:[%s790] sm:%s782] %v791
          $region360: #{infersent_forward.3} parent=354 // loop_footer
            %s788 = sadd.s32 1, %s784
          $region361: #{infersent_forward.3} parent=354 // loop_footer_branch
            %783 = sbr.rel target = $region357
          $region362: #{infersent_forward.3} parent=354 // loop_exit
            _
        $region355: #{infersent_forward.3} parent=339 // pred_fallthru
          _
      $region340: #{infersent_forward.3} parent=35 // pred_fallthru
        _
      // Predicated region
      $region341: #{infersent_forward.3} parent=35 // pred_check
        %p756 = pneg %p752
      $region342: #{infersent_forward.3} parent=35 // pred_check_branch
        %758 = sbr.rel (%p756) target = $region344
      $region343: #{infersent_forward.3} parent=35 // pred_region
        %s759 = sshll.u32 1, 1
        %s760 = ssub.s32 %s759, 1
        loop: start=0, step=1, limit=1
        $region345: #{infersent_forward.3} parent=343 // loop_pre_header
          _
        $region346: #{infersent_forward.3} parent=343 // loop_header
          %s762 = sphi 0, %s766
          %p763 = scmp.ge.s32.totalorder %s762, 1
          %s767 = sphi %s748, %s748
          %s768 = sphi %s749, %s749
        $region347: #{infersent_forward.3} parent=343 // loop_header_branch
          %765 = sbr.rel (%p763) target = $region351
        $region348: #{infersent_forward.3} parent=343 // loop_body
          %v769 = vld [vmem:[%s767] sm:%s760]
          %770 = vst [vmem:[%s768] sm:%s760] %v769
        $region349: #{infersent_forward.3} parent=343 // loop_footer
          %s766 = sadd.s32 1, %s762
        $region350: #{infersent_forward.3} parent=343 // loop_footer_branch
          %761 = sbr.rel target = $region346
        $region351: #{infersent_forward.3} parent=343 // loop_exit
          _
      $region344: #{infersent_forward.3} parent=35 // pred_fallthru
        _
      // Predicated region
      $region363: #{infersent_forward.3} parent=35 // pred_check
        _
      $region364: #{infersent_forward.3} parent=35 // pred_check_branch
        %795 = sbr.rel (0) target = $region366
      $region365: #{infersent_forward.3} parent=35 // pred_region
        %796 = vsyncadd %s750, 16
      $region366: #{infersent_forward.3} parent=35 // pred_fallthru
        _
      %s797 = sadd.s32 %s238, 11
      %s798 = sld [smem:[#allocation5 + %s797]]
      %s799 = scalar_lea.vmem %s1, %s798
      %s800 = scalar_lea.vmem [#allocation2], 11
      %s801 = scalar_lea.sflag [#allocation3], 11
      %p803 = scmp.lt.u32.totalorder 1, 8
      %p804 = pneg %p803
      // Predicated region
      $region367: #{infersent_forward.3} parent=35 // pred_check
        _
      $region368: #{infersent_forward.3} parent=35 // pred_check_branch
        %806 = sbr.rel (%p803) target = $region370
      $region369: #{infersent_forward.3} parent=35 // pred_region
        %s822 = sand.u32 1, 7
        %p823 = scmp.eq.s32.totalorder %s822, 0
        %p824 = pneg %p823
        // Predicated region
        $region382: #{infersent_forward.3} parent=369 // pred_check
          _
        $region383: #{infersent_forward.3} parent=369 // pred_check_branch
          %826 = sbr.rel (%p823) target = $region385
        $region384: #{infersent_forward.3} parent=369 // pred_region
          %s827 = sand.u32 1, 7
          %s828 = ssub.s32 1, %s827
          %s829 = scalar_lea.vmem %s799, %s828
          %s830 = ssub.s32 1, %s827
          %s831 = scalar_lea.vmem %s800, %s830 [#allocation2]
          %s832 = sshll.u32 1, %s827
          %s833 = ssub.s32 %s832, 1
          loop: start=0, step=1, limit=1
          $region386: #{infersent_forward.3} parent=384 // loop_pre_header
            _
          $region387: #{infersent_forward.3} parent=384 // loop_header
            %s835 = sphi 0, %s839
            %p836 = scmp.ge.s32.totalorder %s835, 1
            %s840 = sphi %s829, %s829
            %s841 = sphi %s831, %s831
          $region388: #{infersent_forward.3} parent=384 // loop_header_branch
            %838 = sbr.rel (%p836) target = $region392
          $region389: #{infersent_forward.3} parent=384 // loop_body
            %v842 = vld [vmem:[%s840] sm:%s833]
            %843 = vst [vmem:[%s841] sm:%s833] %v842
          $region390: #{infersent_forward.3} parent=384 // loop_footer
            %s839 = sadd.s32 1, %s835
          $region391: #{infersent_forward.3} parent=384 // loop_footer_branch
            %834 = sbr.rel target = $region387
          $region392: #{infersent_forward.3} parent=384 // loop_exit
            _
        $region385: #{infersent_forward.3} parent=369 // pred_fallthru
          _
      $region370: #{infersent_forward.3} parent=35 // pred_fallthru
        _
      // Predicated region
      $region371: #{infersent_forward.3} parent=35 // pred_check
        %p807 = pneg %p803
      $region372: #{infersent_forward.3} parent=35 // pred_check_branch
        %809 = sbr.rel (%p807) target = $region374
      $region373: #{infersent_forward.3} parent=35 // pred_region
        %s810 = sshll.u32 1, 1
        %s811 = ssub.s32 %s810, 1
        loop: start=0, step=1, limit=1
        $region375: #{infersent_forward.3} parent=373 // loop_pre_header
          _
        $region376: #{infersent_forward.3} parent=373 // loop_header
          %s813 = sphi 0, %s817
          %p814 = scmp.ge.s32.totalorder %s813, 1
          %s818 = sphi %s799, %s799
          %s819 = sphi %s800, %s800
        $region377: #{infersent_forward.3} parent=373 // loop_header_branch
          %816 = sbr.rel (%p814) target = $region381
        $region378: #{infersent_forward.3} parent=373 // loop_body
          %v820 = vld [vmem:[%s818] sm:%s811]
          %821 = vst [vmem:[%s819] sm:%s811] %v820
        $region379: #{infersent_forward.3} parent=373 // loop_footer
          %s817 = sadd.s32 1, %s813
        $region380: #{infersent_forward.3} parent=373 // loop_footer_branch
          %812 = sbr.rel target = $region376
        $region381: #{infersent_forward.3} parent=373 // loop_exit
          _
      $region374: #{infersent_forward.3} parent=35 // pred_fallthru
        _
      // Predicated region
      $region393: #{infersent_forward.3} parent=35 // pred_check
        _
      $region394: #{infersent_forward.3} parent=35 // pred_check_branch
        %846 = sbr.rel (0) target = $region396
      $region395: #{infersent_forward.3} parent=35 // pred_region
        %847 = vsyncadd %s801, 16
      $region396: #{infersent_forward.3} parent=35 // pred_fallthru
        _
      %s848 = sadd.s32 %s238, 12
      %s849 = sld [smem:[#allocation5 + %s848]]
      %s850 = scalar_lea.vmem %s1, %s849
      %s851 = scalar_lea.vmem [#allocation2], 12
      %s852 = scalar_lea.sflag [#allocation3], 12
      %p854 = scmp.lt.u32.totalorder 1, 8
      %p855 = pneg %p854
      // Predicated region
      $region397: #{infersent_forward.3} parent=35 // pred_check
        _
      $region398: #{infersent_forward.3} parent=35 // pred_check_branch
        %857 = sbr.rel (%p854) target = $region400
      $region399: #{infersent_forward.3} parent=35 // pred_region
        %s873 = sand.u32 1, 7
        %p874 = scmp.eq.s32.totalorder %s873, 0
        %p875 = pneg %p874
        // Predicated region
        $region412: #{infersent_forward.3} parent=399 // pred_check
          _
        $region413: #{infersent_forward.3} parent=399 // pred_check_branch
          %877 = sbr.rel (%p874) target = $region415
        $region414: #{infersent_forward.3} parent=399 // pred_region
          %s878 = sand.u32 1, 7
          %s879 = ssub.s32 1, %s878
          %s880 = scalar_lea.vmem %s850, %s879
          %s881 = ssub.s32 1, %s878
          %s882 = scalar_lea.vmem %s851, %s881 [#allocation2]
          %s883 = sshll.u32 1, %s878
          %s884 = ssub.s32 %s883, 1
          loop: start=0, step=1, limit=1
          $region416: #{infersent_forward.3} parent=414 // loop_pre_header
            _
          $region417: #{infersent_forward.3} parent=414 // loop_header
            %s886 = sphi 0, %s890
            %p887 = scmp.ge.s32.totalorder %s886, 1
            %s891 = sphi %s880, %s880
            %s892 = sphi %s882, %s882
          $region418: #{infersent_forward.3} parent=414 // loop_header_branch
            %889 = sbr.rel (%p887) target = $region422
          $region419: #{infersent_forward.3} parent=414 // loop_body
            %v893 = vld [vmem:[%s891] sm:%s884]
            %894 = vst [vmem:[%s892] sm:%s884] %v893
          $region420: #{infersent_forward.3} parent=414 // loop_footer
            %s890 = sadd.s32 1, %s886
          $region421: #{infersent_forward.3} parent=414 // loop_footer_branch
            %885 = sbr.rel target = $region417
          $region422: #{infersent_forward.3} parent=414 // loop_exit
            _
        $region415: #{infersent_forward.3} parent=399 // pred_fallthru
          _
      $region400: #{infersent_forward.3} parent=35 // pred_fallthru
        _
      // Predicated region
      $region401: #{infersent_forward.3} parent=35 // pred_check
        %p858 = pneg %p854
      $region402: #{infersent_forward.3} parent=35 // pred_check_branch
        %860 = sbr.rel (%p858) target = $region404
      $region403: #{infersent_forward.3} parent=35 // pred_region
        %s861 = sshll.u32 1, 1
        %s862 = ssub.s32 %s861, 1
        loop: start=0, step=1, limit=1
        $region405: #{infersent_forward.3} parent=403 // loop_pre_header
          _
        $region406: #{infersent_forward.3} parent=403 // loop_header
          %s864 = sphi 0, %s868
          %p865 = scmp.ge.s32.totalorder %s864, 1
          %s869 = sphi %s850, %s850
          %s870 = sphi %s851, %s851
        $region407: #{infersent_forward.3} parent=403 // loop_header_branch
          %867 = sbr.rel (%p865) target = $region411
        $region408: #{infersent_forward.3} parent=403 // loop_body
          %v871 = vld [vmem:[%s869] sm:%s862]
          %872 = vst [vmem:[%s870] sm:%s862] %v871
        $region409: #{infersent_forward.3} parent=403 // loop_footer
          %s868 = sadd.s32 1, %s864
        $region410: #{infersent_forward.3} parent=403 // loop_footer_branch
          %863 = sbr.rel target = $region406
        $region411: #{infersent_forward.3} parent=403 // loop_exit
          _
      $region404: #{infersent_forward.3} parent=35 // pred_fallthru
        _
      // Predicated region
      $region423: #{infersent_forward.3} parent=35 // pred_check
        _
      $region424: #{infersent_forward.3} parent=35 // pred_check_branch
        %897 = sbr.rel (0) target = $region426
      $region425: #{infersent_forward.3} parent=35 // pred_region
        %898 = vsyncadd %s852, 16
      $region426: #{infersent_forward.3} parent=35 // pred_fallthru
        _
      %s899 = sadd.s32 %s238, 13
      %s900 = sld [smem:[#allocation5 + %s899]]
      %s901 = scalar_lea.vmem %s1, %s900
      %s902 = scalar_lea.vmem [#allocation2], 13
      %s903 = scalar_lea.sflag [#allocation3], 13
      %p905 = scmp.lt.u32.totalorder 1, 8
      %p906 = pneg %p905
      // Predicated region
      $region427: #{infersent_forward.3} parent=35 // pred_check
        _
      $region428: #{infersent_forward.3} parent=35 // pred_check_branch
        %908 = sbr.rel (%p905) target = $region430
      $region429: #{infersent_forward.3} parent=35 // pred_region
        %s924 = sand.u32 1, 7
        %p925 = scmp.eq.s32.totalorder %s924, 0
        %p926 = pneg %p925
        // Predicated region
        $region442: #{infersent_forward.3} parent=429 // pred_check
          _
        $region443: #{infersent_forward.3} parent=429 // pred_check_branch
          %928 = sbr.rel (%p925) target = $region445
        $region444: #{infersent_forward.3} parent=429 // pred_region
          %s929 = sand.u32 1, 7
          %s930 = ssub.s32 1, %s929
          %s931 = scalar_lea.vmem %s901, %s930
          %s932 = ssub.s32 1, %s929
          %s933 = scalar_lea.vmem %s902, %s932 [#allocation2]
          %s934 = sshll.u32 1, %s929
          %s935 = ssub.s32 %s934, 1
          loop: start=0, step=1, limit=1
          $region446: #{infersent_forward.3} parent=444 // loop_pre_header
            _
          $region447: #{infersent_forward.3} parent=444 // loop_header
            %s937 = sphi 0, %s941
            %p938 = scmp.ge.s32.totalorder %s937, 1
            %s942 = sphi %s931, %s931
            %s943 = sphi %s933, %s933
          $region448: #{infersent_forward.3} parent=444 // loop_header_branch
            %940 = sbr.rel (%p938) target = $region452
          $region449: #{infersent_forward.3} parent=444 // loop_body
            %v944 = vld [vmem:[%s942] sm:%s935]
            %945 = vst [vmem:[%s943] sm:%s935] %v944
          $region450: #{infersent_forward.3} parent=444 // loop_footer
            %s941 = sadd.s32 1, %s937
          $region451: #{infersent_forward.3} parent=444 // loop_footer_branch
            %936 = sbr.rel target = $region447
          $region452: #{infersent_forward.3} parent=444 // loop_exit
            _
        $region445: #{infersent_forward.3} parent=429 // pred_fallthru
          _
      $region430: #{infersent_forward.3} parent=35 // pred_fallthru
        _
      // Predicated region
      $region431: #{infersent_forward.3} parent=35 // pred_check
        %p909 = pneg %p905
      $region432: #{infersent_forward.3} parent=35 // pred_check_branch
        %911 = sbr.rel (%p909) target = $region434
      $region433: #{infersent_forward.3} parent=35 // pred_region
        %s912 = sshll.u32 1, 1
        %s913 = ssub.s32 %s912, 1
        loop: start=0, step=1, limit=1
        $region435: #{infersent_forward.3} parent=433 // loop_pre_header
          _
        $region436: #{infersent_forward.3} parent=433 // loop_header
          %s915 = sphi 0, %s919
          %p916 = scmp.ge.s32.totalorder %s915, 1
          %s920 = sphi %s901, %s901
          %s921 = sphi %s902, %s902
        $region437: #{infersent_forward.3} parent=433 // loop_header_branch
          %918 = sbr.rel (%p916) target = $region441
        $region438: #{infersent_forward.3} parent=433 // loop_body
          %v922 = vld [vmem:[%s920] sm:%s913]
          %923 = vst [vmem:[%s921] sm:%s913] %v922
        $region439: #{infersent_forward.3} parent=433 // loop_footer
          %s919 = sadd.s32 1, %s915
        $region440: #{infersent_forward.3} parent=433 // loop_footer_branch
          %914 = sbr.rel target = $region436
        $region441: #{infersent_forward.3} parent=433 // loop_exit
          _
      $region434: #{infersent_forward.3} parent=35 // pred_fallthru
        _
      // Predicated region
      $region453: #{infersent_forward.3} parent=35 // pred_check
        _
      $region454: #{infersent_forward.3} parent=35 // pred_check_branch
        %948 = sbr.rel (0) target = $region456
      $region455: #{infersent_forward.3} parent=35 // pred_region
        %949 = vsyncadd %s903, 16
      $region456: #{infersent_forward.3} parent=35 // pred_fallthru
        _
      %s950 = sadd.s32 %s238, 14
      %s951 = sld [smem:[#allocation5 + %s950]]
      %s952 = scalar_lea.vmem %s1, %s951
      %s953 = scalar_lea.vmem [#allocation2], 14
      %s954 = scalar_lea.sflag [#allocation3], 14
      %p956 = scmp.lt.u32.totalorder 1, 8
      %p957 = pneg %p956
      // Predicated region
      $region457: #{infersent_forward.3} parent=35 // pred_check
        _
      $region458: #{infersent_forward.3} parent=35 // pred_check_branch
        %959 = sbr.rel (%p956) target = $region460
      $region459: #{infersent_forward.3} parent=35 // pred_region
        %s975 = sand.u32 1, 7
        %p976 = scmp.eq.s32.totalorder %s975, 0
        %p977 = pneg %p976
        // Predicated region
        $region472: #{infersent_forward.3} parent=459 // pred_check
          _
        $region473: #{infersent_forward.3} parent=459 // pred_check_branch
          %979 = sbr.rel (%p976) target = $region475
        $region474: #{infersent_forward.3} parent=459 // pred_region
          %s980 = sand.u32 1, 7
          %s981 = ssub.s32 1, %s980
          %s982 = scalar_lea.vmem %s952, %s981
          %s983 = ssub.s32 1, %s980
          %s984 = scalar_lea.vmem %s953, %s983 [#allocation2]
          %s985 = sshll.u32 1, %s980
          %s986 = ssub.s32 %s985, 1
          loop: start=0, step=1, limit=1
          $region476: #{infersent_forward.3} parent=474 // loop_pre_header
            _
          $region477: #{infersent_forward.3} parent=474 // loop_header
            %s988 = sphi 0, %s992
            %p989 = scmp.ge.s32.totalorder %s988, 1
            %s993 = sphi %s982, %s982
            %s994 = sphi %s984, %s984
          $region478: #{infersent_forward.3} parent=474 // loop_header_branch
            %991 = sbr.rel (%p989) target = $region482
          $region479: #{infersent_forward.3} parent=474 // loop_body
            %v995 = vld [vmem:[%s993] sm:%s986]
            %996 = vst [vmem:[%s994] sm:%s986] %v995
          $region480: #{infersent_forward.3} parent=474 // loop_footer
            %s992 = sadd.s32 1, %s988
          $region481: #{infersent_forward.3} parent=474 // loop_footer_branch
            %987 = sbr.rel target = $region477
          $region482: #{infersent_forward.3} parent=474 // loop_exit
            _
        $region475: #{infersent_forward.3} parent=459 // pred_fallthru
          _
      $region460: #{infersent_forward.3} parent=35 // pred_fallthru
        _
      // Predicated region
      $region461: #{infersent_forward.3} parent=35 // pred_check
        %p960 = pneg %p956
      $region462: #{infersent_forward.3} parent=35 // pred_check_branch
        %962 = sbr.rel (%p960) target = $region464
      $region463: #{infersent_forward.3} parent=35 // pred_region
        %s963 = sshll.u32 1, 1
        %s964 = ssub.s32 %s963, 1
        loop: start=0, step=1, limit=1
        $region465: #{infersent_forward.3} parent=463 // loop_pre_header
          _
        $region466: #{infersent_forward.3} parent=463 // loop_header
          %s966 = sphi 0, %s970
          %p967 = scmp.ge.s32.totalorder %s966, 1
          %s971 = sphi %s952, %s952
          %s972 = sphi %s953, %s953
        $region467: #{infersent_forward.3} parent=463 // loop_header_branch
          %969 = sbr.rel (%p967) target = $region471
        $region468: #{infersent_forward.3} parent=463 // loop_body
          %v973 = vld [vmem:[%s971] sm:%s964]
          %974 = vst [vmem:[%s972] sm:%s964] %v973
        $region469: #{infersent_forward.3} parent=463 // loop_footer
          %s970 = sadd.s32 1, %s966
        $region470: #{infersent_forward.3} parent=463 // loop_footer_branch
          %965 = sbr.rel target = $region466
        $region471: #{infersent_forward.3} parent=463 // loop_exit
          _
      $region464: #{infersent_forward.3} parent=35 // pred_fallthru
        _
      // Predicated region
      $region483: #{infersent_forward.3} parent=35 // pred_check
        _
      $region484: #{infersent_forward.3} parent=35 // pred_check_branch
        %999 = sbr.rel (0) target = $region486
      $region485: #{infersent_forward.3} parent=35 // pred_region
        %1000 = vsyncadd %s954, 16
      $region486: #{infersent_forward.3} parent=35 // pred_fallthru
        _
      %s1001 = sadd.s32 %s238, 15
      %s1002 = sld [smem:[#allocation5 + %s1001]]
      %s1003 = scalar_lea.vmem %s1, %s1002
      %s1004 = scalar_lea.vmem [#allocation2], 15
      %s1005 = scalar_lea.sflag [#allocation3], 15
      %p1007 = scmp.lt.u32.totalorder 1, 8
      %p1008 = pneg %p1007
      // Predicated region
      $region487: #{infersent_forward.3} parent=35 // pred_check
        _
      $region488: #{infersent_forward.3} parent=35 // pred_check_branch
        %1010 = sbr.rel (%p1007) target = $region490
      $region489: #{infersent_forward.3} parent=35 // pred_region
        %s1026 = sand.u32 1, 7
        %p1027 = scmp.eq.s32.totalorder %s1026, 0
        %p1028 = pneg %p1027
        // Predicated region
        $region502: #{infersent_forward.3} parent=489 // pred_check
          _
        $region503: #{infersent_forward.3} parent=489 // pred_check_branch
          %1030 = sbr.rel (%p1027) target = $region505
        $region504: #{infersent_forward.3} parent=489 // pred_region
          %s1031 = sand.u32 1, 7
          %s1032 = ssub.s32 1, %s1031
          %s1033 = scalar_lea.vmem %s1003, %s1032
          %s1034 = ssub.s32 1, %s1031
          %s1035 = scalar_lea.vmem %s1004, %s1034 [#allocation2]
          %s1036 = sshll.u32 1, %s1031
          %s1037 = ssub.s32 %s1036, 1
          loop: start=0, step=1, limit=1
          $region506: #{infersent_forward.3} parent=504 // loop_pre_header
            _
          $region507: #{infersent_forward.3} parent=504 // loop_header
            %s1039 = sphi 0, %s1043
            %p1040 = scmp.ge.s32.totalorder %s1039, 1
            %s1044 = sphi %s1033, %s1033
            %s1045 = sphi %s1035, %s1035
          $region508: #{infersent_forward.3} parent=504 // loop_header_branch
            %1042 = sbr.rel (%p1040) target = $region512
          $region509: #{infersent_forward.3} parent=504 // loop_body
            %v1046 = vld [vmem:[%s1044] sm:%s1037]
            %1047 = vst [vmem:[%s1045] sm:%s1037] %v1046
          $region510: #{infersent_forward.3} parent=504 // loop_footer
            %s1043 = sadd.s32 1, %s1039
          $region511: #{infersent_forward.3} parent=504 // loop_footer_branch
            %1038 = sbr.rel target = $region507
          $region512: #{infersent_forward.3} parent=504 // loop_exit
            _
        $region505: #{infersent_forward.3} parent=489 // pred_fallthru
          _
      $region490: #{infersent_forward.3} parent=35 // pred_fallthru
        _
      // Predicated region
      $region491: #{infersent_forward.3} parent=35 // pred_check
        %p1011 = pneg %p1007
      $region492: #{infersent_forward.3} parent=35 // pred_check_branch
        %1013 = sbr.rel (%p1011) target = $region494
      $region493: #{infersent_forward.3} parent=35 // pred_region
        %s1014 = sshll.u32 1, 1
        %s1015 = ssub.s32 %s1014, 1
        loop: start=0, step=1, limit=1
        $region495: #{infersent_forward.3} parent=493 // loop_pre_header
          _
        $region496: #{infersent_forward.3} parent=493 // loop_header
          %s1017 = sphi 0, %s1021
          %p1018 = scmp.ge.s32.totalorder %s1017, 1
          %s1022 = sphi %s1003, %s1003
          %s1023 = sphi %s1004, %s1004
        $region497: #{infersent_forward.3} parent=493 // loop_header_branch
          %1020 = sbr.rel (%p1018) target = $region501
        $region498: #{infersent_forward.3} parent=493 // loop_body
          %v1024 = vld [vmem:[%s1022] sm:%s1015]
          %1025 = vst [vmem:[%s1023] sm:%s1015] %v1024
        $region499: #{infersent_forward.3} parent=493 // loop_footer
          %s1021 = sadd.s32 1, %s1017
        $region500: #{infersent_forward.3} parent=493 // loop_footer_branch
          %1016 = sbr.rel target = $region496
        $region501: #{infersent_forward.3} parent=493 // loop_exit
          _
      $region494: #{infersent_forward.3} parent=35 // pred_fallthru
        _
      // Predicated region
      $region513: #{infersent_forward.3} parent=35 // pred_check
        _
      $region514: #{infersent_forward.3} parent=35 // pred_check_branch
        %1050 = sbr.rel (0) target = $region516
      $region515: #{infersent_forward.3} parent=35 // pred_region
        %1051 = vsyncadd %s1005, 16
      $region516: #{infersent_forward.3} parent=35 // pred_fallthru
        _
      %s1052 = smul.u32 1, 1
      %s1053 = sshll.u32 %s1052, 4
      %1054 = dma.done [#allocation3], %s1053
      %s1055 = sshll.u32 %s1052, 4
      %1056 = dma.done %s291, %s1055
      %s1057 = sshll.u32 %s1052, 4
      %1058 = dma.done %s342, %s1057
      %s1059 = sshll.u32 %s1052, 4
      %1060 = dma.done %s393, %s1059
      %s1061 = sshll.u32 %s1052, 4
      %1062 = dma.done %s444, %s1061
      %s1063 = sshll.u32 %s1052, 4
      %1064 = dma.done %s495, %s1063
      %s1065 = sshll.u32 %s1052, 4
      %1066 = dma.done %s546, %s1065
      %s1067 = sshll.u32 %s1052, 4
      %1068 = dma.done %s597, %s1067
      %s1069 = sshll.u32 %s1052, 4
      %1070 = dma.done %s648, %s1069
      %s1071 = sshll.u32 %s1052, 4
      %1072 = dma.done %s699, %s1071
      %s1073 = sshll.u32 %s1052, 4
      %1074 = dma.done %s750, %s1073
      %s1075 = sshll.u32 %s1052, 4
      %1076 = dma.done %s801, %s1075
      %s1077 = sshll.u32 %s1052, 4
      %1078 = dma.done %s852, %s1077
      %s1079 = sshll.u32 %s1052, 4
      %1080 = dma.done %s903, %s1079
      %s1081 = sshll.u32 %s1052, 4
      %1082 = dma.done %s954, %s1081
      %s1083 = sshll.u32 %s1052, 4
      %1084 = dma.done %s1005, %s1083
      %v1085 = vld [vmem:[#allocation2] sm:$0xff]
      %v1086 = vld [vmem:[#allocation2 + $0x8] sm:$0xff]
      %v1087 = vpack.c.bf16 %v1086, %v1085
      %v1088 = vld [vmem:[%s2] sm:$0xff]
      %v1089 = vld [vmem:[%s2 + $0x8] sm:$0xff]
      %v1090 = vld [vmem:[%s2 + $0x10] sm:$0xff]
      %v1091 = vld [vmem:[%s2 + $0x18] sm:$0xff]
      %v1092 = vld [vmem:[%s2 + $0x20] sm:$0xff]
      %v1093 = vld [vmem:[%s2 + $0x28] sm:$0xff]
      %v1094 = vld [vmem:[%s2 + $0x30] sm:$0xff]
      %v1095 = vld [vmem:[%s2 + $0x38] sm:$0xff]
      %v1096 = vld [vmem:[%s2 + $0x40] sm:$0xff]
      %v1097 = vld [vmem:[%s2 + $0x48] sm:$0xff]
      %v1098 = vld [vmem:[%s2 + $0x50] sm:$0xff]
      %v1099 = vld [vmem:[%s2 + $0x58] sm:$0xff]
      %v1100 = vld [vmem:[%s2 + $0x60] sm:$0xff]
      %v1101 = vld [vmem:[%s2 + $0x68] sm:$0xff]
      %v1102 = vld [vmem:[%s2 + $0x70] sm:$0xff]
      %v1103 = vld [vmem:[%s2 + $0x78] sm:$0xff]
      %v1104 = vld [vmem:[%s2 + $0x80] sm:$0xff]
      %v1105 = vld [vmem:[%s2 + $0x88] sm:$0xff]
      %v1106 = vld [vmem:[%s2 + $0x90] sm:$0xff]
      %v1107 = vld [vmem:[%s2 + $0x98] sm:$0xff]
      %v1108 = vld [vmem:[%s2 + $0xa0] sm:$0xff]
      %v1109 = vld [vmem:[%s2 + $0xa8] sm:$0xff]
      %v1110 = vld [vmem:[%s2 + $0xb0] sm:$0xff]
      %v1111 = vld [vmem:[%s2 + $0xb8] sm:$0xff]
      %v1112 = vld [vmem:[%s2 + $0xc0] sm:$0xff]
      %v1113 = vld [vmem:[%s2 + $0xc8] sm:$0xff]
      %v1114 = vld [vmem:[%s2 + $0xd0] sm:$0xff]
      %v1115 = vld [vmem:[%s2 + $0xd8] sm:$0xff]
      %v1116 = vld [vmem:[%s2 + $0xe0] sm:$0xff]
      %v1117 = vld [vmem:[%s2 + $0xe8] sm:$0xff]
      %v1118 = vld [vmem:[%s2 + $0xf0] sm:$0xff]
      %v1119 = vld [vmem:[%s2 + $0xf8] sm:$0xff]
      %v1120 = vld [vmem:[%s4] sm:$0xf]
      %v1122 = vlaneseq
      %v1123 = vshrl.u32 %v1122, 7
      %v1124 = vsub.s32 0, %v1123
      %v1125 = vrot.slane %v1120, %v1124
      %v1126 = vlaneseq
      %v1127 = vshrl.u32 %v1126, 7
      %v1128 = vsub.s32 1, %v1127
      %v1129 = vrot.slane %v1120, %v1128
      %v1130 = vlaneseq
      %v1131 = vshrl.u32 %v1130, 7
      %v1132 = vsub.s32 2, %v1131
      %v1133 = vrot.slane %v1120, %v1132
      %v1134 = vlaneseq
      %v1135 = vshrl.u32 %v1134, 7
      %v1136 = vsub.s32 3, %v1135
      %v1137 = vrot.slane %v1120, %v1136
      %v1174 = vunpack.c.l.b16 %v1088
      %v1175 = vunpack.c.h.b16 %v1088
      %v1176 = vunpack.c.l.b16 %v1089
      %v1177 = vunpack.c.h.b16 %v1089
      %v1178 = vunpack.c.l.b16 %v1090
      %v1179 = vunpack.c.h.b16 %v1090
      %v1180 = vunpack.c.l.b16 %v1091
      %v1181 = vunpack.c.h.b16 %v1091
      %v1182 = vunpack.c.l.b16 %v1092
      %v1183 = vunpack.c.h.b16 %v1092
      %v1184 = vunpack.c.l.b16 %v1093
      %v1185 = vunpack.c.h.b16 %v1093
      %v1186 = vunpack.c.l.b16 %v1094
      %v1187 = vunpack.c.h.b16 %v1094
      %v1188 = vunpack.c.l.b16 %v1095
      %v1189 = vunpack.c.h.b16 %v1095
      %v1190 = vunpack.c.l.b16 %v1096
      %v1191 = vunpack.c.h.b16 %v1096
      %v1192 = vunpack.c.l.b16 %v1097
      %v1193 = vunpack.c.h.b16 %v1097
      %v1194 = vunpack.c.l.b16 %v1098
      %v1195 = vunpack.c.h.b16 %v1098
      %v1196 = vunpack.c.l.b16 %v1099
      %v1197 = vunpack.c.h.b16 %v1099
      %v1198 = vunpack.c.l.b16 %v1100
      %v1199 = vunpack.c.h.b16 %v1100
      %v1200 = vunpack.c.l.b16 %v1101
      %v1201 = vunpack.c.h.b16 %v1101
      %v1202 = vunpack.c.l.b16 %v1102
      %v1203 = vunpack.c.h.b16 %v1102
      %v1204 = vunpack.c.l.b16 %v1103
      %v1205 = vunpack.c.h.b16 %v1103
      %v1206 = vunpack.c.l.b16 %v1104
      %v1207 = vunpack.c.h.b16 %v1104
      %v1208 = vunpack.c.l.b16 %v1105
      %v1209 = vunpack.c.h.b16 %v1105
      %v1210 = vunpack.c.l.b16 %v1106
      %v1211 = vunpack.c.h.b16 %v1106
      %v1212 = vunpack.c.l.b16 %v1107
      %v1213 = vunpack.c.h.b16 %v1107
      %v1214 = vunpack.c.l.b16 %v1108
      %v1215 = vunpack.c.h.b16 %v1108
      %v1216 = vunpack.c.l.b16 %v1109
      %v1217 = vunpack.c.h.b16 %v1109
      %v1218 = vunpack.c.l.b16 %v1110
      %v1219 = vunpack.c.h.b16 %v1110
      %v1220 = vunpack.c.l.b16 %v1111
      %v1221 = vunpack.c.h.b16 %v1111
      %v1222 = vunpack.c.l.b16 %v1112
      %v1223 = vunpack.c.h.b16 %v1112
      %v1224 = vunpack.c.l.b16 %v1113
      %v1225 = vunpack.c.h.b16 %v1113
      %v1226 = vunpack.c.l.b16 %v1114
      %v1227 = vunpack.c.h.b16 %v1114
      %v1228 = vunpack.c.l.b16 %v1115
      %v1229 = vunpack.c.h.b16 %v1115
      %v1230 = vunpack.c.l.b16 %v1116
      %v1231 = vunpack.c.h.b16 %v1116
      %v1232 = vunpack.c.l.b16 %v1117
      %v1233 = vunpack.c.h.b16 %v1117
      %v1234 = vunpack.c.l.b16 %v1118
      %v1235 = vunpack.c.h.b16 %v1118
      %v1236 = vunpack.c.l.b16 %v1119
      %v1237 = vunpack.c.h.b16 %v1119
      %v1238 = vpack.c.b16 %v1178, %v1174
      %v1239 = vpack.c.b16 %v1179, %v1175
      %v1240 = vpack.c.b16 %v1180, %v1176
      %v1241 = vpack.c.b16 %v1181, %v1177
      %v1242 = vpack.c.b16 %v1186, %v1182
      %v1243 = vpack.c.b16 %v1187, %v1183
      %v1244 = vpack.c.b16 %v1188, %v1184
      %v1245 = vpack.c.b16 %v1189, %v1185
      %v1246 = vpack.c.b16 %v1194, %v1190
      %v1247 = vpack.c.b16 %v1195, %v1191
      %v1248 = vpack.c.b16 %v1196, %v1192
      %v1249 = vpack.c.b16 %v1197, %v1193
      %v1250 = vpack.c.b16 %v1202, %v1198
      %v1251 = vpack.c.b16 %v1203, %v1199
      %v1252 = vpack.c.b16 %v1204, %v1200
      %v1253 = vpack.c.b16 %v1205, %v1201
      %v1254 = vpack.c.b16 %v1210, %v1206
      %v1255 = vpack.c.b16 %v1211, %v1207
      %v1256 = vpack.c.b16 %v1212, %v1208
      %v1257 = vpack.c.b16 %v1213, %v1209
      %v1258 = vpack.c.b16 %v1218, %v1214
      %v1259 = vpack.c.b16 %v1219, %v1215
      %v1260 = vpack.c.b16 %v1220, %v1216
      %v1261 = vpack.c.b16 %v1221, %v1217
      %v1262 = vpack.c.b16 %v1226, %v1222
      %v1263 = vpack.c.b16 %v1227, %v1223
      %v1264 = vpack.c.b16 %v1228, %v1224
      %v1265 = vpack.c.b16 %v1229, %v1225
      %v1266 = vpack.c.b16 %v1234, %v1230
      %v1267 = vpack.c.b16 %v1235, %v1231
      %v1268 = vpack.c.b16 %v1236, %v1232
      %v1269 = vpack.c.b16 %v1237, %v1233
      %1302 = vmatprep.subr.bf16.mxu0 %v1267
      %1303 = vmatpush1.bf16.msra.mxu0 %v1266
      %1304 = vmatprep.subr.bf16.mxu0 %v1263
      %1305 = vmatpush1.bf16.msra.mxu0 %v1262
      %1306 = vmatprep.subr.bf16.mxu0 %v1259
      %1307 = vmatpush1.bf16.msra.mxu0 %v1258
      %1308 = vmatprep.subr.bf16.mxu0 %v1255
      %1309 = vmatpush1.bf16.msra.mxu0 %v1254
      %1310 = vmatprep.subr.bf16.mxu0 %v1251
      %1311 = vmatpush1.bf16.msra.mxu0 %v1250
      %1312 = vmatprep.subr.bf16.mxu0 %v1247
      %1313 = vmatpush1.bf16.msra.mxu0 %v1246
      %1314 = vmatprep.subr.bf16.mxu0 %v1243
      %1315 = vmatpush1.bf16.msra.mxu0 %v1242
      %1316 = vmatprep.subr.bf16.mxu0 %v1239
      %1317 = vmatpush1.bf16.msra.mxu0 %v1238
      %1318 = vmatprep.subr.bf16.mxu0 0
      %1319 = vmatpush2.bf16.msra.mxu0 0
      %1320 = vmatprep.subr.bf16.mxu0 0
      %1321 = vmatpush2.bf16.msra.mxu0 0
      %1322 = vmatprep.subr.bf16.mxu0 0
      %1323 = vmatpush2.bf16.msra.mxu0 0
      %1324 = vmatprep.subr.bf16.mxu0 0
      %1325 = vmatpush2.bf16.msra.mxu0 0
      %1326 = vmatprep.subr.bf16.mxu0 0
      %1327 = vmatpush2.bf16.msra.mxu0 0
      %1328 = vmatprep.subr.bf16.mxu0 0
      %1329 = vmatpush2.bf16.msra.mxu0 0
      %1330 = vmatprep.subr.bf16.mxu0 0
      %1331 = vmatpush2.bf16.msra.mxu0 0
      %1332 = vmatprep.subr.bf16.mxu0 0
      %1333 = vmatpush2.bf16.msra.mxu0 0
      %1334 = vmatprep.mubr.bf16.mxu0 0
      %1335 = vmatmul.mubr.bf16.gmra.mxu0 %v1087
      %v1336 = vpop.f32.mrf.mxu0
      %v1337 = vadd.f32 %v1125, %v1336
      %v1338 = vpop.f32.mrf.mxu0
      %v1339 = vadd.f32 %v1129, %v1338
      %v1340 = vpop.f32.mrf.mxu0
      %v1341 = vadd.f32 %v1125, %v1340
      %v1342 = vpop.f32.mrf.mxu0
      %v1343 = vadd.f32 %v1129, %v1342
      %1344 = vdwg.mxu0
      %1345 = vmatprep.subr.bf16.mxu0 %v1269
      %1346 = vmatpush1.bf16.msra.mxu0 %v1268
      %1347 = vmatprep.subr.bf16.mxu0 %v1265
      %1348 = vmatpush1.bf16.msra.mxu0 %v1264
      %1349 = vmatprep.subr.bf16.mxu0 %v1261
      %1350 = vmatpush1.bf16.msra.mxu0 %v1260
      %1351 = vmatprep.subr.bf16.mxu0 %v1257
      %1352 = vmatpush1.bf16.msra.mxu0 %v1256
      %1353 = vmatprep.subr.bf16.mxu0 %v1253
      %1354 = vmatpush1.bf16.msra.mxu0 %v1252
      %1355 = vmatprep.subr.bf16.mxu0 %v1249
      %1356 = vmatpush1.bf16.msra.mxu0 %v1248
      %1357 = vmatprep.subr.bf16.mxu0 %v1245
      %1358 = vmatpush1.bf16.msra.mxu0 %v1244
      %1359 = vmatprep.subr.bf16.mxu0 %v1241
      %1360 = vmatpush1.bf16.msra.mxu0 %v1240
      %1361 = vmatprep.subr.bf16.mxu0 0
      %1362 = vmatpush2.bf16.msra.mxu0 0
      %1363 = vmatprep.subr.bf16.mxu0 0
      %1364 = vmatpush2.bf16.msra.mxu0 0
      %1365 = vmatprep.subr.bf16.mxu0 0
      %1366 = vmatpush2.bf16.msra.mxu0 0
      %1367 = vmatprep.subr.bf16.mxu0 0
      %1368 = vmatpush2.bf16.msra.mxu0 0
      %1369 = vmatprep.subr.bf16.mxu0 0
      %1370 = vmatpush2.bf16.msra.mxu0 0
      %1371 = vmatprep.subr.bf16.mxu0 0
      %1372 = vmatpush2.bf16.msra.mxu0 0
      %1373 = vmatprep.subr.bf16.mxu0 0
      %1374 = vmatpush2.bf16.msra.mxu0 0
      %1375 = vmatprep.subr.bf16.mxu0 0
      %1376 = vmatpush2.bf16.msra.mxu0 0
      %1377 = vmatprep.mubr.bf16.mxu0 0
      %1378 = vmatmul.mubr.bf16.gmra.mxu0 %v1087
      %v1379 = vpop.f32.mrf.mxu0
      %v1380 = vadd.f32 %v1133, %v1379
      %v1381 = vpop.f32.mrf.mxu0
      %v1382 = vadd.f32 %v1137, %v1381
      %v1383 = vpop.f32.mrf.mxu0
      %v1384 = vadd.f32 %v1133, %v1383
      %v1385 = vpop.f32.mrf.mxu0
      %v1386 = vadd.f32 %v1137, %v1385
      %1387 = vdwg.mxu0
      %1388 = vst [vmem:[%s226] sm:$0xff] %v1337
      %1389 = vst [vmem:[%s226 + $0x8] sm:$0xff] %v1339
      %1390 = vst [vmem:[%s226 + $0x10] sm:$0xff] %v1380
      %1391 = vst [vmem:[%s226 + $0x18] sm:$0xff] %v1382
      %1392 = vst [vmem:[%s226 + $0x20] sm:$0xff] %v1341
      %1393 = vst [vmem:[%s226 + $0x28] sm:$0xff] %v1343
      %1394 = vst [vmem:[%s226 + $0x30] sm:$0xff] %v1384
      %1395 = vst [vmem:[%s226 + $0x38] sm:$0xff] %v1386
      %v1396 = vld [vmem:[%s3] sm:$0xff]
      %v1397 = vld [vmem:[%s3 + $0x8] sm:$0xff]
      %v1398 = vld [vmem:[%s3 + $0x10] sm:$0xff]
      %v1399 = vld [vmem:[%s3 + $0x18] sm:$0xff]
      %v1400 = vld [vmem:[%s3 + $0x20] sm:$0xff]
      %v1401 = vld [vmem:[%s3 + $0x28] sm:$0xff]
      %v1402 = vld [vmem:[%s3 + $0x30] sm:$0xff]
      %v1403 = vld [vmem:[%s3 + $0x38] sm:$0xff]
      %v1404 = vld [vmem:[%s3 + $0x40] sm:$0xff]
      %v1405 = vld [vmem:[%s3 + $0x48] sm:$0xff]
      %v1406 = vld [vmem:[%s3 + $0x50] sm:$0xff]
      %v1407 = vld [vmem:[%s3 + $0x58] sm:$0xff]
      %v1408 = vld [vmem:[%s3 + $0x60] sm:$0xff]
      %v1409 = vld [vmem:[%s3 + $0x68] sm:$0xff]
      %v1410 = vld [vmem:[%s3 + $0x70] sm:$0xff]
      %v1411 = vld [vmem:[%s3 + $0x78] sm:$0xff]
      %v1412 = vld [vmem:[%s3 + $0x80] sm:$0xff]
      %v1413 = vld [vmem:[%s3 + $0x88] sm:$0xff]
      %v1414 = vld [vmem:[%s3 + $0x90] sm:$0xff]
      %v1415 = vld [vmem:[%s3 + $0x98] sm:$0xff]
      %v1416 = vld [vmem:[%s3 + $0xa0] sm:$0xff]
      %v1417 = vld [vmem:[%s3 + $0xa8] sm:$0xff]
      %v1418 = vld [vmem:[%s3 + $0xb0] sm:$0xff]
      %v1419 = vld [vmem:[%s3 + $0xb8] sm:$0xff]
      %v1420 = vld [vmem:[%s3 + $0xc0] sm:$0xff]
      %v1421 = vld [vmem:[%s3 + $0xc8] sm:$0xff]
      %v1422 = vld [vmem:[%s3 + $0xd0] sm:$0xff]
      %v1423 = vld [vmem:[%s3 + $0xd8] sm:$0xff]
      %v1424 = vld [vmem:[%s3 + $0xe0] sm:$0xff]
      %v1425 = vld [vmem:[%s3 + $0xe8] sm:$0xff]
      %v1426 = vld [vmem:[%s3 + $0xf0] sm:$0xff]
      %v1427 = vld [vmem:[%s3 + $0xf8] sm:$0xff]
      %v1428 = vld [vmem:[%s5] sm:$0xf]
      %v1430 = vlaneseq
      %v1431 = vshrl.u32 %v1430, 7
      %v1432 = vsub.s32 0, %v1431
      %v1433 = vrot.slane %v1428, %v1432
      %v1434 = vlaneseq
      %v1435 = vshrl.u32 %v1434, 7
      %v1436 = vsub.s32 1, %v1435
      %v1437 = vrot.slane %v1428, %v1436
      %v1438 = vlaneseq
      %v1439 = vshrl.u32 %v1438, 7
      %v1440 = vsub.s32 2, %v1439
      %v1441 = vrot.slane %v1428, %v1440
      %v1442 = vlaneseq
      %v1443 = vshrl.u32 %v1442, 7
      %v1444 = vsub.s32 3, %v1443
      %v1445 = vrot.slane %v1428, %v1444
      %v1482 = vunpack.c.l.b16 %v1396
      %v1483 = vunpack.c.h.b16 %v1396
      %v1484 = vunpack.c.l.b16 %v1397
      %v1485 = vunpack.c.h.b16 %v1397
      %v1486 = vunpack.c.l.b16 %v1398
      %v1487 = vunpack.c.h.b16 %v1398
      %v1488 = vunpack.c.l.b16 %v1399
      %v1489 = vunpack.c.h.b16 %v1399
      %v1490 = vunpack.c.l.b16 %v1400
      %v1491 = vunpack.c.h.b16 %v1400
      %v1492 = vunpack.c.l.b16 %v1401
      %v1493 = vunpack.c.h.b16 %v1401
      %v1494 = vunpack.c.l.b16 %v1402
      %v1495 = vunpack.c.h.b16 %v1402
      %v1496 = vunpack.c.l.b16 %v1403
      %v1497 = vunpack.c.h.b16 %v1403
      %v1498 = vunpack.c.l.b16 %v1404
      %v1499 = vunpack.c.h.b16 %v1404
      %v1500 = vunpack.c.l.b16 %v1405
      %v1501 = vunpack.c.h.b16 %v1405
      %v1502 = vunpack.c.l.b16 %v1406
      %v1503 = vunpack.c.h.b16 %v1406
      %v1504 = vunpack.c.l.b16 %v1407
      %v1505 = vunpack.c.h.b16 %v1407
      %v1506 = vunpack.c.l.b16 %v1408
      %v1507 = vunpack.c.h.b16 %v1408
      %v1508 = vunpack.c.l.b16 %v1409
      %v1509 = vunpack.c.h.b16 %v1409
      %v1510 = vunpack.c.l.b16 %v1410
      %v1511 = vunpack.c.h.b16 %v1410
      %v1512 = vunpack.c.l.b16 %v1411
      %v1513 = vunpack.c.h.b16 %v1411
      %v1514 = vunpack.c.l.b16 %v1412
      %v1515 = vunpack.c.h.b16 %v1412
      %v1516 = vunpack.c.l.b16 %v1413
      %v1517 = vunpack.c.h.b16 %v1413
      %v1518 = vunpack.c.l.b16 %v1414
      %v1519 = vunpack.c.h.b16 %v1414
      %v1520 = vunpack.c.l.b16 %v1415
      %v1521 = vunpack.c.h.b16 %v1415
      %v1522 = vunpack.c.l.b16 %v1416
      %v1523 = vunpack.c.h.b16 %v1416
      %v1524 = vunpack.c.l.b16 %v1417
      %v1525 = vunpack.c.h.b16 %v1417
      %v1526 = vunpack.c.l.b16 %v1418
      %v1527 = vunpack.c.h.b16 %v1418
      %v1528 = vunpack.c.l.b16 %v1419
      %v1529 = vunpack.c.h.b16 %v1419
      %v1530 = vunpack.c.l.b16 %v1420
      %v1531 = vunpack.c.h.b16 %v1420
      %v1532 = vunpack.c.l.b16 %v1421
      %v1533 = vunpack.c.h.b16 %v1421
      %v1534 = vunpack.c.l.b16 %v1422
      %v1535 = vunpack.c.h.b16 %v1422
      %v1536 = vunpack.c.l.b16 %v1423
      %v1537 = vunpack.c.h.b16 %v1423
      %v1538 = vunpack.c.l.b16 %v1424
      %v1539 = vunpack.c.h.b16 %v1424
      %v1540 = vunpack.c.l.b16 %v1425
      %v1541 = vunpack.c.h.b16 %v1425
      %v1542 = vunpack.c.l.b16 %v1426
      %v1543 = vunpack.c.h.b16 %v1426
      %v1544 = vunpack.c.l.b16 %v1427
      %v1545 = vunpack.c.h.b16 %v1427
      %v1546 = vpack.c.b16 %v1486, %v1482
      %v1547 = vpack.c.b16 %v1487, %v1483
      %v1548 = vpack.c.b16 %v1488, %v1484
      %v1549 = vpack.c.b16 %v1489, %v1485
      %v1550 = vpack.c.b16 %v1494, %v1490
      %v1551 = vpack.c.b16 %v1495, %v1491
      %v1552 = vpack.c.b16 %v1496, %v1492
      %v1553 = vpack.c.b16 %v1497, %v1493
      %v1554 = vpack.c.b16 %v1502, %v1498
      %v1555 = vpack.c.b16 %v1503, %v1499
      %v1556 = vpack.c.b16 %v1504, %v1500
      %v1557 = vpack.c.b16 %v1505, %v1501
      %v1558 = vpack.c.b16 %v1510, %v1506
      %v1559 = vpack.c.b16 %v1511, %v1507
      %v1560 = vpack.c.b16 %v1512, %v1508
      %v1561 = vpack.c.b16 %v1513, %v1509
      %v1562 = vpack.c.b16 %v1518, %v1514
      %v1563 = vpack.c.b16 %v1519, %v1515
      %v1564 = vpack.c.b16 %v1520, %v1516
      %v1565 = vpack.c.b16 %v1521, %v1517
      %v1566 = vpack.c.b16 %v1526, %v1522
      %v1567 = vpack.c.b16 %v1527, %v1523
      %v1568 = vpack.c.b16 %v1528, %v1524
      %v1569 = vpack.c.b16 %v1529, %v1525
      %v1570 = vpack.c.b16 %v1534, %v1530
      %v1571 = vpack.c.b16 %v1535, %v1531
      %v1572 = vpack.c.b16 %v1536, %v1532
      %v1573 = vpack.c.b16 %v1537, %v1533
      %v1574 = vpack.c.b16 %v1542, %v1538
      %v1575 = vpack.c.b16 %v1543, %v1539
      %v1576 = vpack.c.b16 %v1544, %v1540
      %v1577 = vpack.c.b16 %v1545, %v1541
      %1610 = vmatprep.subr.bf16.mxu0 %v1575
      %1611 = vmatpush1.bf16.msra.mxu0 %v1574
      %1612 = vmatprep.subr.bf16.mxu0 %v1571
      %1613 = vmatpush1.bf16.msra.mxu0 %v1570
      %1614 = vmatprep.subr.bf16.mxu0 %v1567
      %1615 = vmatpush1.bf16.msra.mxu0 %v1566
      %1616 = vmatprep.subr.bf16.mxu0 %v1563
      %1617 = vmatpush1.bf16.msra.mxu0 %v1562
      %1618 = vmatprep.subr.bf16.mxu0 %v1559
      %1619 = vmatpush1.bf16.msra.mxu0 %v1558
      %1620 = vmatprep.subr.bf16.mxu0 %v1555
      %1621 = vmatpush1.bf16.msra.mxu0 %v1554
      %1622 = vmatprep.subr.bf16.mxu0 %v1551
      %1623 = vmatpush1.bf16.msra.mxu0 %v1550
      %1624 = vmatprep.subr.bf16.mxu0 %v1547
      %1625 = vmatpush1.bf16.msra.mxu0 %v1546
      %1626 = vmatprep.subr.bf16.mxu0 0
      %1627 = vmatpush2.bf16.msra.mxu0 0
      %1628 = vmatprep.subr.bf16.mxu0 0
      %1629 = vmatpush2.bf16.msra.mxu0 0
      %1630 = vmatprep.subr.bf16.mxu0 0
      %1631 = vmatpush2.bf16.msra.mxu0 0
      %1632 = vmatprep.subr.bf16.mxu0 0
      %1633 = vmatpush2.bf16.msra.mxu0 0
      %1634 = vmatprep.subr.bf16.mxu0 0
      %1635 = vmatpush2.bf16.msra.mxu0 0
      %1636 = vmatprep.subr.bf16.mxu0 0
      %1637 = vmatpush2.bf16.msra.mxu0 0
      %1638 = vmatprep.subr.bf16.mxu0 0
      %1639 = vmatpush2.bf16.msra.mxu0 0
      %1640 = vmatprep.subr.bf16.mxu0 0
      %1641 = vmatpush2.bf16.msra.mxu0 0
      %1642 = vmatprep.mubr.bf16.mxu0 0
      %1643 = vmatmul.mubr.bf16.gmra.mxu0 %v1087
      %v1644 = vpop.f32.mrf.mxu0
      %v1645 = vadd.f32 %v1433, %v1644
      %v1646 = vpop.f32.mrf.mxu0
      %v1647 = vadd.f32 %v1437, %v1646
      %v1648 = vpop.f32.mrf.mxu0
      %v1649 = vadd.f32 %v1433, %v1648
      %v1650 = vpop.f32.mrf.mxu0
      %v1651 = vadd.f32 %v1437, %v1650
      %1652 = vdwg.mxu0
      %1653 = vmatprep.subr.bf16.mxu0 %v1577
      %1654 = vmatpush1.bf16.msra.mxu0 %v1576
      %1655 = vmatprep.subr.bf16.mxu0 %v1573
      %1656 = vmatpush1.bf16.msra.mxu0 %v1572
      %1657 = vmatprep.subr.bf16.mxu0 %v1569
      %1658 = vmatpush1.bf16.msra.mxu0 %v1568
      %1659 = vmatprep.subr.bf16.mxu0 %v1565
      %1660 = vmatpush1.bf16.msra.mxu0 %v1564
      %1661 = vmatprep.subr.bf16.mxu0 %v1561
      %1662 = vmatpush1.bf16.msra.mxu0 %v1560
      %1663 = vmatprep.subr.bf16.mxu0 %v1557
      %1664 = vmatpush1.bf16.msra.mxu0 %v1556
      %1665 = vmatprep.subr.bf16.mxu0 %v1553
      %1666 = vmatpush1.bf16.msra.mxu0 %v1552
      %1667 = vmatprep.subr.bf16.mxu0 %v1549
      %1668 = vmatpush1.bf16.msra.mxu0 %v1548
      %1669 = vmatprep.subr.bf16.mxu0 0
      %1670 = vmatpush2.bf16.msra.mxu0 0
      %1671 = vmatprep.subr.bf16.mxu0 0
      %1672 = vmatpush2.bf16.msra.mxu0 0
      %1673 = vmatprep.subr.bf16.mxu0 0
      %1674 = vmatpush2.bf16.msra.mxu0 0
      %1675 = vmatprep.subr.bf16.mxu0 0
      %1676 = vmatpush2.bf16.msra.mxu0 0
      %1677 = vmatprep.subr.bf16.mxu0 0
      %1678 = vmatpush2.bf16.msra.mxu0 0
      %1679 = vmatprep.subr.bf16.mxu0 0
      %1680 = vmatpush2.bf16.msra.mxu0 0
      %1681 = vmatprep.subr.bf16.mxu0 0
      %1682 = vmatpush2.bf16.msra.mxu0 0
      %1683 = vmatprep.subr.bf16.mxu0 0
      %1684 = vmatpush2.bf16.msra.mxu0 0
      %1685 = vmatprep.mubr.bf16.mxu0 0
      %1686 = vmatmul.mubr.bf16.gmra.mxu0 %v1087
      %v1687 = vpop.f32.mrf.mxu0
      %v1688 = vadd.f32 %v1441, %v1687
      %v1689 = vpop.f32.mrf.mxu0
      %v1690 = vadd.f32 %v1445, %v1689
      %v1691 = vpop.f32.mrf.mxu0
      %v1692 = vadd.f32 %v1441, %v1691
      %v1693 = vpop.f32.mrf.mxu0
      %v1694 = vadd.f32 %v1445, %v1693
      %1695 = vdwg.mxu0
      %1696 = vst [vmem:[%s234] sm:$0xff] %v1645
      %1697 = vst [vmem:[%s234 + $0x8] sm:$0xff] %v1647
      %1698 = vst [vmem:[%s234 + $0x10] sm:$0xff] %v1688
      %1699 = vst [vmem:[%s234 + $0x18] sm:$0xff] %v1690
      %1700 = vst [vmem:[%s234 + $0x20] sm:$0xff] %v1649
      %1701 = vst [vmem:[%s234 + $0x28] sm:$0xff] %v1651
      %1702 = vst [vmem:[%s234 + $0x30] sm:$0xff] %v1692
      %1703 = vst [vmem:[%s234 + $0x38] sm:$0xff] %v1694
      %s1704 = smul.u32 2, %s25
      %p1705 = scmp.lt.s32.totalorder %s1704, 15
      %s1706 = scalar_select %p1705, %s1704, 15
      %s1707 = smul.addr %s1706, 4
      %s1708 = smul.addr %s1707, 8
      %s1709 = scalar_lea.vmem %s6, %s1708
      %s1710 = ssub.s32 7, %s25
      %s1711 = smul.u32 2, %s1710
      %p1712 = scmp.lt.s32.totalorder %s1711, 15
      %s1713 = scalar_select %p1712, %s1711, 15
      %s1714 = smul.addr %s1713, 4
      %s1715 = smul.addr %s1714, 8
      %s1716 = scalar_lea.vmem %s7, %s1715
      // Predicated region
      $region517: #{infersent_forward.3} parent=35 // pred_check
        %p1717 = pneg %p127
      $region518: #{infersent_forward.3} parent=35 // pred_check_branch
        %1719 = sbr.rel (%p1717) target = $region520
      $region519: #{infersent_forward.3} parent=35 // pred_region
        %s1720 = smul.u32 2, %s25
      $region520: #{infersent_forward.3} parent=35 // pred_fallthru
        _
      // Predicated region
      $region521: #{infersent_forward.3} parent=35 // pred_check
        %p1721 = pneg %p155
      $region522: #{infersent_forward.3} parent=35 // pred_check_branch
        %1723 = sbr.rel (%p1721) target = $region524
      $region523: #{infersent_forward.3} parent=35 // pred_region
        %s1724 = ssub.s32 7, %s25
        %s1725 = smul.u32 2, %s1724
      $region524: #{infersent_forward.3} parent=35 // pred_fallthru
        _
    $region36: #{infersent_forward.3} parent=5 // pred_fallthru
      _
    %p1726 = scmp.le.s32.totalorder 2, %s20
    // Predicated region
    $region525: #{infersent_forward.3} parent=5 // pred_check
      %p1727 = pneg %p1726
    $region526: #{infersent_forward.3} parent=5 // pred_check_branch
      %1729 = sbr.rel (%p1727) target = $region528
    $region527: #{infersent_forward.3} parent=5 // pred_region
      %s1730 = ssub.s32 %s20, 2
      // Predicated region
      $region529: #{infersent_forward.3} parent=527 // pred_check
        %p1731 = pneg %p133
      $region530: #{infersent_forward.3} parent=527 // pred_check_branch
        %1733 = sbr.rel (%p1731) target = $region532
      $region531: #{infersent_forward.3} parent=527 // pred_region
        %s1734 = smul.u32 2, %s26
        %p1735 = scmp.lt.s32.totalorder %s1734, 15
        %s1736 = scalar_select %p1735, %s1734, 15
        %s1737 = smul.addr %s1736, 4
        %s1738 = smul.addr %s1737, 8
        %s1739 = scalar_lea.vmem %s6, %s1738
      $region532: #{infersent_forward.3} parent=527 // pred_fallthru
        _
      // Predicated region
      $region533: #{infersent_forward.3} parent=527 // pred_check
        %p1740 = pneg %p161
      $region534: #{infersent_forward.3} parent=527 // pred_check_branch
        %1742 = sbr.rel (%p1740) target = $region536
      $region535: #{infersent_forward.3} parent=527 // pred_region
        %s1743 = ssub.s32 7, %s26
        %s1744 = smul.u32 2, %s1743
        %p1745 = scmp.lt.s32.totalorder %s1744, 15
        %s1746 = scalar_select %p1745, %s1744, 15
        %s1747 = smul.addr %s1746, 4
        %s1748 = smul.addr %s1747, 8
        %s1749 = scalar_lea.vmem %s7, %s1748
      $region536: #{infersent_forward.3} parent=527 // pred_fallthru
        _
    $region528: #{infersent_forward.3} parent=5 // pred_fallthru
      _
  $region6: #{infersent_forward.3} parent=0 // loop_footer
    %s24 = sadd.s32 1, %s20
  $region7: #{infersent_forward.3} parent=0 // loop_footer_branch
    %19 = sbr.rel target = $region3
  $region8: #{infersent_forward.3} parent=0 // loop_exit
    _
  %1750 = vsyncmov [#allocation3]
  %s1751 = vpop.sfrf %1750
  %p1752 = scmp.eq.s32.totalorder %s1751, 0
  %p1753 = pneg %p1752
  %1755 = shalt.err (%p1753)
  %s1756 = scalar_lea.sflag [#allocation3], 1
  %1757 = vsyncmov %s1756
  %s1758 = vpop.sfrf %1757
  %p1759 = scmp.eq.s32.totalorder %s1758, 0
  %p1760 = pneg %p1759
  %1762 = shalt.err (%p1760)
  %s1763 = scalar_lea.sflag [#allocation3], 2
  %1764 = vsyncmov %s1763
  %s1765 = vpop.sfrf %1764
  %p1766 = scmp.eq.s32.totalorder %s1765, 0
  %p1767 = pneg %p1766
  %1769 = shalt.err (%p1767)
  %s1770 = scalar_lea.sflag [#allocation3], 3
  %1771 = vsyncmov %s1770
  %s1772 = vpop.sfrf %1771
  %p1773 = scmp.eq.s32.totalorder %s1772, 0
  %p1774 = pneg %p1773
  %1776 = shalt.err (%p1774)
  %s1777 = scalar_lea.sflag [#allocation3], 4
  %1778 = vsyncmov %s1777
  %s1779 = vpop.sfrf %1778
  %p1780 = scmp.eq.s32.totalorder %s1779, 0
  %p1781 = pneg %p1780
  %1783 = shalt.err (%p1781)
  %s1784 = scalar_lea.sflag [#allocation3], 5
  %1785 = vsyncmov %s1784
  %s1786 = vpop.sfrf %1785
  %p1787 = scmp.eq.s32.totalorder %s1786, 0
  %p1788 = pneg %p1787
  %1790 = shalt.err (%p1788)
  %s1791 = scalar_lea.sflag [#allocation3], 6
  %1792 = vsyncmov %s1791
  %s1793 = vpop.sfrf %1792
  %p1794 = scmp.eq.s32.totalorder %s1793, 0
  %p1795 = pneg %p1794
  %1797 = shalt.err (%p1795)
  %s1798 = scalar_lea.sflag [#allocation3], 7
  %1799 = vsyncmov %s1798
  %s1800 = vpop.sfrf %1799
  %p1801 = scmp.eq.s32.totalorder %s1800, 0
  %p1802 = pneg %p1801
  %1804 = shalt.err (%p1802)
  %s1805 = scalar_lea.sflag [#allocation3], 8
  %1806 = vsyncmov %s1805
  %s1807 = vpop.sfrf %1806
  %p1808 = scmp.eq.s32.totalorder %s1807, 0
  %p1809 = pneg %p1808
  %1811 = shalt.err (%p1809)
  %s1812 = scalar_lea.sflag [#allocation3], 9
  %1813 = vsyncmov %s1812
  %s1814 = vpop.sfrf %1813
  %p1815 = scmp.eq.s32.totalorder %s1814, 0
  %p1816 = pneg %p1815
  %1818 = shalt.err (%p1816)
  %s1819 = scalar_lea.sflag [#allocation3], 10
  %1820 = vsyncmov %s1819
  %s1821 = vpop.sfrf %1820
  %p1822 = scmp.eq.s32.totalorder %s1821, 0
  %p1823 = pneg %p1822
  %1825 = shalt.err (%p1823)
  %s1826 = scalar_lea.sflag [#allocation3], 11
  %1827 = vsyncmov %s1826
  %s1828 = vpop.sfrf %1827
  %p1829 = scmp.eq.s32.totalorder %s1828, 0
  %p1830 = pneg %p1829
  %1832 = shalt.err (%p1830)
  %s1833 = scalar_lea.sflag [#allocation3], 12
  %1834 = vsyncmov %s1833
  %s1835 = vpop.sfrf %1834
  %p1836 = scmp.eq.s32.totalorder %s1835, 0
  %p1837 = pneg %p1836
  %1839 = shalt.err (%p1837)
  %s1840 = scalar_lea.sflag [#allocation3], 13
  %1841 = vsyncmov %s1840
  %s1842 = vpop.sfrf %1841
  %p1843 = scmp.eq.s32.totalorder %s1842, 0
  %p1844 = pneg %p1843
  %1846 = shalt.err (%p1844)
  %s1847 = scalar_lea.sflag [#allocation3], 14
  %1848 = vsyncmov %s1847
  %s1849 = vpop.sfrf %1848
  %p1850 = scmp.eq.s32.totalorder %s1849, 0
  %p1851 = pneg %p1850
  %1853 = shalt.err (%p1851)
  %s1854 = scalar_lea.sflag [#allocation3], 15
  %1855 = vsyncmov %s1854
  %s1856 = vpop.sfrf %1855
  %p1857 = scmp.eq.s32.totalorder %s1856, 0
  %p1858 = pneg %p1857
  %1860 = shalt.err (%p1858)

// kernel: infersent_forward.5
$region0: #{infersent_forward.5}
  #allocation0 [shape = 'u32[]', space=smem, size = 0x4, offset = 0x4, fixed_abs, tag = 'smem constant byte address 0x4 - core index']
  #allocation1 [shape = 'u32[144,128]{1,0:T(1,128)}', space=vmem, size = 0x12000, scoped, tag = 'internal scratch']
  %s0 = inlined_call_operand.vmem [shape: f32[16,256], index: 0, kind: input, shape index: {}]
  %s1 = inlined_call_operand.vmem [shape: bf16[256,128], index: 1, kind: input, shape index: {}]
  %s2 = inlined_call_operand.vmem [shape: bf16[256,128], index: 2, kind: input, shape index: {}]
  %s3 = inlined_call_operand.vmem [shape: bf16[256,128], index: 3, kind: input, shape index: {}]
  %s4 = inlined_call_operand.vmem [shape: bf16[256,128], index: 4, kind: input, shape index: {}]
  %s5 = inlined_call_operand.vmem [shape: f32[1,128], index: 5, kind: input, shape index: {}]
  %s6 = inlined_call_operand.vmem [shape: bf16[128,128], index: 6, kind: input, shape index: {}]
  %s7 = inlined_call_operand.vmem [shape: f32[1,128], index: 7, kind: input, shape index: {}]
  %s8 = inlined_call_operand.vmem [shape: bf16[128,3], index: 8, kind: input, shape index: {}]
  %s9 = inlined_call_operand.vmem [shape: f32[1,3], index: 9, kind: input, shape index: {}]
  %s10 = inlined_call_operand.vmem [shape: f32[8,3], index: 10, kind: output, shape index: {}]
  %s11 = sld [smem:[#allocation0]]
  $region50: #{infersent_forward.5} parent=0
    _
  %s13 = ssub.s32 1, %s11
  %s14 = scalar_select 0, %s13, %s11
  // Predicated region
  $region2: #{infersent_forward.5} parent=0 // pred_check
    _
  $region3: #{infersent_forward.5} parent=0 // pred_check_branch
    %16 = sbr.rel (0) target = $region5
  $region4: #{infersent_forward.5} parent=0 // pred_region
    _
  $region5: #{infersent_forward.5} parent=0 // pred_fallthru
    _
  // Predicated region
  $region6: #{infersent_forward.5} parent=0 // pred_check
    _
  $region7: #{infersent_forward.5} parent=0 // pred_check_branch
    %18 = sbr.rel (0) target = $region9
  $region8: #{infersent_forward.5} parent=0 // pred_region
    _
  $region9: #{infersent_forward.5} parent=0 // pred_fallthru
    _
  // Predicated region
  $region10: #{infersent_forward.5} parent=0 // pred_check
    _
  $region11: #{infersent_forward.5} parent=0 // pred_check_branch
    %20 = sbr.rel (0) target = $region13
  $region12: #{infersent_forward.5} parent=0 // pred_region
    _
  $region13: #{infersent_forward.5} parent=0 // pred_fallthru
    _
  // Predicated region
  $region14: #{infersent_forward.5} parent=0 // pred_check
    _
  $region15: #{infersent_forward.5} parent=0 // pred_check_branch
    %22 = sbr.rel (0) target = $region17
  $region16: #{infersent_forward.5} parent=0 // pred_region
    _
  $region17: #{infersent_forward.5} parent=0 // pred_fallthru
    _
  // Predicated region
  $region18: #{infersent_forward.5} parent=0 // pred_check
    _
  $region19: #{infersent_forward.5} parent=0 // pred_check_branch
    %24 = sbr.rel (0) target = $region21
  $region20: #{infersent_forward.5} parent=0 // pred_region
    _
  $region21: #{infersent_forward.5} parent=0 // pred_fallthru
    _
  // Predicated region
  $region22: #{infersent_forward.5} parent=0 // pred_check
    _
  $region23: #{infersent_forward.5} parent=0 // pred_check_branch
    %26 = sbr.rel (0) target = $region25
  $region24: #{infersent_forward.5} parent=0 // pred_region
    _
  $region25: #{infersent_forward.5} parent=0 // pred_fallthru
    _
  // Predicated region
  $region26: #{infersent_forward.5} parent=0 // pred_check
    _
  $region27: #{infersent_forward.5} parent=0 // pred_check_branch
    %28 = sbr.rel (0) target = $region29
  $region28: #{infersent_forward.5} parent=0 // pred_region
    _
  $region29: #{infersent_forward.5} parent=0 // pred_fallthru
    _
  // Predicated region
  $region30: #{infersent_forward.5} parent=0 // pred_check
    _
  $region31: #{infersent_forward.5} parent=0 // pred_check_branch
    %30 = sbr.rel (0) target = $region33
  $region32: #{infersent_forward.5} parent=0 // pred_region
    _
  $region33: #{infersent_forward.5} parent=0 // pred_fallthru
    _
  // Predicated region
  $region34: #{infersent_forward.5} parent=0 // pred_check
    _
  $region35: #{infersent_forward.5} parent=0 // pred_check_branch
    %32 = sbr.rel (0) target = $region37
  $region36: #{infersent_forward.5} parent=0 // pred_region
    _
  $region37: #{infersent_forward.5} parent=0 // pred_fallthru
    _
  // Predicated region
  $region38: #{infersent_forward.5} parent=0 // pred_check
    _
  $region39: #{infersent_forward.5} parent=0 // pred_check_branch
    %34 = sbr.rel (0) target = $region41
  $region40: #{infersent_forward.5} parent=0 // pred_region
    _
  $region41: #{infersent_forward.5} parent=0 // pred_fallthru
    _
  %v36 = vld [vmem:[%s0] sm:$0xff]
  %v37 = vld [vmem:[%s0 + $0x8] sm:$0xff]
  %v38 = vld [vmem:[%s0 + $0x10] sm:$0xff]
  %v39 = vld [vmem:[%s0 + $0x18] sm:$0xff]
  %v40 = vpack.c.bf16 %v36, %v36
  %v41 = vpack.c.bf16 %v37, %v37
  %v42 = vld [vmem:[%s1] sm:$0xf]
  %v43 = vld [vmem:[%s1 + $0x4] sm:$0xf]
  %v44 = vld [vmem:[%s1 + $0x8] sm:$0xf]
  %v45 = vld [vmem:[%s1 + $0xc] sm:$0xf]
  %v46 = vld [vmem:[%s1 + $0x10] sm:$0xf]
  %v47 = vld [vmem:[%s1 + $0x14] sm:$0xf]
  %v48 = vld [vmem:[%s1 + $0x18] sm:$0xf]
  %v49 = vld [vmem:[%s1 + $0x1c] sm:$0xf]
  %v50 = vld [vmem:[%s1 + $0x20] sm:$0xf]
  %v51 = vld [vmem:[%s1 + $0x24] sm:$0xf]
  %v52 = vld [vmem:[%s1 + $0x28] sm:$0xf]
  %v53 = vld [vmem:[%s1 + $0x2c] sm:$0xf]
  %v54 = vld [vmem:[%s1 + $0x30] sm:$0xf]
  %v55 = vld [vmem:[%s1 + $0x34] sm:$0xf]
  %v56 = vld [vmem:[%s1 + $0x38] sm:$0xf]
  %v57 = vld [vmem:[%s1 + $0x3c] sm:$0xf]
  %v58 = vld [vmem:[%s1 + $0x40] sm:$0xf]
  %v59 = vld [vmem:[%s1 + $0x44] sm:$0xf]
  %v60 = vld [vmem:[%s1 + $0x48] sm:$0xf]
  %v61 = vld [vmem:[%s1 + $0x4c] sm:$0xf]
  %v62 = vld [vmem:[%s1 + $0x50] sm:$0xf]
  %v63 = vld [vmem:[%s1 + $0x54] sm:$0xf]
  %v64 = vld [vmem:[%s1 + $0x58] sm:$0xf]
  %v65 = vld [vmem:[%s1 + $0x5c] sm:$0xf]
  %v66 = vld [vmem:[%s1 + $0x60] sm:$0xf]
  %v67 = vld [vmem:[%s1 + $0x64] sm:$0xf]
  %v68 = vld [vmem:[%s1 + $0x68] sm:$0xf]
  %v69 = vld [vmem:[%s1 + $0x6c] sm:$0xf]
  %v70 = vld [vmem:[%s1 + $0x70] sm:$0xf]
  %v71 = vld [vmem:[%s1 + $0x74] sm:$0xf]
  %v72 = vld [vmem:[%s1 + $0x78] sm:$0xf]
  %v73 = vld [vmem:[%s1 + $0x7c] sm:$0xf]
  %v74 = vpack.c.bf16 %v38, %v38
  %v75 = vpack.c.bf16 %v39, %v39
  %v76 = vld [vmem:[%s2] sm:$0xf]
  %v77 = vld [vmem:[%s2 + $0x4] sm:$0xf]
  %v78 = vld [vmem:[%s2 + $0x8] sm:$0xf]
  %v79 = vld [vmem:[%s2 + $0xc] sm:$0xf]
  %v80 = vld [vmem:[%s2 + $0x10] sm:$0xf]
  %v81 = vld [vmem:[%s2 + $0x14] sm:$0xf]
  %v82 = vld [vmem:[%s2 + $0x18] sm:$0xf]
  %v83 = vld [vmem:[%s2 + $0x1c] sm:$0xf]
  %v84 = vld [vmem:[%s2 + $0x20] sm:$0xf]
  %v85 = vld [vmem:[%s2 + $0x24] sm:$0xf]
  %v86 = vld [vmem:[%s2 + $0x28] sm:$0xf]
  %v87 = vld [vmem:[%s2 + $0x2c] sm:$0xf]
  %v88 = vld [vmem:[%s2 + $0x30] sm:$0xf]
  %v89 = vld [vmem:[%s2 + $0x34] sm:$0xf]
  %v90 = vld [vmem:[%s2 + $0x38] sm:$0xf]
  %v91 = vld [vmem:[%s2 + $0x3c] sm:$0xf]
  %v92 = vld [vmem:[%s2 + $0x40] sm:$0xf]
  %v93 = vld [vmem:[%s2 + $0x44] sm:$0xf]
  %v94 = vld [vmem:[%s2 + $0x48] sm:$0xf]
  %v95 = vld [vmem:[%s2 + $0x4c] sm:$0xf]
  %v96 = vld [vmem:[%s2 + $0x50] sm:$0xf]
  %v97 = vld [vmem:[%s2 + $0x54] sm:$0xf]
  %v98 = vld [vmem:[%s2 + $0x58] sm:$0xf]
  %v99 = vld [vmem:[%s2 + $0x5c] sm:$0xf]
  %v100 = vld [vmem:[%s2 + $0x60] sm:$0xf]
  %v101 = vld [vmem:[%s2 + $0x64] sm:$0xf]
  %v102 = vld [vmem:[%s2 + $0x68] sm:$0xf]
  %v103 = vld [vmem:[%s2 + $0x6c] sm:$0xf]
  %v104 = vld [vmem:[%s2 + $0x70] sm:$0xf]
  %v105 = vld [vmem:[%s2 + $0x74] sm:$0xf]
  %v106 = vld [vmem:[%s2 + $0x78] sm:$0xf]
  %v107 = vld [vmem:[%s2 + $0x7c] sm:$0xf]
  %v140 = vunpack.c.l.b16 %v76
  %v141 = vunpack.c.l.b16 %v77
  %v142 = vunpack.c.l.b16 %v78
  %v143 = vunpack.c.l.b16 %v79
  %v144 = vunpack.c.l.b16 %v80
  %v145 = vunpack.c.l.b16 %v81
  %v146 = vunpack.c.l.b16 %v82
  %v147 = vunpack.c.l.b16 %v83
  %v148 = vunpack.c.l.b16 %v84
  %v149 = vunpack.c.l.b16 %v85
  %v150 = vunpack.c.l.b16 %v86
  %v151 = vunpack.c.l.b16 %v87
  %v152 = vunpack.c.l.b16 %v88
  %v153 = vunpack.c.l.b16 %v89
  %v154 = vunpack.c.l.b16 %v90
  %v155 = vunpack.c.l.b16 %v91
  %v156 = vunpack.c.l.b16 %v92
  %v157 = vunpack.c.l.b16 %v93
  %v158 = vunpack.c.l.b16 %v94
  %v159 = vunpack.c.l.b16 %v95
  %v160 = vunpack.c.l.b16 %v96
  %v161 = vunpack.c.l.b16 %v97
  %v162 = vunpack.c.l.b16 %v98
  %v163 = vunpack.c.l.b16 %v99
  %v164 = vunpack.c.l.b16 %v100
  %v165 = vunpack.c.l.b16 %v101
  %v166 = vunpack.c.l.b16 %v102
  %v167 = vunpack.c.l.b16 %v103
  %v168 = vunpack.c.l.b16 %v104
  %v169 = vunpack.c.l.b16 %v105
  %v170 = vunpack.c.l.b16 %v106
  %v171 = vunpack.c.l.b16 %v107
  %v172 = vpack.c.b16 %v141, %v140
  %v173 = vpack.c.b16 %v143, %v142
  %v174 = vpack.c.b16 %v145, %v144
  %v175 = vpack.c.b16 %v147, %v146
  %v176 = vpack.c.b16 %v149, %v148
  %v177 = vpack.c.b16 %v151, %v150
  %v178 = vpack.c.b16 %v153, %v152
  %v179 = vpack.c.b16 %v155, %v154
  %v180 = vpack.c.b16 %v157, %v156
  %v181 = vpack.c.b16 %v159, %v158
  %v182 = vpack.c.b16 %v161, %v160
  %v183 = vpack.c.b16 %v163, %v162
  %v184 = vpack.c.b16 %v165, %v164
  %v185 = vpack.c.b16 %v167, %v166
  %v186 = vpack.c.b16 %v169, %v168
  %v187 = vpack.c.b16 %v171, %v170
  %204 = vmatprep.subr.bf16.mxu0 0
  %205 = vmatpush1.bf16.msra.mxu0 %v179
  %206 = vmatprep.subr.bf16.mxu0 0
  %207 = vmatpush1.bf16.msra.mxu0 %v178
  %208 = vmatprep.subr.bf16.mxu0 0
  %209 = vmatpush1.bf16.msra.mxu0 %v177
  %210 = vmatprep.subr.bf16.mxu0 0
  %211 = vmatpush1.bf16.msra.mxu0 %v176
  %212 = vmatprep.subr.bf16.mxu0 0
  %213 = vmatpush1.bf16.msra.mxu0 %v175
  %214 = vmatprep.subr.bf16.mxu0 0
  %215 = vmatpush1.bf16.msra.mxu0 %v174
  %216 = vmatprep.subr.bf16.mxu0 0
  %217 = vmatpush1.bf16.msra.mxu0 %v173
  %218 = vmatprep.subr.bf16.mxu0 0
  %219 = vmatpush1.bf16.msra.mxu0 %v172
  %220 = vmatprep.subr.bf16.mxu0 0
  %221 = vmatpush2.bf16.msra.mxu0 %v187
  %222 = vmatprep.subr.bf16.mxu0 0
  %223 = vmatpush2.bf16.msra.mxu0 %v186
  %224 = vmatprep.subr.bf16.mxu0 0
  %225 = vmatpush2.bf16.msra.mxu0 %v185
  %226 = vmatprep.subr.bf16.mxu0 0
  %227 = vmatpush2.bf16.msra.mxu0 %v184
  %228 = vmatprep.subr.bf16.mxu0 0
  %229 = vmatpush2.bf16.msra.mxu0 %v183
  %230 = vmatprep.subr.bf16.mxu0 0
  %231 = vmatpush2.bf16.msra.mxu0 %v182
  %232 = vmatprep.subr.bf16.mxu0 0
  %233 = vmatpush2.bf16.msra.mxu0 %v181
  %234 = vmatprep.subr.bf16.mxu0 0
  %235 = vmatpush2.bf16.msra.mxu0 %v180
  %236 = vmatprep.mubr.bf16.mxu0 %v75
  %237 = vmatmul.mubr.bf16.gmra.mxu0 %v74
  %v238 = vpop.f32.mrf.mxu0
  %v239 = vadd.f32 0.0, %v238
  %v240 = vpop.f32.mrf.mxu0
  %v241 = vpop.f32.mrf.mxu0
  %v242 = vpop.f32.mrf.mxu0
  %243 = vdwg.mxu0
  %v276 = vunpack.c.l.b16 %v42
  %v277 = vunpack.c.l.b16 %v43
  %v278 = vunpack.c.l.b16 %v44
  %v279 = vunpack.c.l.b16 %v45
  %v280 = vunpack.c.l.b16 %v46
  %v281 = vunpack.c.l.b16 %v47
  %v282 = vunpack.c.l.b16 %v48
  %v283 = vunpack.c.l.b16 %v49
  %v284 = vunpack.c.l.b16 %v50
  %v285 = vunpack.c.l.b16 %v51
  %v286 = vunpack.c.l.b16 %v52
  %v287 = vunpack.c.l.b16 %v53
  %v288 = vunpack.c.l.b16 %v54
  %v289 = vunpack.c.l.b16 %v55
  %v290 = vunpack.c.l.b16 %v56
  %v291 = vunpack.c.l.b16 %v57
  %v292 = vunpack.c.l.b16 %v58
  %v293 = vunpack.c.l.b16 %v59
  %v294 = vunpack.c.l.b16 %v60
  %v295 = vunpack.c.l.b16 %v61
  %v296 = vunpack.c.l.b16 %v62
  %v297 = vunpack.c.l.b16 %v63
  %v298 = vunpack.c.l.b16 %v64
  %v299 = vunpack.c.l.b16 %v65
  %v300 = vunpack.c.l.b16 %v66
  %v301 = vunpack.c.l.b16 %v67
  %v302 = vunpack.c.l.b16 %v68
  %v303 = vunpack.c.l.b16 %v69
  %v304 = vunpack.c.l.b16 %v70
  %v305 = vunpack.c.l.b16 %v71
  %v306 = vunpack.c.l.b16 %v72
  %v307 = vunpack.c.l.b16 %v73
  %v308 = vpack.c.b16 %v277, %v276
  %v309 = vpack.c.b16 %v279, %v278
  %v310 = vpack.c.b16 %v281, %v280
  %v311 = vpack.c.b16 %v283, %v282
  %v312 = vpack.c.b16 %v285, %v284
  %v313 = vpack.c.b16 %v287, %v286
  %v314 = vpack.c.b16 %v289, %v288
  %v315 = vpack.c.b16 %v291, %v290
  %v316 = vpack.c.b16 %v293, %v292
  %v317 = vpack.c.b16 %v295, %v294
  %v318 = vpack.c.b16 %v297, %v296
  %v319 = vpack.c.b16 %v299, %v298
  %v320 = vpack.c.b16 %v301, %v300
  %v321 = vpack.c.b16 %v303, %v302
  %v322 = vpack.c.b16 %v305, %v304
  %v323 = vpack.c.b16 %v307, %v306
  %340 = vmatprep.subr.bf16.mxu0 0
  %341 = vmatpush1.bf16.msra.mxu0 %v315
  %342 = vmatprep.subr.bf16.mxu0 0
  %343 = vmatpush1.bf16.msra.mxu0 %v314
  %344 = vmatprep.subr.bf16.mxu0 0
  %345 = vmatpush1.bf16.msra.mxu0 %v313
  %346 = vmatprep.subr.bf16.mxu0 0
  %347 = vmatpush1.bf16.msra.mxu0 %v312
  %348 = vmatprep.subr.bf16.mxu0 0
  %349 = vmatpush1.bf16.msra.mxu0 %v311
  %350 = vmatprep.subr.bf16.mxu0 0
  %351 = vmatpush1.bf16.msra.mxu0 %v310
  %352 = vmatprep.subr.bf16.mxu0 0
  %353 = vmatpush1.bf16.msra.mxu0 %v309
  %354 = vmatprep.subr.bf16.mxu0 0
  %355 = vmatpush1.bf16.msra.mxu0 %v308
  %356 = vmatprep.subr.bf16.mxu0 0
  %357 = vmatpush2.bf16.msra.mxu0 %v323
  %358 = vmatprep.subr.bf16.mxu0 0
  %359 = vmatpush2.bf16.msra.mxu0 %v322
  %360 = vmatprep.subr.bf16.mxu0 0
  %361 = vmatpush2.bf16.msra.mxu0 %v321
  %362 = vmatprep.subr.bf16.mxu0 0
  %363 = vmatpush2.bf16.msra.mxu0 %v320
  %364 = vmatprep.subr.bf16.mxu0 0
  %365 = vmatpush2.bf16.msra.mxu0 %v319
  %366 = vmatprep.subr.bf16.mxu0 0
  %367 = vmatpush2.bf16.msra.mxu0 %v318
  %368 = vmatprep.subr.bf16.mxu0 0
  %369 = vmatpush2.bf16.msra.mxu0 %v317
  %370 = vmatprep.subr.bf16.mxu0 0
  %371 = vmatpush2.bf16.msra.mxu0 %v316
  %372 = vmatprep.mubr.bf16.mxu0 %v41
  %373 = vmatmul.mubr.bf16.gmra.mxu0 %v40
  %v374 = vpop.f32.mrf.mxu0
  %v375 = vadd.f32 %v239, %v374
  %v376 = vpop.f32.mrf.mxu0
  %v377 = vpop.f32.mrf.mxu0
  %v378 = vpop.f32.mrf.mxu0
  %379 = vdwg.mxu0
  %v380 = vsub.f32 %v36, %v38
  %v381 = vsub.f32 %v37, %v39
  %v382 = vand.u32 2147483647, %v380
  %v383 = vand.u32 2147483647, %v381
  %v384 = vpack.c.bf16 %v382, %v382
  %v385 = vpack.c.bf16 %v383, %v383
  %v386 = vld [vmem:[%s3] sm:$0xf]
  %v387 = vld [vmem:[%s3 + $0x4] sm:$0xf]
  %v388 = vld [vmem:[%s3 + $0x8] sm:$0xf]
  %v389 = vld [vmem:[%s3 + $0xc] sm:$0xf]
  %v390 = vld [vmem:[%s3 + $0x10] sm:$0xf]
  %v391 = vld [vmem:[%s3 + $0x14] sm:$0xf]
  %v392 = vld [vmem:[%s3 + $0x18] sm:$0xf]
  %v393 = vld [vmem:[%s3 + $0x1c] sm:$0xf]
  %v394 = vld [vmem:[%s3 + $0x20] sm:$0xf]
  %v395 = vld [vmem:[%s3 + $0x24] sm:$0xf]
  %v396 = vld [vmem:[%s3 + $0x28] sm:$0xf]
  %v397 = vld [vmem:[%s3 + $0x2c] sm:$0xf]
  %v398 = vld [vmem:[%s3 + $0x30] sm:$0xf]
  %v399 = vld [vmem:[%s3 + $0x34] sm:$0xf]
  %v400 = vld [vmem:[%s3 + $0x38] sm:$0xf]
  %v401 = vld [vmem:[%s3 + $0x3c] sm:$0xf]
  %v402 = vld [vmem:[%s3 + $0x40] sm:$0xf]
  %v403 = vld [vmem:[%s3 + $0x44] sm:$0xf]
  %v404 = vld [vmem:[%s3 + $0x48] sm:$0xf]
  %v405 = vld [vmem:[%s3 + $0x4c] sm:$0xf]
  %v406 = vld [vmem:[%s3 + $0x50] sm:$0xf]
  %v407 = vld [vmem:[%s3 + $0x54] sm:$0xf]
  %v408 = vld [vmem:[%s3 + $0x58] sm:$0xf]
  %v409 = vld [vmem:[%s3 + $0x5c] sm:$0xf]
  %v410 = vld [vmem:[%s3 + $0x60] sm:$0xf]
  %v411 = vld [vmem:[%s3 + $0x64] sm:$0xf]
  %v412 = vld [vmem:[%s3 + $0x68] sm:$0xf]
  %v413 = vld [vmem:[%s3 + $0x6c] sm:$0xf]
  %v414 = vld [vmem:[%s3 + $0x70] sm:$0xf]
  %v415 = vld [vmem:[%s3 + $0x74] sm:$0xf]
  %v416 = vld [vmem:[%s3 + $0x78] sm:$0xf]
  %v417 = vld [vmem:[%s3 + $0x7c] sm:$0xf]
  %v450 = vunpack.c.l.b16 %v386
  %v451 = vunpack.c.l.b16 %v387
  %v452 = vunpack.c.l.b16 %v388
  %v453 = vunpack.c.l.b16 %v389
  %v454 = vunpack.c.l.b16 %v390
  %v455 = vunpack.c.l.b16 %v391
  %v456 = vunpack.c.l.b16 %v392
  %v457 = vunpack.c.l.b16 %v393
  %v458 = vunpack.c.l.b16 %v394
  %v459 = vunpack.c.l.b16 %v395
  %v460 = vunpack.c.l.b16 %v396
  %v461 = vunpack.c.l.b16 %v397
  %v462 = vunpack.c.l.b16 %v398
  %v463 = vunpack.c.l.b16 %v399
  %v464 = vunpack.c.l.b16 %v400
  %v465 = vunpack.c.l.b16 %v401
  %v466 = vunpack.c.l.b16 %v402
  %v467 = vunpack.c.l.b16 %v403
  %v468 = vunpack.c.l.b16 %v404
  %v469 = vunpack.c.l.b16 %v405
  %v470 = vunpack.c.l.b16 %v406
  %v471 = vunpack.c.l.b16 %v407
  %v472 = vunpack.c.l.b16 %v408
  %v473 = vunpack.c.l.b16 %v409
  %v474 = vunpack.c.l.b16 %v410
  %v475 = vunpack.c.l.b16 %v411
  %v476 = vunpack.c.l.b16 %v412
  %v477 = vunpack.c.l.b16 %v413
  %v478 = vunpack.c.l.b16 %v414
  %v479 = vunpack.c.l.b16 %v415
  %v480 = vunpack.c.l.b16 %v416
  %v481 = vunpack.c.l.b16 %v417
  %v482 = vpack.c.b16 %v451, %v450
  %v483 = vpack.c.b16 %v453, %v452
  %v484 = vpack.c.b16 %v455, %v454
  %v485 = vpack.c.b16 %v457, %v456
  %v486 = vpack.c.b16 %v459, %v458
  %v487 = vpack.c.b16 %v461, %v460
  %v488 = vpack.c.b16 %v463, %v462
  %v489 = vpack.c.b16 %v465, %v464
  %v490 = vpack.c.b16 %v467, %v466
  %v491 = vpack.c.b16 %v469, %v468
  %v492 = vpack.c.b16 %v471, %v470
  %v493 = vpack.c.b16 %v473, %v472
  %v494 = vpack.c.b16 %v475, %v474
  %v495 = vpack.c.b16 %v477, %v476
  %v496 = vpack.c.b16 %v479, %v478
  %v497 = vpack.c.b16 %v481, %v480
  %514 = vmatprep.subr.bf16.mxu0 0
  %515 = vmatpush1.bf16.msra.mxu0 %v489
  %516 = vmatprep.subr.bf16.mxu0 0
  %517 = vmatpush1.bf16.msra.mxu0 %v488
  %518 = vmatprep.subr.bf16.mxu0 0
  %519 = vmatpush1.bf16.msra.mxu0 %v487
  %520 = vmatprep.subr.bf16.mxu0 0
  %521 = vmatpush1.bf16.msra.mxu0 %v486
  %522 = vmatprep.subr.bf16.mxu0 0
  %523 = vmatpush1.bf16.msra.mxu0 %v485
  %524 = vmatprep.subr.bf16.mxu0 0
  %525 = vmatpush1.bf16.msra.mxu0 %v484
  %526 = vmatprep.subr.bf16.mxu0 0
  %527 = vmatpush1.bf16.msra.mxu0 %v483
  %528 = vmatprep.subr.bf16.mxu0 0
  %529 = vmatpush1.bf16.msra.mxu0 %v482
  %530 = vmatprep.subr.bf16.mxu0 0
  %531 = vmatpush2.bf16.msra.mxu0 %v497
  %532 = vmatprep.subr.bf16.mxu0 0
  %533 = vmatpush2.bf16.msra.mxu0 %v496
  %534 = vmatprep.subr.bf16.mxu0 0
  %535 = vmatpush2.bf16.msra.mxu0 %v495
  %536 = vmatprep.subr.bf16.mxu0 0
  %537 = vmatpush2.bf16.msra.mxu0 %v494
  %538 = vmatprep.subr.bf16.mxu0 0
  %539 = vmatpush2.bf16.msra.mxu0 %v493
  %540 = vmatprep.subr.bf16.mxu0 0
  %541 = vmatpush2.bf16.msra.mxu0 %v492
  %542 = vmatprep.subr.bf16.mxu0 0
  %543 = vmatpush2.bf16.msra.mxu0 %v491
  %544 = vmatprep.subr.bf16.mxu0 0
  %545 = vmatpush2.bf16.msra.mxu0 %v490
  %546 = vmatprep.mubr.bf16.mxu0 %v385
  %547 = vmatmul.mubr.bf16.gmra.mxu0 %v384
  %v548 = vpop.f32.mrf.mxu0
  %v549 = vadd.f32 0.0, %v548
  %v550 = vpop.f32.mrf.mxu0
  %v551 = vpop.f32.mrf.mxu0
  %v552 = vpop.f32.mrf.mxu0
  %553 = vdwg.mxu0
  %v554 = vadd.f32 %v375, %v549
  %v555 = vmul.f32 %v36, %v38
  %v556 = vmul.f32 %v37, %v39
  %v557 = vpack.c.bf16 %v555, %v555
  %v558 = vpack.c.bf16 %v556, %v556
  %v559 = vld [vmem:[%s4] sm:$0xf]
  %v560 = vld [vmem:[%s4 + $0x4] sm:$0xf]
  %v561 = vld [vmem:[%s4 + $0x8] sm:$0xf]
  %v562 = vld [vmem:[%s4 + $0xc] sm:$0xf]
  %v563 = vld [vmem:[%s4 + $0x10] sm:$0xf]
  %v564 = vld [vmem:[%s4 + $0x14] sm:$0xf]
  %v565 = vld [vmem:[%s4 + $0x18] sm:$0xf]
  %v566 = vld [vmem:[%s4 + $0x1c] sm:$0xf]
  %v567 = vld [vmem:[%s4 + $0x20] sm:$0xf]
  %v568 = vld [vmem:[%s4 + $0x24] sm:$0xf]
  %v569 = vld [vmem:[%s4 + $0x28] sm:$0xf]
  %v570 = vld [vmem:[%s4 + $0x2c] sm:$0xf]
  %v571 = vld [vmem:[%s4 + $0x30] sm:$0xf]
  %v572 = vld [vmem:[%s4 + $0x34] sm:$0xf]
  %v573 = vld [vmem:[%s4 + $0x38] sm:$0xf]
  %v574 = vld [vmem:[%s4 + $0x3c] sm:$0xf]
  %v575 = vld [vmem:[%s4 + $0x40] sm:$0xf]
  %v576 = vld [vmem:[%s4 + $0x44] sm:$0xf]
  %v577 = vld [vmem:[%s4 + $0x48] sm:$0xf]
  %v578 = vld [vmem:[%s4 + $0x4c] sm:$0xf]
  %v579 = vld [vmem:[%s4 + $0x50] sm:$0xf]
  %v580 = vld [vmem:[%s4 + $0x54] sm:$0xf]
  %v581 = vld [vmem:[%s4 + $0x58] sm:$0xf]
  %v582 = vld [vmem:[%s4 + $0x5c] sm:$0xf]
  %v583 = vld [vmem:[%s4 + $0x60] sm:$0xf]
  %v584 = vld [vmem:[%s4 + $0x64] sm:$0xf]
  %v585 = vld [vmem:[%s4 + $0x68] sm:$0xf]
  %v586 = vld [vmem:[%s4 + $0x6c] sm:$0xf]
  %v587 = vld [vmem:[%s4 + $0x70] sm:$0xf]
  %v588 = vld [vmem:[%s4 + $0x74] sm:$0xf]
  %v589 = vld [vmem:[%s4 + $0x78] sm:$0xf]
  %v590 = vld [vmem:[%s4 + $0x7c] sm:$0xf]
  %v623 = vunpack.c.l.b16 %v559
  %v624 = vunpack.c.l.b16 %v560
  %v625 = vunpack.c.l.b16 %v561
  %v626 = vunpack.c.l.b16 %v562
  %v627 = vunpack.c.l.b16 %v563
  %v628 = vunpack.c.l.b16 %v564
  %v629 = vunpack.c.l.b16 %v565
  %v630 = vunpack.c.l.b16 %v566
  %v631 = vunpack.c.l.b16 %v567
  %v632 = vunpack.c.l.b16 %v568
  %v633 = vunpack.c.l.b16 %v569
  %v634 = vunpack.c.l.b16 %v570
  %v635 = vunpack.c.l.b16 %v571
  %v636 = vunpack.c.l.b16 %v572
  %v637 = vunpack.c.l.b16 %v573
  %v638 = vunpack.c.l.b16 %v574
  %v639 = vunpack.c.l.b16 %v575
  %v640 = vunpack.c.l.b16 %v576
  %v641 = vunpack.c.l.b16 %v577
  %v642 = vunpack.c.l.b16 %v578
  %v643 = vunpack.c.l.b16 %v579
  %v644 = vunpack.c.l.b16 %v580
  %v645 = vunpack.c.l.b16 %v581
  %v646 = vunpack.c.l.b16 %v582
  %v647 = vunpack.c.l.b16 %v583
  %v648 = vunpack.c.l.b16 %v584
  %v649 = vunpack.c.l.b16 %v585
  %v650 = vunpack.c.l.b16 %v586
  %v651 = vunpack.c.l.b16 %v587
  %v652 = vunpack.c.l.b16 %v588
  %v653 = vunpack.c.l.b16 %v589
  %v654 = vunpack.c.l.b16 %v590
  %v655 = vpack.c.b16 %v624, %v623
  %v656 = vpack.c.b16 %v626, %v625
  %v657 = vpack.c.b16 %v628, %v627
  %v658 = vpack.c.b16 %v630, %v629
  %v659 = vpack.c.b16 %v632, %v631
  %v660 = vpack.c.b16 %v634, %v633
  %v661 = vpack.c.b16 %v636, %v635
  %v662 = vpack.c.b16 %v638, %v637
  %v663 = vpack.c.b16 %v640, %v639
  %v664 = vpack.c.b16 %v642, %v641
  %v665 = vpack.c.b16 %v644, %v643
  %v666 = vpack.c.b16 %v646, %v645
  %v667 = vpack.c.b16 %v648, %v647
  %v668 = vpack.c.b16 %v650, %v649
  %v669 = vpack.c.b16 %v652, %v651
  %v670 = vpack.c.b16 %v654, %v653
  %687 = vmatprep.subr.bf16.mxu0 0
  %688 = vmatpush1.bf16.msra.mxu0 %v662
  %689 = vmatprep.subr.bf16.mxu0 0
  %690 = vmatpush1.bf16.msra.mxu0 %v661
  %691 = vmatprep.subr.bf16.mxu0 0
  %692 = vmatpush1.bf16.msra.mxu0 %v660
  %693 = vmatprep.subr.bf16.mxu0 0
  %694 = vmatpush1.bf16.msra.mxu0 %v659
  %695 = vmatprep.subr.bf16.mxu0 0
  %696 = vmatpush1.bf16.msra.mxu0 %v658
  %697 = vmatprep.subr.bf16.mxu0 0
  %698 = vmatpush1.bf16.msra.mxu0 %v657
  %699 = vmatprep.subr.bf16.mxu0 0
  %700 = vmatpush1.bf16.msra.mxu0 %v656
  %701 = vmatprep.subr.bf16.mxu0 0
  %702 = vmatpush1.bf16.msra.mxu0 %v655
  %703 = vmatprep.subr.bf16.mxu0 0
  %704 = vmatpush2.bf16.msra.mxu0 %v670
  %705 = vmatprep.subr.bf16.mxu0 0
  %706 = vmatpush2.bf16.msra.mxu0 %v669
  %707 = vmatprep.subr.bf16.mxu0 0
  %708 = vmatpush2.bf16.msra.mxu0 %v668
  %709 = vmatprep.subr.bf16.mxu0 0
  %710 = vmatpush2.bf16.msra.mxu0 %v667
  %711 = vmatprep.subr.bf16.mxu0 0
  %712 = vmatpush2.bf16.msra.mxu0 %v666
  %713 = vmatprep.subr.bf16.mxu0 0
  %714 = vmatpush2.bf16.msra.mxu0 %v665
  %715 = vmatprep.subr.bf16.mxu0 0
  %716 = vmatpush2.bf16.msra.mxu0 %v664
  %717 = vmatprep.subr.bf16.mxu0 0
  %718 = vmatpush2.bf16.msra.mxu0 %v663
  %719 = vmatprep.mubr.bf16.mxu0 %v558
  %720 = vmatmul.mubr.bf16.gmra.mxu0 %v557
  %v721 = vpop.f32.mrf.mxu0
  %v722 = vadd.f32 0.0, %v721
  %v723 = vpop.f32.mrf.mxu0
  %v724 = vpop.f32.mrf.mxu0
  %v725 = vpop.f32.mrf.mxu0
  %726 = vdwg.mxu0
  %v727 = vadd.f32 %v554, %v722
  %v728 = vld [vmem:[%s5] sm:$0x1]
  %v730 = vlaneseq
  %v731 = vshrl.u32 %v730, 7
  %v732 = vsub.s32 0, %v731
  %v733 = vrot.slane %v728, %v732
  %v735 = vadd.f32 %v727, %v733
  %v736 = vtanh.pop %v735
  %v737 = vpack.c.bf16 %v736, %v736
  %v738 = vld [vmem:[%s6] sm:$0xf]
  %v739 = vld [vmem:[%s6 + $0x4] sm:$0xf]
  %v740 = vld [vmem:[%s6 + $0x8] sm:$0xf]
  %v741 = vld [vmem:[%s6 + $0xc] sm:$0xf]
  %v742 = vld [vmem:[%s6 + $0x10] sm:$0xf]
  %v743 = vld [vmem:[%s6 + $0x14] sm:$0xf]
  %v744 = vld [vmem:[%s6 + $0x18] sm:$0xf]
  %v745 = vld [vmem:[%s6 + $0x1c] sm:$0xf]
  %v746 = vld [vmem:[%s6 + $0x20] sm:$0xf]
  %v747 = vld [vmem:[%s6 + $0x24] sm:$0xf]
  %v748 = vld [vmem:[%s6 + $0x28] sm:$0xf]
  %v749 = vld [vmem:[%s6 + $0x2c] sm:$0xf]
  %v750 = vld [vmem:[%s6 + $0x30] sm:$0xf]
  %v751 = vld [vmem:[%s6 + $0x34] sm:$0xf]
  %v752 = vld [vmem:[%s6 + $0x38] sm:$0xf]
  %v753 = vld [vmem:[%s6 + $0x3c] sm:$0xf]
  %v754 = vld [vmem:[%s7] sm:$0x1]
  %v756 = vlaneseq
  %v757 = vshrl.u32 %v756, 7
  %v758 = vsub.s32 0, %v757
  %v759 = vrot.slane %v754, %v758
  %v777 = vunpack.c.l.b16 %v738
  %v778 = vunpack.c.l.b16 %v739
  %v779 = vunpack.c.l.b16 %v740
  %v780 = vunpack.c.l.b16 %v741
  %v781 = vunpack.c.l.b16 %v742
  %v782 = vunpack.c.l.b16 %v743
  %v783 = vunpack.c.l.b16 %v744
  %v784 = vunpack.c.l.b16 %v745
  %v785 = vunpack.c.l.b16 %v746
  %v786 = vunpack.c.l.b16 %v747
  %v787 = vunpack.c.l.b16 %v748
  %v788 = vunpack.c.l.b16 %v749
  %v789 = vunpack.c.l.b16 %v750
  %v790 = vunpack.c.l.b16 %v751
  %v791 = vunpack.c.l.b16 %v752
  %v792 = vunpack.c.l.b16 %v753
  %v793 = vpack.c.b16 %v778, %v777
  %v794 = vpack.c.b16 %v780, %v779
  %v795 = vpack.c.b16 %v782, %v781
  %v796 = vpack.c.b16 %v784, %v783
  %v797 = vpack.c.b16 %v786, %v785
  %v798 = vpack.c.b16 %v788, %v787
  %v799 = vpack.c.b16 %v790, %v789
  %v800 = vpack.c.b16 %v792, %v791
  %809 = vmatprep.subr.bf16.mxu0 0
  %810 = vmatpush1.bf16.msra.mxu0 %v800
  %811 = vmatprep.subr.bf16.mxu0 0
  %812 = vmatpush1.bf16.msra.mxu0 %v799
  %813 = vmatprep.subr.bf16.mxu0 0
  %814 = vmatpush1.bf16.msra.mxu0 %v798
  %815 = vmatprep.subr.bf16.mxu0 0
  %816 = vmatpush1.bf16.msra.mxu0 %v797
  %817 = vmatprep.subr.bf16.mxu0 0
  %818 = vmatpush1.bf16.msra.mxu0 %v796
  %819 = vmatprep.subr.bf16.mxu0 0
  %820 = vmatpush1.bf16.msra.mxu0 %v795
  %821 = vmatprep.subr.bf16.mxu0 0
  %822 = vmatpush1.bf16.msra.mxu0 %v794
  %823 = vmatprep.subr.bf16.mxu0 0
  %824 = vmatpush1.bf16.msra.mxu0 %v793
  %825 = vmatprep.subr.bf16.mxu0 0
  %826 = vmatpush2.bf16.msra.mxu0 0
  %827 = vmatprep.subr.bf16.mxu0 0
  %828 = vmatpush2.bf16.msra.mxu0 0
  %829 = vmatprep.subr.bf16.mxu0 0
  %830 = vmatpush2.bf16.msra.mxu0 0
  %831 = vmatprep.subr.bf16.mxu0 0
  %832 = vmatpush2.bf16.msra.mxu0 0
  %833 = vmatprep.subr.bf16.mxu0 0
  %834 = vmatpush2.bf16.msra.mxu0 0
  %835 = vmatprep.subr.bf16.mxu0 0
  %836 = vmatpush2.bf16.msra.mxu0 0
  %837 = vmatprep.subr.bf16.mxu0 0
  %838 = vmatpush2.bf16.msra.mxu0 0
  %839 = vmatprep.subr.bf16.mxu0 0
  %840 = vmatpush2.bf16.msra.mxu0 0
  %841 = vmatprep.mubr.bf16.mxu0 0
  %842 = vmatmul.mubr.bf16.gmra.mxu0 %v737
  %v843 = vpop.f32.mrf.mxu0
  %v844 = vadd.f32 %v759, %v843
  %v845 = vpop.f32.mrf.mxu0
  %v846 = vpop.f32.mrf.mxu0
  %v847 = vpop.f32.mrf.mxu0
  %848 = vdwg.mxu0
  %v849 = vtanh.pop %v844
  %v850 = vpack.c.bf16 %v849, %v849
  %v851 = vld [vmem:[%s8] sm:$0xf]
  %v852 = vld [vmem:[%s8 + $0x4] sm:$0xf]
  %v853 = vld [vmem:[%s8 + $0x8] sm:$0xf]
  %v854 = vld [vmem:[%s8 + $0xc] sm:$0xf]
  %v855 = vld [vmem:[%s8 + $0x10] sm:$0xf]
  %v856 = vld [vmem:[%s8 + $0x14] sm:$0xf]
  %v857 = vld [vmem:[%s8 + $0x18] sm:$0xf]
  %v858 = vld [vmem:[%s8 + $0x1c] sm:$0xf]
  %v859 = vld [vmem:[%s8 + $0x20] sm:$0xf]
  %v860 = vld [vmem:[%s8 + $0x24] sm:$0xf]
  %v861 = vld [vmem:[%s8 + $0x28] sm:$0xf]
  %v862 = vld [vmem:[%s8 + $0x2c] sm:$0xf]
  %v863 = vld [vmem:[%s8 + $0x30] sm:$0xf]
  %v864 = vld [vmem:[%s8 + $0x34] sm:$0xf]
  %v865 = vld [vmem:[%s8 + $0x38] sm:$0xf]
  %v866 = vld [vmem:[%s8 + $0x3c] sm:$0xf]
  %v867 = vld [vmem:[%s9] sm:$0x1]
  %v869 = vlaneseq
  %v870 = vshrl.u32 %v869, 7
  %v871 = vsub.s32 0, %v870
  %v872 = vrot.slane %v867, %v871
  %v890 = vunpack.c.l.b16 %v851
  %v891 = vunpack.c.l.b16 %v852
  %v892 = vunpack.c.l.b16 %v853
  %v893 = vunpack.c.l.b16 %v854
  %v894 = vunpack.c.l.b16 %v855
  %v895 = vunpack.c.l.b16 %v856
  %v896 = vunpack.c.l.b16 %v857
  %v897 = vunpack.c.l.b16 %v858
  %v898 = vunpack.c.l.b16 %v859
  %v899 = vunpack.c.l.b16 %v860
  %v900 = vunpack.c.l.b16 %v861
  %v901 = vunpack.c.l.b16 %v862
  %v902 = vunpack.c.l.b16 %v863
  %v903 = vunpack.c.l.b16 %v864
  %v904 = vunpack.c.l.b16 %v865
  %v905 = vunpack.c.l.b16 %v866
  %v906 = vpack.c.b16 %v891, %v890
  %v907 = vpack.c.b16 %v893, %v892
  %v908 = vpack.c.b16 %v895, %v894
  %v909 = vpack.c.b16 %v897, %v896
  %v910 = vpack.c.b16 %v899, %v898
  %v911 = vpack.c.b16 %v901, %v900
  %v912 = vpack.c.b16 %v903, %v902
  %v913 = vpack.c.b16 %v905, %v904
  %922 = vmatprep.subr.bf16.mxu0 0
  %923 = vmatpush1.bf16.msra.mxu0 %v913
  %924 = vmatprep.subr.bf16.mxu0 0
  %925 = vmatpush1.bf16.msra.mxu0 %v912
  %926 = vmatprep.subr.bf16.mxu0 0
  %927 = vmatpush1.bf16.msra.mxu0 %v911
  %928 = vmatprep.subr.bf16.mxu0 0
  %929 = vmatpush1.bf16.msra.mxu0 %v910
  %930 = vmatprep.subr.bf16.mxu0 0
  %931 = vmatpush1.bf16.msra.mxu0 %v909
  %932 = vmatprep.subr.bf16.mxu0 0
  %933 = vmatpush1.bf16.msra.mxu0 %v908
  %934 = vmatprep.subr.bf16.mxu0 0
  %935 = vmatpush1.bf16.msra.mxu0 %v907
  %936 = vmatprep.subr.bf16.mxu0 0
  %937 = vmatpush1.bf16.msra.mxu0 %v906
  %938 = vmatprep.subr.bf16.mxu0 0
  %939 = vmatpush2.bf16.msra.mxu0 0
  %940 = vmatprep.subr.bf16.mxu0 0
  %941 = vmatpush2.bf16.msra.mxu0 0
  %942 = vmatprep.subr.bf16.mxu0 0
  %943 = vmatpush2.bf16.msra.mxu0 0
  %944 = vmatprep.subr.bf16.mxu0 0
  %945 = vmatpush2.bf16.msra.mxu0 0
  %946 = vmatprep.subr.bf16.mxu0 0
  %947 = vmatpush2.bf16.msra.mxu0 0
  %948 = vmatprep.subr.bf16.mxu0 0
  %949 = vmatpush2.bf16.msra.mxu0 0
  %950 = vmatprep.subr.bf16.mxu0 0
  %951 = vmatpush2.bf16.msra.mxu0 0
  %952 = vmatprep.subr.bf16.mxu0 0
  %953 = vmatpush2.bf16.msra.mxu0 0
  %954 = vmatprep.mubr.bf16.mxu0 0
  %955 = vmatmul.mubr.bf16.gmra.mxu0 %v850
  %v956 = vpop.f32.mrf.mxu0
  %v957 = vadd.f32 %v872, %v956
  %v958 = vpop.f32.mrf.mxu0
  %v959 = vpop.f32.mrf.mxu0
  %v960 = vpop.f32.mrf.mxu0
  %961 = vdwg.mxu0
  %vm962 = vcmask 23552
  %963 = vst.msk [vmem:[%s10] sm:$0xff] %vm962, %v957
  // Predicated region
  $region42: #{infersent_forward.5} parent=0 // pred_check
    _
  $region43: #{infersent_forward.5} parent=0 // pred_check_branch
    %965 = sbr.rel (0) target = $region45
  $region44: #{infersent_forward.5} parent=0 // pred_region
    _
  $region45: #{infersent_forward.5} parent=0 // pred_fallthru
    _
  // Predicated region
  $region46: #{infersent_forward.5} parent=0 // pred_check
    _
  $region47: #{infersent_forward.5} parent=0 // pred_check_branch
    %967 = sbr.rel (0) target = $region49
  $region48: #{infersent_forward.5} parent=0 // pred_region
    _
  $region49: #{infersent_forward.5} parent=0 // pred_fallthru
    _

</llo_original>
